<compile_context>
chip_gen: v6e
topology: v6e:2x2x1
jax: 0.10.0
libtpu: 0.0.40
codegen_flags: <defaults>
</compile_context>

<pallas_src>
import jax
import jax.numpy as jnp
from jax.experimental import pallas as pl
from jax.experimental.pallas import tpu as pltpu


SQRT_HALF = 0.70710678118654752440
NUM_ANS = 5


# ---------------------------------------------------------------------------
# In-kernel helpers
# ---------------------------------------------------------------------------
def _erf(x):
    # Numerical-Recipes erfc rational approximation, built from exp / mul / add /
    # reciprocal so it lowers cleanly in Mosaic. Matches PyTorch's exact-erf
    # nn.GELU() well within the test tolerance (approx reciprocal -> ~1e-4 abs err).
    ax = jnp.abs(x)
    t = pl.reciprocal(1.0 + 0.5 * ax, approx=True)   # EUP slot, frees VALU
    poly = (-1.26551223 + t * (1.00002368 + t * (0.37409196 + t * (0.09678418 +
            t * (-0.18628806 + t * (0.27886807 + t * (-1.13520398 + t * (1.48851587 +
            t * (-0.82215223 + t * 0.17087277)))))))))
    tau = t * jnp.exp(-ax * ax + poly)
    return jnp.where(x >= 0.0, 1.0 - tau, tau - 1.0)


def _gelu(x):
    # PyTorch nn.GELU() default (exact, erf-based).
    return 0.5 * x * (1.0 + _erf(x * SQRT_HALF))


# ---------------------------------------------------------------------------
# Fused kernel: whole forward pass (question + all 5 candidates) in one call
# ---------------------------------------------------------------------------
def tvqa_kernel(q_ref, a1_ref, a2_ref, a3_ref, a4_ref, a5_ref,
                wq_ref, bq_ref, wa_ref, ba_ref,
                w1_ref, b1_ref, w2_ref, b2_ref, wc_ref, bc_ref,
                out_ref, x_ref):
    B, Lq, D = q_ref.shape
    _, La, _ = a1_ref.shape
    ATT = w2_ref.shape[1]
    nq = B * Lq        # question rows
    na = B * La        # rows per answer candidate

    # --- question projection -> rows [0, nq) of the shared bf16 trunk input --
    q = q_ref[...].reshape(nq, D).astype(jnp.bfloat16)
    qf = _gelu(jnp.dot(q, wq_ref[...], preferred_element_type=jnp.float32)
               + bq_ref[...])
    x_ref[0:nq, :] = qf.astype(jnp.bfloat16)

    # --- answer projections -> rows [nq + i*na, nq + (i+1)*na) ---------------
    wa = wa_ref[...]
    ba = ba_ref[...]
    for i, a_ref in enumerate((a1_ref, a2_ref, a3_ref, a4_ref, a5_ref)):
        a = a_ref[...].reshape(na, D).astype(jnp.bfloat16)
        af = _gelu(jnp.dot(a, wa, preferred_element_type=jnp.float32) + ba)
        x_ref[nq + i * na:nq + (i + 1) * na, :] = af.astype(jnp.bfloat16)

    # --- shared trunk: one wide pass over all question + answer tokens -------
    h = _gelu(jnp.dot(x_ref[...], w1_ref[...],
                      preferred_element_type=jnp.float32) + b1_ref[...])
    h = _gelu(jnp.dot(h.astype(jnp.bfloat16), w2_ref[...],
                      preferred_element_type=jnp.float32) + b2_ref[...])   # (M, ATT) f32

    # --- max over concatenated (question ++ answer_i) == max(max_q, max_a_i) -
    hq = jnp.max(h[0:nq].reshape(B, Lq, ATT), axis=1)                      # (B, ATT)
    wc_b = wc_ref[...]                                                     # (1, ATT)
    scores = []
    for i in range(NUM_ANS):
        hi = jnp.max(h[nq + i * na:nq + (i + 1) * na].reshape(B, La, ATT), axis=1)
        pooled = jnp.maximum(hq, hi)                                       # (B, ATT)
        # cls layer (out_features = 1): VPU multiply + lane reduction
        scores.append(jnp.sum(pooled * wc_b, axis=-1, keepdims=True))      # (B, 1)
    out_ref[...] = jnp.concatenate(scores, axis=1) + bc_ref[...]           # (B, 5)


# ---------------------------------------------------------------------------
# Wrapper
# ---------------------------------------------------------------------------
def _tvqa_qa_only(question, a1, a2, a3, a4, a5, params):
    """question: (B, Lq, D); a1..a5: (B, La, D). Returns logits (B, 5)."""
    B, Lq, D = question.shape
    La = a1.shape[1]
    H = params["wq"].shape[1]          # 256
    H2 = params["w1"].shape[1]         # 128 (= att_dim * 2)
    ATT = params["w2"].shape[1]        # 64
    nq, na = B * Lq, B * La
    M = nq + NUM_ANS * na              # total trunk rows (96 at the test shapes)

    wc_row = params["wc"].reshape(1, ATT)                           # (ATT,1) -> (1,ATT)

    # Advisory cost for XLA scheduling around this tiny custom call.
    flops = 2 * (nq * D * H + NUM_ANS * na * D * H
                 + M * H * H2 + M * H2 * ATT + B * NUM_ANS * ATT)
    transcendentals = 2 * (M * H + M * H2 + M * ATT)   # exp + reciprocal per GELU elem
    w_bytes = 2 * (2 * D * H + H * H2 + H2 * ATT)      # bf16 weights
    b_bytes = 4 * (2 * H + H2 + ATT + ATT + 1)
    bytes_accessed = 4 * (nq + NUM_ANS * na) * D + w_bytes + b_bytes + 4 * B * NUM_ANS

    vmem = pl.BlockSpec(memory_space=pltpu.MemorySpace.VMEM)

    # Single gridless invocation: every operand is a whole-array VMEM block
    # (total resident footprint ~1.5 MiB -> far under VMEM on v5e/v6e/v7x).
    return pl.pallas_call(
        tvqa_kernel,
        out_shape=jax.ShapeDtypeStruct((B, NUM_ANS), jnp.float32),
        in_specs=[vmem] * 16,
        out_specs=vmem,
        scratch_shapes=[pltpu.VMEM((M, H), jnp.bfloat16)],   # shared bf16 trunk input
        compiler_params=pltpu.CompilerParams(vmem_limit_bytes=8 * 1024 * 1024),
        cost_estimate=pl.CostEstimate(flops=int(flops),
                                      transcendentals=int(transcendentals),
                                      bytes_accessed=int(bytes_accessed)),
    )(question, a1, a2, a3, a4, a5,
      params["wq"], params["bq"], params["wa"], params["ba"],
      params["w1"], params["b1"], params["w2"], params["b2"],
      wc_row, params["bc"])


tvqa_qa_only = jax.jit(_tvqa_qa_only)


# ---------------------------------------------------------------------------
# Pure-JAX reference (mirrors the PyTorch forward literally, f32, with concat)
# ---------------------------------------------------------------------------
def reference(question, answers_list, params):
    gelu = lambda x: 0.5 * x * (1.0 + jax.scipy.special.erf(x / jnp.sqrt(2.0)))
    f32 = lambda w: w.astype(jnp.float32)
    qf = gelu(question @ f32(params["wq"]) + params["bq"])
    scores = []
    for a in answers_list:
        af = gelu(a @ f32(params["wa"]) + params["ba"])
        qa = jnp.concatenate([qf, af], axis=1)
        h = gelu(qa @ f32(params["w1"]) + params["b1"])
        h = gelu(h @ f32(params["w2"]) + params["b2"])
        h = jnp.max(h, axis=1)
        scores.append(h @ params["wc"] + params["bc"])
    return jnp.concatenate(scores, axis=1)


# ---------------------------------------------------------------------------
# Deterministic parameter / input construction
# ---------------------------------------------------------------------------
def make_params(key, q_dim=768, a_dim=768, att_dim=64, hidden=256):
    def linear(k, fan_in, fan_out, w_dtype=jnp.bfloat16):
        kw, kb = jax.random.split(k)
        bound = 1.0 / jnp.sqrt(fan_in)
        w = jax.random.uniform(kw, (fan_in, fan_out), jnp.float32, -bound, bound)
        b = jax.random.uniform(kb, (1, fan_out), jnp.float32, -bound, bound)
        return w.astype(w_dtype), b

    ks = jax.random.split(key, 5)
    # Large streamed weights live in HBM as bf16 (halves weight DMA traffic);
    # biases and the tiny cls weight stay f32.
    wq, bq = linear(ks[0], q_dim, hidden)
    wa, ba = linear(ks[1], a_dim, hidden)
    w1, b1 = linear(ks[2], hidden, att_dim * 2)
    w2, b2 = linear(ks[3], att_dim * 2, att_dim)
    wc, bc = linear(ks[4], att_dim, 1, w_dtype=jnp.float32)
    return dict(wq=wq, bq=bq, wa=wa, ba=ba, w1=w1, b1=b1, w2=w2, b2=b2, wc=wc, bc=bc)


if __name__ == "__main__":
    B, Lq, La, D = 2, 8, 8, 768     # small batch / seq, module-default feature dims
    key = jax.random.PRNGKey(0)
    k_q, k_a, k_p = jax.random.split(key, 3)

    question = jax.random.normal(k_q, (B, Lq, D), jnp.float32)
    ans = jax.random.normal(k_a, (5, B, La, D), jnp.float32)
    a1, a2, a3, a4, a5 = (ans[i] for i in range(5))
    params = make_params(k_p)

    logits = jax.block_until_ready(tvqa_qa_only(question, a1, a2, a3, a4, a5, params))
    ref = jax.block_until_ready(reference(question, [a1, a2, a3, a4, a5], params))

    assert logits.shape == (B, 5), logits.shape
    # bf16 matmul operands (f32 accumulation) + approximated erf: 5e-3 tolerance
    # comfortably covers the rounding while still validating the forward pass.
    assert jnp.allclose(logits, ref, atol=5e-3, rtol=5e-3), (logits, ref)
    print("KERNEL_OK")
</pallas_src>

<mosaic_0001>
module attributes {stable_mosaic.version = 11 : i64} {
  func.func @tvqa_kernel(%arg0: memref<2x8x768xf32, #tpu.memory_space<vmem>>, %arg1: memref<2x8x768xf32, #tpu.memory_space<vmem>>, %arg2: memref<2x8x768xf32, #tpu.memory_space<vmem>>, %arg3: memref<2x8x768xf32, #tpu.memory_space<vmem>>, %arg4: memref<2x8x768xf32, #tpu.memory_space<vmem>>, %arg5: memref<2x8x768xf32, #tpu.memory_space<vmem>>, %arg6: memref<768x256xbf16, #tpu.memory_space<vmem>>, %arg7: memref<1x256xf32, #tpu.memory_space<vmem>>, %arg8: memref<768x256xbf16, #tpu.memory_space<vmem>>, %arg9: memref<1x256xf32, #tpu.memory_space<vmem>>, %arg10: memref<256x128xbf16, #tpu.memory_space<vmem>>, %arg11: memref<1x128xf32, #tpu.memory_space<vmem>>, %arg12: memref<128x64xbf16, #tpu.memory_space<vmem>>, %arg13: memref<1x64xf32, #tpu.memory_space<vmem>>, %arg14: memref<1x64xf32, #tpu.memory_space<vmem>>, %arg15: memref<1x1xf32, #tpu.memory_space<vmem>>, %arg16: memref<2x5xf32, #tpu.memory_space<vmem>>, %arg17: memref<96x256xbf16, #tpu.memory_space<vmem>>) attributes {dimension_semantics = [], scalar_prefetch = 0 : i64, scratch_operands = 1 : i64, tpu.core_type = #tpu.core_type<tc>} {
    %c0 = arith.constant 0 : index
    %c0_0 = arith.constant 0 : index
    %c0_1 = arith.constant 0 : index
    %0 = vector.load %arg0[%c0, %c0_0, %c0_1] : memref<2x8x768xf32, #tpu.memory_space<vmem>>, vector<2x8x768xf32>
    %1 = vector.shape_cast %0 : vector<2x8x768xf32> to vector<16x768xf32>
    %2 = arith.truncf %1 : vector<16x768xf32> to vector<16x768xbf16>
    %c0_2 = arith.constant 0 : index
    %c0_3 = arith.constant 0 : index
    %3 = vector.load %arg6[%c0_2, %c0_3] : memref<768x256xbf16, #tpu.memory_space<vmem>>, vector<768x256xbf16>
    %cst = arith.constant dense<0.000000e+00> : vector<16x256xf32>
    %4 = tpu.matmul %2, %3, %cst {dimension_numbers = #tpu.dot_dimension_numbers<[1], [0], [0], [1], [0, 0, 1, 1], [], []>} : vector<16x768xbf16>, vector<768x256xbf16>, vector<16x256xf32> -> vector<16x256xf32>
    %c0_4 = arith.constant 0 : index
    %c0_5 = arith.constant 0 : index
    %5 = vector.load %arg7[%c0_4, %c0_5] : memref<1x256xf32, #tpu.memory_space<vmem>>, vector<1x256xf32>
    %6 = vector.broadcast %5 : vector<1x256xf32> to vector<16x256xf32>
    %7 = arith.addf %4, %6 : vector<16x256xf32>
    %cst_6 = arith.constant 5.000000e-01 : f32
    %8 = vector.broadcast %cst_6 : f32 to vector<16x256xf32>
    %9 = arith.mulf %8, %7 : vector<16x256xf32>
    %cst_7 = arith.constant 0.707106769 : f32
    %10 = vector.broadcast %cst_7 : f32 to vector<16x256xf32>
    %11 = arith.mulf %7, %10 : vector<16x256xf32>
    %12 = math.absf %11 : vector<16x256xf32>
    %cst_8 = arith.constant 5.000000e-01 : f32
    %13 = vector.broadcast %cst_8 : f32 to vector<16x256xf32>
    %14 = arith.mulf %13, %12 : vector<16x256xf32>
    %cst_9 = arith.constant 1.000000e+00 : f32
    %15 = vector.broadcast %cst_9 : f32 to vector<16x256xf32>
    %16 = arith.addf %15, %14 : vector<16x256xf32>
    %17 = tpu.reciprocal %16 {approx = true} : vector<16x256xf32> -> vector<16x256xf32>
    %cst_10 = arith.constant 0.170872763 : f32
    %18 = vector.broadcast %cst_10 : f32 to vector<16x256xf32>
    %19 = arith.mulf %17, %18 : vector<16x256xf32>
    %cst_11 = arith.constant -0.822152256 : f32
    %20 = vector.broadcast %cst_11 : f32 to vector<16x256xf32>
    %21 = arith.addf %20, %19 : vector<16x256xf32>
    %22 = arith.mulf %17, %21 : vector<16x256xf32>
    %cst_12 = arith.constant 1.48851585 : f32
    %23 = vector.broadcast %cst_12 : f32 to vector<16x256xf32>
    %24 = arith.addf %23, %22 : vector<16x256xf32>
    %25 = arith.mulf %17, %24 : vector<16x256xf32>
    %cst_13 = arith.constant -1.13520396 : f32
    %26 = vector.broadcast %cst_13 : f32 to vector<16x256xf32>
    %27 = arith.addf %26, %25 : vector<16x256xf32>
    %28 = arith.mulf %17, %27 : vector<16x256xf32>
    %cst_14 = arith.constant 0.278868079 : f32
    %29 = vector.broadcast %cst_14 : f32 to vector<16x256xf32>
    %30 = arith.addf %29, %28 : vector<16x256xf32>
    %31 = arith.mulf %17, %30 : vector<16x256xf32>
    %cst_15 = arith.constant -0.186288059 : f32
    %32 = vector.broadcast %cst_15 : f32 to vector<16x256xf32>
    %33 = arith.addf %32, %31 : vector<16x256xf32>
    %34 = arith.mulf %17, %33 : vector<16x256xf32>
    %cst_16 = arith.constant 0.0967841818 : f32
    %35 = vector.broadcast %cst_16 : f32 to vector<16x256xf32>
    %36 = arith.addf %35, %34 : vector<16x256xf32>
    %37 = arith.mulf %17, %36 : vector<16x256xf32>
    %cst_17 = arith.constant 0.374091953 : f32
    %38 = vector.broadcast %cst_17 : f32 to vector<16x256xf32>
    %39 = arith.addf %38, %37 : vector<16x256xf32>
    %40 = arith.mulf %17, %39 : vector<16x256xf32>
    %cst_18 = arith.constant 1.00002372 : f32
    %41 = vector.broadcast %cst_18 : f32 to vector<16x256xf32>
    %42 = arith.addf %41, %40 : vector<16x256xf32>
    %43 = arith.mulf %17, %42 : vector<16x256xf32>
    %cst_19 = arith.constant -1.26551223 : f32
    %44 = vector.broadcast %cst_19 : f32 to vector<16x256xf32>
    %45 = arith.addf %44, %43 : vector<16x256xf32>
    %cst_20 = arith.constant 0.000000e+00 : f32
    %46 = vector.broadcast %cst_20 : f32 to vector<16x256xf32>
    %47 = arith.subf %46, %12 : vector<16x256xf32>
    %48 = arith.mulf %47, %12 : vector<16x256xf32>
    %49 = arith.addf %48, %45 : vector<16x256xf32>
    %50 = math.exp %49 : vector<16x256xf32>
    %51 = arith.mulf %17, %50 : vector<16x256xf32>
    %cst_21 = arith.constant 0.000000e+00 : f32
    %52 = vector.broadcast %cst_21 : f32 to vector<16x256xf32>
    %53 = arith.cmpf oge, %11, %52 : vector<16x256xf32>
    %cst_22 = arith.constant 1.000000e+00 : f32
    %54 = vector.broadcast %cst_22 : f32 to vector<16x256xf32>
    %55 = arith.subf %54, %51 : vector<16x256xf32>
    %cst_23 = arith.constant 1.000000e+00 : f32
    %56 = vector.broadcast %cst_23 : f32 to vector<16x256xf32>
    %57 = arith.subf %51, %56 : vector<16x256xf32>
    %58 = arith.select %53, %55, %57 : vector<16x256xi1>, vector<16x256xf32>
    %cst_24 = arith.constant 1.000000e+00 : f32
    %59 = vector.broadcast %cst_24 : f32 to vector<16x256xf32>
    %60 = arith.addf %59, %58 : vector<16x256xf32>
    %61 = arith.mulf %9, %60 : vector<16x256xf32>
    %62 = arith.truncf %61 : vector<16x256xf32> to vector<16x256xbf16>
    %c0_25 = arith.constant 0 : index
    %c0_26 = arith.constant 0 : index
    %63 = vector.load %arg17[%c0_25, %c0_26] : memref<96x256xbf16, #tpu.memory_space<vmem>>, vector<16x256xbf16>
    tpu.vector_store %arg17[%c0_25, %c0_26], %62 {strides = array<i32>} : memref<96x256xbf16, #tpu.memory_space<vmem>>, vector<16x256xbf16>,
    %c0_27 = arith.constant 0 : index
    %c0_28 = arith.constant 0 : index
    %64 = vector.load %arg8[%c0_27, %c0_28] : memref<768x256xbf16, #tpu.memory_space<vmem>>, vector<768x256xbf16>
    %c0_29 = arith.constant 0 : index
    %c0_30 = arith.constant 0 : index
    %65 = vector.load %arg9[%c0_29, %c0_30] : memref<1x256xf32, #tpu.memory_space<vmem>>, vector<1x256xf32>
    %c0_31 = arith.constant 0 : index
    %c0_32 = arith.constant 0 : index
    %c0_33 = arith.constant 0 : index
    %66 = vector.load %arg1[%c0_31, %c0_32, %c0_33] : memref<2x8x768xf32, #tpu.memory_space<vmem>>, vector<2x8x768xf32>
    %67 = vector.shape_cast %66 : vector<2x8x768xf32> to vector<16x768xf32>
    %68 = arith.truncf %67 : vector<16x768xf32> to vector<16x768xbf16>
    %cst_34 = arith.constant dense<0.000000e+00> : vector<16x256xf32>
    %69 = tpu.matmul %68, %64, %cst_34 {dimension_numbers = #tpu.dot_dimension_numbers<[1], [0], [0], [1], [0, 0, 1, 1], [], []>} : vector<16x768xbf16>, vector<768x256xbf16>, vector<16x256xf32> -> vector<16x256xf32>
    %70 = vector.broadcast %65 : vector<1x256xf32> to vector<16x256xf32>
    %71 = arith.addf %69, %70 : vector<16x256xf32>
    %cst_35 = arith.constant 5.000000e-01 : f32
    %72 = vector.broadcast %cst_35 : f32 to vector<16x256xf32>
    %73 = arith.mulf %72, %71 : vector<16x256xf32>
    %cst_36 = arith.constant 0.707106769 : f32
    %74 = vector.broadcast %cst_36 : f32 to vector<16x256xf32>
    %75 = arith.mulf %71, %74 : vector<16x256xf32>
    %76 = math.absf %75 : vector<16x256xf32>
    %cst_37 = arith.constant 5.000000e-01 : f32
    %77 = vector.broadcast %cst_37 : f32 to vector<16x256xf32>
    %78 = arith.mulf %77, %76 : vector<16x256xf32>
    %cst_38 = arith.constant 1.000000e+00 : f32
    %79 = vector.broadcast %cst_38 : f32 to vector<16x256xf32>
    %80 = arith.addf %79, %78 : vector<16x256xf32>
    %81 = tpu.reciprocal %80 {approx = true} : vector<16x256xf32> -> vector<16x256xf32>
    %cst_39 = arith.constant 0.170872763 : f32
    %82 = vector.broadcast %cst_39 : f32 to vector<16x256xf32>
    %83 = arith.mulf %81, %82 : vector<16x256xf32>
    %cst_40 = arith.constant -0.822152256 : f32
    %84 = vector.broadcast %cst_40 : f32 to vector<16x256xf32>
    %85 = arith.addf %84, %83 : vector<16x256xf32>
    %86 = arith.mulf %81, %85 : vector<16x256xf32>
    %cst_41 = arith.constant 1.48851585 : f32
    %87 = vector.broadcast %cst_41 : f32 to vector<16x256xf32>
    %88 = arith.addf %87, %86 : vector<16x256xf32>
    %89 = arith.mulf %81, %88 : vector<16x256xf32>
    %cst_42 = arith.constant -1.13520396 : f32
    %90 = vector.broadcast %cst_42 : f32 to vector<16x256xf32>
    %91 = arith.addf %90, %89 : vector<16x256xf32>
    %92 = arith.mulf %81, %91 : vector<16x256xf32>
    %cst_43 = arith.constant 0.278868079 : f32
    %93 = vector.broadcast %cst_43 : f32 to vector<16x256xf32>
    %94 = arith.addf %93, %92 : vector<16x256xf32>
    %95 = arith.mulf %81, %94 : vector<16x256xf32>
    %cst_44 = arith.constant -0.186288059 : f32
    %96 = vector.broadcast %cst_44 : f32 to vector<16x256xf32>
    %97 = arith.addf %96, %95 : vector<16x256xf32>
    %98 = arith.mulf %81, %97 : vector<16x256xf32>
    %cst_45 = arith.constant 0.0967841818 : f32
    %99 = vector.broadcast %cst_45 : f32 to vector<16x256xf32>
    %100 = arith.addf %99, %98 : vector<16x256xf32>
    %101 = arith.mulf %81, %100 : vector<16x256xf32>
    %cst_46 = arith.constant 0.374091953 : f32
    %102 = vector.broadcast %cst_46 : f32 to vector<16x256xf32>
    %103 = arith.addf %102, %101 : vector<16x256xf32>
    %104 = arith.mulf %81, %103 : vector<16x256xf32>
    %cst_47 = arith.constant 1.00002372 : f32
    %105 = vector.broadcast %cst_47 : f32 to vector<16x256xf32>
    %106 = arith.addf %105, %104 : vector<16x256xf32>
    %107 = arith.mulf %81, %106 : vector<16x256xf32>
    %cst_48 = arith.constant -1.26551223 : f32
    %108 = vector.broadcast %cst_48 : f32 to vector<16x256xf32>
    %109 = arith.addf %108, %107 : vector<16x256xf32>
    %cst_49 = arith.constant 0.000000e+00 : f32
    %110 = vector.broadcast %cst_49 : f32 to vector<16x256xf32>
    %111 = arith.subf %110, %76 : vector<16x256xf32>
    %112 = arith.mulf %111, %76 : vector<16x256xf32>
    %113 = arith.addf %112, %109 : vector<16x256xf32>
    %114 = math.exp %113 : vector<16x256xf32>
    %115 = arith.mulf %81, %114 : vector<16x256xf32>
    %cst_50 = arith.constant 0.000000e+00 : f32
    %116 = vector.broadcast %cst_50 : f32 to vector<16x256xf32>
    %117 = arith.cmpf oge, %75, %116 : vector<16x256xf32>
    %cst_51 = arith.constant 1.000000e+00 : f32
    %118 = vector.broadcast %cst_51 : f32 to vector<16x256xf32>
    %119 = arith.subf %118, %115 : vector<16x256xf32>
    %cst_52 = arith.constant 1.000000e+00 : f32
    %120 = vector.broadcast %cst_52 : f32 to vector<16x256xf32>
    %121 = arith.subf %115, %120 : vector<16x256xf32>
    %122 = arith.select %117, %119, %121 : vector<16x256xi1>, vector<16x256xf32>
    %cst_53 = arith.constant 1.000000e+00 : f32
    %123 = vector.broadcast %cst_53 : f32 to vector<16x256xf32>
    %124 = arith.addf %123, %122 : vector<16x256xf32>
    %125 = arith.mulf %73, %124 : vector<16x256xf32>
    %126 = arith.truncf %125 : vector<16x256xf32> to vector<16x256xbf16>
    %c16 = arith.constant 16 : index
    %c0_54 = arith.constant 0 : index
    %127 = vector.load %arg17[%c16, %c0_54] : memref<96x256xbf16, #tpu.memory_space<vmem>>, vector<16x256xbf16>
    tpu.vector_store %arg17[%c16, %c0_54], %126 {strides = array<i32>} : memref<96x256xbf16, #tpu.memory_space<vmem>>, vector<16x256xbf16>,
    %c0_55 = arith.constant 0 : index
    %c0_56 = arith.constant 0 : index
    %c0_57 = arith.constant 0 : index
    %128 = vector.load %arg2[%c0_55, %c0_56, %c0_57] : memref<2x8x768xf32, #tpu.memory_space<vmem>>, vector<2x8x768xf32>
    %129 = vector.shape_cast %128 : vector<2x8x768xf32> to vector<16x768xf32>
    %130 = arith.truncf %129 : vector<16x768xf32> to vector<16x768xbf16>
    %cst_58 = arith.constant dense<0.000000e+00> : vector<16x256xf32>
    %131 = tpu.matmul %130, %64, %cst_58 {dimension_numbers = #tpu.dot_dimension_numbers<[1], [0], [0], [1], [0, 0, 1, 1], [], []>} : vector<16x768xbf16>, vector<768x256xbf16>, vector<16x256xf32> -> vector<16x256xf32>
    %132 = vector.broadcast %65 : vector<1x256xf32> to vector<16x256xf32>
    %133 = arith.addf %131, %132 : vector<16x256xf32>
    %cst_59 = arith.constant 5.000000e-01 : f32
    %134 = vector.broadcast %cst_59 : f32 to vector<16x256xf32>
    %135 = arith.mulf %134, %133 : vector<16x256xf32>
    %cst_60 = arith.constant 0.707106769 : f32
    %136 = vector.broadcast %cst_60 : f32 to vector<16x256xf32>
    %137 = arith.mulf %133, %136 : vector<16x256xf32>
    %138 = math.absf %137 : vector<16x256xf32>
    %cst_61 = arith.constant 5.000000e-01 : f32
    %139 = vector.broadcast %cst_61 : f32 to vector<16x256xf32>
    %140 = arith.mulf %139, %138 : vector<16x256xf32>
    %cst_62 = arith.constant 1.000000e+00 : f32
    %141 = vector.broadcast %cst_62 : f32 to vector<16x256xf32>
    %142 = arith.addf %141, %140 : vector<16x256xf32>
    %143 = tpu.reciprocal %142 {approx = true} : vector<16x256xf32> -> vector<16x256xf32>
    %cst_63 = arith.constant 0.170872763 : f32
    %144 = vector.broadcast %cst_63 : f32 to vector<16x256xf32>
    %145 = arith.mulf %143, %144 : vector<16x256xf32>
    %cst_64 = arith.constant -0.822152256 : f32
    %146 = vector.broadcast %cst_64 : f32 to vector<16x256xf32>
    %147 = arith.addf %146, %145 : vector<16x256xf32>
    %148 = arith.mulf %143, %147 : vector<16x256xf32>
    %cst_65 = arith.constant 1.48851585 : f32
    %149 = vector.broadcast %cst_65 : f32 to vector<16x256xf32>
    %150 = arith.addf %149, %148 : vector<16x256xf32>
    %151 = arith.mulf %143, %150 : vector<16x256xf32>
    %cst_66 = arith.constant -1.13520396 : f32
    %152 = vector.broadcast %cst_66 : f32 to vector<16x256xf32>
    %153 = arith.addf %152, %151 : vector<16x256xf32>
    %154 = arith.mulf %143, %153 : vector<16x256xf32>
    %cst_67 = arith.constant 0.278868079 : f32
    %155 = vector.broadcast %cst_67 : f32 to vector<16x256xf32>
    %156 = arith.addf %155, %154 : vector<16x256xf32>
    %157 = arith.mulf %143, %156 : vector<16x256xf32>
    %cst_68 = arith.constant -0.186288059 : f32
    %158 = vector.broadcast %cst_68 : f32 to vector<16x256xf32>
    %159 = arith.addf %158, %157 : vector<16x256xf32>
    %160 = arith.mulf %143, %159 : vector<16x256xf32>
    %cst_69 = arith.constant 0.0967841818 : f32
    %161 = vector.broadcast %cst_69 : f32 to vector<16x256xf32>
    %162 = arith.addf %161, %160 : vector<16x256xf32>
    %163 = arith.mulf %143, %162 : vector<16x256xf32>
    %cst_70 = arith.constant 0.374091953 : f32
    %164 = vector.broadcast %cst_70 : f32 to vector<16x256xf32>
    %165 = arith.addf %164, %163 : vector<16x256xf32>
    %166 = arith.mulf %143, %165 : vector<16x256xf32>
    %cst_71 = arith.constant 1.00002372 : f32
    %167 = vector.broadcast %cst_71 : f32 to vector<16x256xf32>
    %168 = arith.addf %167, %166 : vector<16x256xf32>
    %169 = arith.mulf %143, %168 : vector<16x256xf32>
    %cst_72 = arith.constant -1.26551223 : f32
    %170 = vector.broadcast %cst_72 : f32 to vector<16x256xf32>
    %171 = arith.addf %170, %169 : vector<16x256xf32>
    %cst_73 = arith.constant 0.000000e+00 : f32
    %172 = vector.broadcast %cst_73 : f32 to vector<16x256xf32>
    %173 = arith.subf %172, %138 : vector<16x256xf32>
    %174 = arith.mulf %173, %138 : vector<16x256xf32>
    %175 = arith.addf %174, %171 : vector<16x256xf32>
    %176 = math.exp %175 : vector<16x256xf32>
    %177 = arith.mulf %143, %176 : vector<16x256xf32>
    %cst_74 = arith.constant 0.000000e+00 : f32
    %178 = vector.broadcast %cst_74 : f32 to vector<16x256xf32>
    %179 = arith.cmpf oge, %137, %178 : vector<16x256xf32>
    %cst_75 = arith.constant 1.000000e+00 : f32
    %180 = vector.broadcast %cst_75 : f32 to vector<16x256xf32>
    %181 = arith.subf %180, %177 : vector<16x256xf32>
    %cst_76 = arith.constant 1.000000e+00 : f32
    %182 = vector.broadcast %cst_76 : f32 to vector<16x256xf32>
    %183 = arith.subf %177, %182 : vector<16x256xf32>
    %184 = arith.select %179, %181, %183 : vector<16x256xi1>, vector<16x256xf32>
    %cst_77 = arith.constant 1.000000e+00 : f32
    %185 = vector.broadcast %cst_77 : f32 to vector<16x256xf32>
    %186 = arith.addf %185, %184 : vector<16x256xf32>
    %187 = arith.mulf %135, %186 : vector<16x256xf32>
    %188 = arith.truncf %187 : vector<16x256xf32> to vector<16x256xbf16>
    %c32 = arith.constant 32 : index
    %c0_78 = arith.constant 0 : index
    %189 = vector.load %arg17[%c32, %c0_78] : memref<96x256xbf16, #tpu.memory_space<vmem>>, vector<16x256xbf16>
    tpu.vector_store %arg17[%c32, %c0_78], %188 {strides = array<i32>} : memref<96x256xbf16, #tpu.memory_space<vmem>>, vector<16x256xbf16>,
    %c0_79 = arith.constant 0 : index
    %c0_80 = arith.constant 0 : index
    %c0_81 = arith.constant 0 : index
    %190 = vector.load %arg3[%c0_79, %c0_80, %c0_81] : memref<2x8x768xf32, #tpu.memory_space<vmem>>, vector<2x8x768xf32>
    %191 = vector.shape_cast %190 : vector<2x8x768xf32> to vector<16x768xf32>
    %192 = arith.truncf %191 : vector<16x768xf32> to vector<16x768xbf16>
    %cst_82 = arith.constant dense<0.000000e+00> : vector<16x256xf32>
    %193 = tpu.matmul %192, %64, %cst_82 {dimension_numbers = #tpu.dot_dimension_numbers<[1], [0], [0], [1], [0, 0, 1, 1], [], []>} : vector<16x768xbf16>, vector<768x256xbf16>, vector<16x256xf32> -> vector<16x256xf32>
    %194 = vector.broadcast %65 : vector<1x256xf32> to vector<16x256xf32>
    %195 = arith.addf %193, %194 : vector<16x256xf32>
    %cst_83 = arith.constant 5.000000e-01 : f32
    %196 = vector.broadcast %cst_83 : f32 to vector<16x256xf32>
    %197 = arith.mulf %196, %195 : vector<16x256xf32>
    %cst_84 = arith.constant 0.707106769 : f32
    %198 = vector.broadcast %cst_84 : f32 to vector<16x256xf32>
    %199 = arith.mulf %195, %198 : vector<16x256xf32>
    %200 = math.absf %199 : vector<16x256xf32>
    %cst_85 = arith.constant 5.000000e-01 : f32
    %201 = vector.broadcast %cst_85 : f32 to vector<16x256xf32>
    %202 = arith.mulf %201, %200 : vector<16x256xf32>
    %cst_86 = arith.constant 1.000000e+00 : f32
    %203 = vector.broadcast %cst_86 : f32 to vector<16x256xf32>
    %204 = arith.addf %203, %202 : vector<16x256xf32>
    %205 = tpu.reciprocal %204 {approx = true} : vector<16x256xf32> -> vector<16x256xf32>
    %cst_87 = arith.constant 0.170872763 : f32
    %206 = vector.broadcast %cst_87 : f32 to vector<16x256xf32>
    %207 = arith.mulf %205, %206 : vector<16x256xf32>
    %cst_88 = arith.constant -0.822152256 : f32
    %208 = vector.broadcast %cst_88 : f32 to vector<16x256xf32>
    %209 = arith.addf %208, %207 : vector<16x256xf32>
    %210 = arith.mulf %205, %209 : vector<16x256xf32>
    %cst_89 = arith.constant 1.48851585 : f32
    %211 = vector.broadcast %cst_89 : f32 to vector<16x256xf32>
    %212 = arith.addf %211, %210 : vector<16x256xf32>
    %213 = arith.mulf %205, %212 : vector<16x256xf32>
    %cst_90 = arith.constant -1.13520396 : f32
    %214 = vector.broadcast %cst_90 : f32 to vector<16x256xf32>
    %215 = arith.addf %214, %213 : vector<16x256xf32>
    %216 = arith.mulf %205, %215 : vector<16x256xf32>
    %cst_91 = arith.constant 0.278868079 : f32
    %217 = vector.broadcast %cst_91 : f32 to vector<16x256xf32>
    %218 = arith.addf %217, %216 : vector<16x256xf32>
    %219 = arith.mulf %205, %218 : vector<16x256xf32>
    %cst_92 = arith.constant -0.186288059 : f32
    %220 = vector.broadcast %cst_92 : f32 to vector<16x256xf32>
    %221 = arith.addf %220, %219 : vector<16x256xf32>
    %222 = arith.mulf %205, %221 : vector<16x256xf32>
    %cst_93 = arith.constant 0.0967841818 : f32
    %223 = vector.broadcast %cst_93 : f32 to vector<16x256xf32>
    %224 = arith.addf %223, %222 : vector<16x256xf32>
    %225 = arith.mulf %205, %224 : vector<16x256xf32>
    %cst_94 = arith.constant 0.374091953 : f32
    %226 = vector.broadcast %cst_94 : f32 to vector<16x256xf32>
    %227 = arith.addf %226, %225 : vector<16x256xf32>
    %228 = arith.mulf %205, %227 : vector<16x256xf32>
    %cst_95 = arith.constant 1.00002372 : f32
    %229 = vector.broadcast %cst_95 : f32 to vector<16x256xf32>
    %230 = arith.addf %229, %228 : vector<16x256xf32>
    %231 = arith.mulf %205, %230 : vector<16x256xf32>
    %cst_96 = arith.constant -1.26551223 : f32
    %232 = vector.broadcast %cst_96 : f32 to vector<16x256xf32>
    %233 = arith.addf %232, %231 : vector<16x256xf32>
    %cst_97 = arith.constant 0.000000e+00 : f32
    %234 = vector.broadcast %cst_97 : f32 to vector<16x256xf32>
    %235 = arith.subf %234, %200 : vector<16x256xf32>
    %236 = arith.mulf %235, %200 : vector<16x256xf32>
    %237 = arith.addf %236, %233 : vector<16x256xf32>
    %238 = math.exp %237 : vector<16x256xf32>
    %239 = arith.mulf %205, %238 : vector<16x256xf32>
    %cst_98 = arith.constant 0.000000e+00 : f32
    %240 = vector.broadcast %cst_98 : f32 to vector<16x256xf32>
    %241 = arith.cmpf oge, %199, %240 : vector<16x256xf32>
    %cst_99 = arith.constant 1.000000e+00 : f32
    %242 = vector.broadcast %cst_99 : f32 to vector<16x256xf32>
    %243 = arith.subf %242, %239 : vector<16x256xf32>
    %cst_100 = arith.constant 1.000000e+00 : f32
    %244 = vector.broadcast %cst_100 : f32 to vector<16x256xf32>
    %245 = arith.subf %239, %244 : vector<16x256xf32>
    %246 = arith.select %241, %243, %245 : vector<16x256xi1>, vector<16x256xf32>
    %cst_101 = arith.constant 1.000000e+00 : f32
    %247 = vector.broadcast %cst_101 : f32 to vector<16x256xf32>
    %248 = arith.addf %247, %246 : vector<16x256xf32>
    %249 = arith.mulf %197, %248 : vector<16x256xf32>
    %250 = arith.truncf %249 : vector<16x256xf32> to vector<16x256xbf16>
    %c48 = arith.constant 48 : index
    %c0_102 = arith.constant 0 : index
    %251 = vector.load %arg17[%c48, %c0_102] : memref<96x256xbf16, #tpu.memory_space<vmem>>, vector<16x256xbf16>
    tpu.vector_store %arg17[%c48, %c0_102], %250 {strides = array<i32>} : memref<96x256xbf16, #tpu.memory_space<vmem>>, vector<16x256xbf16>,
    %c0_103 = arith.constant 0 : index
    %c0_104 = arith.constant 0 : index
    %c0_105 = arith.constant 0 : index
    %252 = vector.load %arg4[%c0_103, %c0_104, %c0_105] : memref<2x8x768xf32, #tpu.memory_space<vmem>>, vector<2x8x768xf32>
    %253 = vector.shape_cast %252 : vector<2x8x768xf32> to vector<16x768xf32>
    %254 = arith.truncf %253 : vector<16x768xf32> to vector<16x768xbf16>
    %cst_106 = arith.constant dense<0.000000e+00> : vector<16x256xf32>
    %255 = tpu.matmul %254, %64, %cst_106 {dimension_numbers = #tpu.dot_dimension_numbers<[1], [0], [0], [1], [0, 0, 1, 1], [], []>} : vector<16x768xbf16>, vector<768x256xbf16>, vector<16x256xf32> -> vector<16x256xf32>
    %256 = vector.broadcast %65 : vector<1x256xf32> to vector<16x256xf32>
    %257 = arith.addf %255, %256 : vector<16x256xf32>
    %cst_107 = arith.constant 5.000000e-01 : f32
    %258 = vector.broadcast %cst_107 : f32 to vector<16x256xf32>
    %259 = arith.mulf %258, %257 : vector<16x256xf32>
    %cst_108 = arith.constant 0.707106769 : f32
    %260 = vector.broadcast %cst_108 : f32 to vector<16x256xf32>
    %261 = arith.mulf %257, %260 : vector<16x256xf32>
    %262 = math.absf %261 : vector<16x256xf32>
    %cst_109 = arith.constant 5.000000e-01 : f32
    %263 = vector.broadcast %cst_109 : f32 to vector<16x256xf32>
    %264 = arith.mulf %263, %262 : vector<16x256xf32>
    %cst_110 = arith.constant 1.000000e+00 : f32
    %265 = vector.broadcast %cst_110 : f32 to vector<16x256xf32>
    %266 = arith.addf %265, %264 : vector<16x256xf32>
    %267 = tpu.reciprocal %266 {approx = true} : vector<16x256xf32> -> vector<16x256xf32>
    %cst_111 = arith.constant 0.170872763 : f32
    %268 = vector.broadcast %cst_111 : f32 to vector<16x256xf32>
    %269 = arith.mulf %267, %268 : vector<16x256xf32>
    %cst_112 = arith.constant -0.822152256 : f32
    %270 = vector.broadcast %cst_112 : f32 to vector<16x256xf32>
    %271 = arith.addf %270, %269 : vector<16x256xf32>
    %272 = arith.mulf %267, %271 : vector<16x256xf32>
    %cst_113 = arith.constant 1.48851585 : f32
    %273 = vector.broadcast %cst_113 : f32 to vector<16x256xf32>
    %274 = arith.addf %273, %272 : vector<16x256xf32>
    %275 = arith.mulf %267, %274 : vector<16x256xf32>
    %cst_114 = arith.constant -1.13520396 : f32
    %276 = vector.broadcast %cst_114 : f32 to vector<16x256xf32>
    %277 = arith.addf %276, %275 : vector<16x256xf32>
    %278 = arith.mulf %267, %277 : vector<16x256xf32>
    %cst_115 = arith.constant 0.278868079 : f32
    %279 = vector.broadcast %cst_115 : f32 to vector<16x256xf32>
    %280 = arith.addf %279, %278 : vector<16x256xf32>
    %281 = arith.mulf %267, %280 : vector<16x256xf32>
    %cst_116 = arith.constant -0.186288059 : f32
    %282 = vector.broadcast %cst_116 : f32 to vector<16x256xf32>
    %283 = arith.addf %282, %281 : vector<16x256xf32>
    %284 = arith.mulf %267, %283 : vector<16x256xf32>
    %cst_117 = arith.constant 0.0967841818 : f32
    %285 = vector.broadcast %cst_117 : f32 to vector<16x256xf32>
    %286 = arith.addf %285, %284 : vector<16x256xf32>
    %287 = arith.mulf %267, %286 : vector<16x256xf32>
    %cst_118 = arith.constant 0.374091953 : f32
    %288 = vector.broadcast %cst_118 : f32 to vector<16x256xf32>
    %289 = arith.addf %288, %287 : vector<16x256xf32>
    %290 = arith.mulf %267, %289 : vector<16x256xf32>
    %cst_119 = arith.constant 1.00002372 : f32
    %291 = vector.broadcast %cst_119 : f32 to vector<16x256xf32>
    %292 = arith.addf %291, %290 : vector<16x256xf32>
    %293 = arith.mulf %267, %292 : vector<16x256xf32>
    %cst_120 = arith.constant -1.26551223 : f32
    %294 = vector.broadcast %cst_120 : f32 to vector<16x256xf32>
    %295 = arith.addf %294, %293 : vector<16x256xf32>
    %cst_121 = arith.constant 0.000000e+00 : f32
    %296 = vector.broadcast %cst_121 : f32 to vector<16x256xf32>
    %297 = arith.subf %296, %262 : vector<16x256xf32>
    %298 = arith.mulf %297, %262 : vector<16x256xf32>
    %299 = arith.addf %298, %295 : vector<16x256xf32>
    %300 = math.exp %299 : vector<16x256xf32>
    %301 = arith.mulf %267, %300 : vector<16x256xf32>
    %cst_122 = arith.constant 0.000000e+00 : f32
    %302 = vector.broadcast %cst_122 : f32 to vector<16x256xf32>
    %303 = arith.cmpf oge, %261, %302 : vector<16x256xf32>
    %cst_123 = arith.constant 1.000000e+00 : f32
    %304 = vector.broadcast %cst_123 : f32 to vector<16x256xf32>
    %305 = arith.subf %304, %301 : vector<16x256xf32>
    %cst_124 = arith.constant 1.000000e+00 : f32
    %306 = vector.broadcast %cst_124 : f32 to vector<16x256xf32>
    %307 = arith.subf %301, %306 : vector<16x256xf32>
    %308 = arith.select %303, %305, %307 : vector<16x256xi1>, vector<16x256xf32>
    %cst_125 = arith.constant 1.000000e+00 : f32
    %309 = vector.broadcast %cst_125 : f32 to vector<16x256xf32>
    %310 = arith.addf %309, %308 : vector<16x256xf32>
    %311 = arith.mulf %259, %310 : vector<16x256xf32>
    %312 = arith.truncf %311 : vector<16x256xf32> to vector<16x256xbf16>
    %c64 = arith.constant 64 : index
    %c0_126 = arith.constant 0 : index
    %313 = vector.load %arg17[%c64, %c0_126] : memref<96x256xbf16, #tpu.memory_space<vmem>>, vector<16x256xbf16>
    tpu.vector_store %arg17[%c64, %c0_126], %312 {strides = array<i32>} : memref<96x256xbf16, #tpu.memory_space<vmem>>, vector<16x256xbf16>,
    %c0_127 = arith.constant 0 : index
    %c0_128 = arith.constant 0 : index
    %c0_129 = arith.constant 0 : index
    %314 = vector.load %arg5[%c0_127, %c0_128, %c0_129] : memref<2x8x768xf32, #tpu.memory_space<vmem>>, vector<2x8x768xf32>
    %315 = vector.shape_cast %314 : vector<2x8x768xf32> to vector<16x768xf32>
    %316 = arith.truncf %315 : vector<16x768xf32> to vector<16x768xbf16>
    %cst_130 = arith.constant dense<0.000000e+00> : vector<16x256xf32>
    %317 = tpu.matmul %316, %64, %cst_130 {dimension_numbers = #tpu.dot_dimension_numbers<[1], [0], [0], [1], [0, 0, 1, 1], [], []>} : vector<16x768xbf16>, vector<768x256xbf16>, vector<16x256xf32> -> vector<16x256xf32>
    %318 = vector.broadcast %65 : vector<1x256xf32> to vector<16x256xf32>
    %319 = arith.addf %317, %318 : vector<16x256xf32>
    %cst_131 = arith.constant 5.000000e-01 : f32
    %320 = vector.broadcast %cst_131 : f32 to vector<16x256xf32>
    %321 = arith.mulf %320, %319 : vector<16x256xf32>
    %cst_132 = arith.constant 0.707106769 : f32
    %322 = vector.broadcast %cst_132 : f32 to vector<16x256xf32>
    %323 = arith.mulf %319, %322 : vector<16x256xf32>
    %324 = math.absf %323 : vector<16x256xf32>
    %cst_133 = arith.constant 5.000000e-01 : f32
    %325 = vector.broadcast %cst_133 : f32 to vector<16x256xf32>
    %326 = arith.mulf %325, %324 : vector<16x256xf32>
    %cst_134 = arith.constant 1.000000e+00 : f32
    %327 = vector.broadcast %cst_134 : f32 to vector<16x256xf32>
    %328 = arith.addf %327, %326 : vector<16x256xf32>
    %329 = tpu.reciprocal %328 {approx = true} : vector<16x256xf32> -> vector<16x256xf32>
    %cst_135 = arith.constant 0.170872763 : f32
    %330 = vector.broadcast %cst_135 : f32 to vector<16x256xf32>
    %331 = arith.mulf %329, %330 : vector<16x256xf32>
    %cst_136 = arith.constant -0.822152256 : f32
    %332 = vector.broadcast %cst_136 : f32 to vector<16x256xf32>
    %333 = arith.addf %332, %331 : vector<16x256xf32>
    %334 = arith.mulf %329, %333 : vector<16x256xf32>
    %cst_137 = arith.constant 1.48851585 : f32
    %335 = vector.broadcast %cst_137 : f32 to vector<16x256xf32>
    %336 = arith.addf %335, %334 : vector<16x256xf32>
    %337 = arith.mulf %329, %336 : vector<16x256xf32>
    %cst_138 = arith.constant -1.13520396 : f32
    %338 = vector.broadcast %cst_138 : f32 to vector<16x256xf32>
    %339 = arith.addf %338, %337 : vector<16x256xf32>
    %340 = arith.mulf %329, %339 : vector<16x256xf32>
    %cst_139 = arith.constant 0.278868079 : f32
    %341 = vector.broadcast %cst_139 : f32 to vector<16x256xf32>
    %342 = arith.addf %341, %340 : vector<16x256xf32>
    %343 = arith.mulf %329, %342 : vector<16x256xf32>
    %cst_140 = arith.constant -0.186288059 : f32
    %344 = vector.broadcast %cst_140 : f32 to vector<16x256xf32>
    %345 = arith.addf %344, %343 : vector<16x256xf32>
    %346 = arith.mulf %329, %345 : vector<16x256xf32>
    %cst_141 = arith.constant 0.0967841818 : f32
    %347 = vector.broadcast %cst_141 : f32 to vector<16x256xf32>
    %348 = arith.addf %347, %346 : vector<16x256xf32>
    %349 = arith.mulf %329, %348 : vector<16x256xf32>
    %cst_142 = arith.constant 0.374091953 : f32
    %350 = vector.broadcast %cst_142 : f32 to vector<16x256xf32>
    %351 = arith.addf %350, %349 : vector<16x256xf32>
    %352 = arith.mulf %329, %351 : vector<16x256xf32>
    %cst_143 = arith.constant 1.00002372 : f32
    %353 = vector.broadcast %cst_143 : f32 to vector<16x256xf32>
    %354 = arith.addf %353, %352 : vector<16x256xf32>
    %355 = arith.mulf %329, %354 : vector<16x256xf32>
    %cst_144 = arith.constant -1.26551223 : f32
    %356 = vector.broadcast %cst_144 : f32 to vector<16x256xf32>
    %357 = arith.addf %356, %355 : vector<16x256xf32>
    %cst_145 = arith.constant 0.000000e+00 : f32
    %358 = vector.broadcast %cst_145 : f32 to vector<16x256xf32>
    %359 = arith.subf %358, %324 : vector<16x256xf32>
    %360 = arith.mulf %359, %324 : vector<16x256xf32>
    %361 = arith.addf %360, %357 : vector<16x256xf32>
    %362 = math.exp %361 : vector<16x256xf32>
    %363 = arith.mulf %329, %362 : vector<16x256xf32>
    %cst_146 = arith.constant 0.000000e+00 : f32
    %364 = vector.broadcast %cst_146 : f32 to vector<16x256xf32>
    %365 = arith.cmpf oge, %323, %364 : vector<16x256xf32>
    %cst_147 = arith.constant 1.000000e+00 : f32
    %366 = vector.broadcast %cst_147 : f32 to vector<16x256xf32>
    %367 = arith.subf %366, %363 : vector<16x256xf32>
    %cst_148 = arith.constant 1.000000e+00 : f32
    %368 = vector.broadcast %cst_148 : f32 to vector<16x256xf32>
    %369 = arith.subf %363, %368 : vector<16x256xf32>
    %370 = arith.select %365, %367, %369 : vector<16x256xi1>, vector<16x256xf32>
    %cst_149 = arith.constant 1.000000e+00 : f32
    %371 = vector.broadcast %cst_149 : f32 to vector<16x256xf32>
    %372 = arith.addf %371, %370 : vector<16x256xf32>
    %373 = arith.mulf %321, %372 : vector<16x256xf32>
    %374 = arith.truncf %373 : vector<16x256xf32> to vector<16x256xbf16>
    %c80 = arith.constant 80 : index
    %c0_150 = arith.constant 0 : index
    %375 = vector.load %arg17[%c80, %c0_150] : memref<96x256xbf16, #tpu.memory_space<vmem>>, vector<16x256xbf16>
    tpu.vector_store %arg17[%c80, %c0_150], %374 {strides = array<i32>} : memref<96x256xbf16, #tpu.memory_space<vmem>>, vector<16x256xbf16>,
    %c0_151 = arith.constant 0 : index
    %c0_152 = arith.constant 0 : index
    %376 = vector.load %arg17[%c0_151, %c0_152] : memref<96x256xbf16, #tpu.memory_space<vmem>>, vector<96x256xbf16>
    %c0_153 = arith.constant 0 : index
    %c0_154 = arith.constant 0 : index
    %377 = vector.load %arg10[%c0_153, %c0_154] : memref<256x128xbf16, #tpu.memory_space<vmem>>, vector<256x128xbf16>
    %cst_155 = arith.constant dense<0.000000e+00> : vector<96x128xf32>
    %378 = tpu.matmul %376, %377, %cst_155 {dimension_numbers = #tpu.dot_dimension_numbers<[1], [0], [0], [1], [0, 0, 1, 1], [], []>} : vector<96x256xbf16>, vector<256x128xbf16>, vector<96x128xf32> -> vector<96x128xf32>
    %c0_156 = arith.constant 0 : index
    %c0_157 = arith.constant 0 : index
    %379 = vector.load %arg11[%c0_156, %c0_157] : memref<1x128xf32, #tpu.memory_space<vmem>>, vector<1x128xf32>
    %380 = vector.broadcast %379 : vector<1x128xf32> to vector<96x128xf32>
    %381 = arith.addf %378, %380 : vector<96x128xf32>
    %cst_158 = arith.constant 5.000000e-01 : f32
    %382 = vector.broadcast %cst_158 : f32 to vector<96x128xf32>
    %383 = arith.mulf %382, %381 : vector<96x128xf32>
    %cst_159 = arith.constant 0.707106769 : f32
    %384 = vector.broadcast %cst_159 : f32 to vector<96x128xf32>
    %385 = arith.mulf %381, %384 : vector<96x128xf32>
    %386 = math.absf %385 : vector<96x128xf32>
    %cst_160 = arith.constant 5.000000e-01 : f32
    %387 = vector.broadcast %cst_160 : f32 to vector<96x128xf32>
    %388 = arith.mulf %387, %386 : vector<96x128xf32>
    %cst_161 = arith.constant 1.000000e+00 : f32
    %389 = vector.broadcast %cst_161 : f32 to vector<96x128xf32>
    %390 = arith.addf %389, %388 : vector<96x128xf32>
    %391 = tpu.reciprocal %390 {approx = true} : vector<96x128xf32> -> vector<96x128xf32>
    %cst_162 = arith.constant 0.170872763 : f32
    %392 = vector.broadcast %cst_162 : f32 to vector<96x128xf32>
    %393 = arith.mulf %391, %392 : vector<96x128xf32>
    %cst_163 = arith.constant -0.822152256 : f32
    %394 = vector.broadcast %cst_163 : f32 to vector<96x128xf32>
    %395 = arith.addf %394, %393 : vector<96x128xf32>
    %396 = arith.mulf %391, %395 : vector<96x128xf32>
    %cst_164 = arith.constant 1.48851585 : f32
    %397 = vector.broadcast %cst_164 : f32 to vector<96x128xf32>
    %398 = arith.addf %397, %396 : vector<96x128xf32>
    %399 = arith.mulf %391, %398 : vector<96x128xf32>
    %cst_165 = arith.constant -1.13520396 : f32
    %400 = vector.broadcast %cst_165 : f32 to vector<96x128xf32>
    %401 = arith.addf %400, %399 : vector<96x128xf32>
    %402 = arith.mulf %391, %401 : vector<96x128xf32>
    %cst_166 = arith.constant 0.278868079 : f32
    %403 = vector.broadcast %cst_166 : f32 to vector<96x128xf32>
    %404 = arith.addf %403, %402 : vector<96x128xf32>
    %405 = arith.mulf %391, %404 : vector<96x128xf32>
    %cst_167 = arith.constant -0.186288059 : f32
    %406 = vector.broadcast %cst_167 : f32 to vector<96x128xf32>
    %407 = arith.addf %406, %405 : vector<96x128xf32>
    %408 = arith.mulf %391, %407 : vector<96x128xf32>
    %cst_168 = arith.constant 0.0967841818 : f32
    %409 = vector.broadcast %cst_168 : f32 to vector<96x128xf32>
    %410 = arith.addf %409, %408 : vector<96x128xf32>
    %411 = arith.mulf %391, %410 : vector<96x128xf32>
    %cst_169 = arith.constant 0.374091953 : f32
    %412 = vector.broadcast %cst_169 : f32 to vector<96x128xf32>
    %413 = arith.addf %412, %411 : vector<96x128xf32>
    %414 = arith.mulf %391, %413 : vector<96x128xf32>
    %cst_170 = arith.constant 1.00002372 : f32
    %415 = vector.broadcast %cst_170 : f32 to vector<96x128xf32>
    %416 = arith.addf %415, %414 : vector<96x128xf32>
    %417 = arith.mulf %391, %416 : vector<96x128xf32>
    %cst_171 = arith.constant -1.26551223 : f32
    %418 = vector.broadcast %cst_171 : f32 to vector<96x128xf32>
    %419 = arith.addf %418, %417 : vector<96x128xf32>
    %cst_172 = arith.constant 0.000000e+00 : f32
    %420 = vector.broadcast %cst_172 : f32 to vector<96x128xf32>
    %421 = arith.subf %420, %386 : vector<96x128xf32>
    %422 = arith.mulf %421, %386 : vector<96x128xf32>
    %423 = arith.addf %422, %419 : vector<96x128xf32>
    %424 = math.exp %423 : vector<96x128xf32>
    %425 = arith.mulf %391, %424 : vector<96x128xf32>
    %cst_173 = arith.constant 0.000000e+00 : f32
    %426 = vector.broadcast %cst_173 : f32 to vector<96x128xf32>
    %427 = arith.cmpf oge, %385, %426 : vector<96x128xf32>
    %cst_174 = arith.constant 1.000000e+00 : f32
    %428 = vector.broadcast %cst_174 : f32 to vector<96x128xf32>
    %429 = arith.subf %428, %425 : vector<96x128xf32>
    %cst_175 = arith.constant 1.000000e+00 : f32
    %430 = vector.broadcast %cst_175 : f32 to vector<96x128xf32>
    %431 = arith.subf %425, %430 : vector<96x128xf32>
    %432 = arith.select %427, %429, %431 : vector<96x128xi1>, vector<96x128xf32>
    %cst_176 = arith.constant 1.000000e+00 : f32
    %433 = vector.broadcast %cst_176 : f32 to vector<96x128xf32>
    %434 = arith.addf %433, %432 : vector<96x128xf32>
    %435 = arith.mulf %383, %434 : vector<96x128xf32>
    %436 = arith.truncf %435 : vector<96x128xf32> to vector<96x128xbf16>
    %c0_177 = arith.constant 0 : index
    %c0_178 = arith.constant 0 : index
    %437 = vector.load %arg12[%c0_177, %c0_178] : memref<128x64xbf16, #tpu.memory_space<vmem>>, vector<128x64xbf16>
    %cst_179 = arith.constant dense<0.000000e+00> : vector<96x64xf32>
    %438 = tpu.matmul %436, %437, %cst_179 {dimension_numbers = #tpu.dot_dimension_numbers<[1], [0], [0], [1], [0, 0, 1, 1], [], []>} : vector<96x128xbf16>, vector<128x64xbf16>, vector<96x64xf32> -> vector<96x64xf32>
    %c0_180 = arith.constant 0 : index
    %c0_181 = arith.constant 0 : index
    %439 = vector.load %arg13[%c0_180, %c0_181] : memref<1x64xf32, #tpu.memory_space<vmem>>, vector<1x64xf32>
    %440 = vector.broadcast %439 : vector<1x64xf32> to vector<96x64xf32>
    %441 = arith.addf %438, %440 : vector<96x64xf32>
    %cst_182 = arith.constant 5.000000e-01 : f32
    %442 = vector.broadcast %cst_182 : f32 to vector<96x64xf32>
    %443 = arith.mulf %442, %441 : vector<96x64xf32>
    %cst_183 = arith.constant 0.707106769 : f32
    %444 = vector.broadcast %cst_183 : f32 to vector<96x64xf32>
    %445 = arith.mulf %441, %444 : vector<96x64xf32>
    %446 = math.absf %445 : vector<96x64xf32>
    %cst_184 = arith.constant 5.000000e-01 : f32
    %447 = vector.broadcast %cst_184 : f32 to vector<96x64xf32>
    %448 = arith.mulf %447, %446 : vector<96x64xf32>
    %cst_185 = arith.constant 1.000000e+00 : f32
    %449 = vector.broadcast %cst_185 : f32 to vector<96x64xf32>
    %450 = arith.addf %449, %448 : vector<96x64xf32>
    %451 = tpu.reciprocal %450 {approx = true} : vector<96x64xf32> -> vector<96x64xf32>
    %cst_186 = arith.constant 0.170872763 : f32
    %452 = vector.broadcast %cst_186 : f32 to vector<96x64xf32>
    %453 = arith.mulf %451, %452 : vector<96x64xf32>
    %cst_187 = arith.constant -0.822152256 : f32
    %454 = vector.broadcast %cst_187 : f32 to vector<96x64xf32>
    %455 = arith.addf %454, %453 : vector<96x64xf32>
    %456 = arith.mulf %451, %455 : vector<96x64xf32>
    %cst_188 = arith.constant 1.48851585 : f32
    %457 = vector.broadcast %cst_188 : f32 to vector<96x64xf32>
    %458 = arith.addf %457, %456 : vector<96x64xf32>
    %459 = arith.mulf %451, %458 : vector<96x64xf32>
    %cst_189 = arith.constant -1.13520396 : f32
    %460 = vector.broadcast %cst_189 : f32 to vector<96x64xf32>
    %461 = arith.addf %460, %459 : vector<96x64xf32>
    %462 = arith.mulf %451, %461 : vector<96x64xf32>
    %cst_190 = arith.constant 0.278868079 : f32
    %463 = vector.broadcast %cst_190 : f32 to vector<96x64xf32>
    %464 = arith.addf %463, %462 : vector<96x64xf32>
    %465 = arith.mulf %451, %464 : vector<96x64xf32>
    %cst_191 = arith.constant -0.186288059 : f32
    %466 = vector.broadcast %cst_191 : f32 to vector<96x64xf32>
    %467 = arith.addf %466, %465 : vector<96x64xf32>
    %468 = arith.mulf %451, %467 : vector<96x64xf32>
    %cst_192 = arith.constant 0.0967841818 : f32
    %469 = vector.broadcast %cst_192 : f32 to vector<96x64xf32>
    %470 = arith.addf %469, %468 : vector<96x64xf32>
    %471 = arith.mulf %451, %470 : vector<96x64xf32>
    %cst_193 = arith.constant 0.374091953 : f32
    %472 = vector.broadcast %cst_193 : f32 to vector<96x64xf32>
    %473 = arith.addf %472, %471 : vector<96x64xf32>
    %474 = arith.mulf %451, %473 : vector<96x64xf32>
    %cst_194 = arith.constant 1.00002372 : f32
    %475 = vector.broadcast %cst_194 : f32 to vector<96x64xf32>
    %476 = arith.addf %475, %474 : vector<96x64xf32>
    %477 = arith.mulf %451, %476 : vector<96x64xf32>
    %cst_195 = arith.constant -1.26551223 : f32
    %478 = vector.broadcast %cst_195 : f32 to vector<96x64xf32>
    %479 = arith.addf %478, %477 : vector<96x64xf32>
    %cst_196 = arith.constant 0.000000e+00 : f32
    %480 = vector.broadcast %cst_196 : f32 to vector<96x64xf32>
    %481 = arith.subf %480, %446 : vector<96x64xf32>
    %482 = arith.mulf %481, %446 : vector<96x64xf32>
    %483 = arith.addf %482, %479 : vector<96x64xf32>
    %484 = math.exp %483 : vector<96x64xf32>
    %485 = arith.mulf %451, %484 : vector<96x64xf32>
    %cst_197 = arith.constant 0.000000e+00 : f32
    %486 = vector.broadcast %cst_197 : f32 to vector<96x64xf32>
    %487 = arith.cmpf oge, %445, %486 : vector<96x64xf32>
    %cst_198 = arith.constant 1.000000e+00 : f32
    %488 = vector.broadcast %cst_198 : f32 to vector<96x64xf32>
    %489 = arith.subf %488, %485 : vector<96x64xf32>
    %cst_199 = arith.constant 1.000000e+00 : f32
    %490 = vector.broadcast %cst_199 : f32 to vector<96x64xf32>
    %491 = arith.subf %485, %490 : vector<96x64xf32>
    %492 = arith.select %487, %489, %491 : vector<96x64xi1>, vector<96x64xf32>
    %cst_200 = arith.constant 1.000000e+00 : f32
    %493 = vector.broadcast %cst_200 : f32 to vector<96x64xf32>
    %494 = arith.addf %493, %492 : vector<96x64xf32>
    %495 = arith.mulf %443, %494 : vector<96x64xf32>
    %496 = vector.extract_strided_slice %495 {offsets = [0, 0], sizes = [16, 64], strides = [1, 1]} : vector<96x64xf32> to vector<16x64xf32>
    %497 = vector.shape_cast %496 : vector<16x64xf32> to vector<2x8x64xf32>
    %cst_201 = arith.constant dense<0xFF800000> : vector<2x64xf32>
    %498 = vector.multi_reduction <maximumf>, %497, %cst_201 [1] : vector<2x8x64xf32> to vector<2x64xf32>
    %c0_202 = arith.constant 0 : index
    %c0_203 = arith.constant 0 : index
    %499 = vector.load %arg14[%c0_202, %c0_203] : memref<1x64xf32, #tpu.memory_space<vmem>>, vector<1x64xf32>
    %500 = vector.extract_strided_slice %495 {offsets = [16, 0], sizes = [16, 64], strides = [1, 1]} : vector<96x64xf32> to vector<16x64xf32>
    %501 = vector.shape_cast %500 : vector<16x64xf32> to vector<2x8x64xf32>
    %cst_204 = arith.constant dense<0xFF800000> : vector<2x64xf32>
    %502 = vector.multi_reduction <maximumf>, %501, %cst_204 [1] : vector<2x8x64xf32> to vector<2x64xf32>
    %503 = arith.maximumf %498, %502 : vector<2x64xf32>
    %504 = vector.broadcast %499 : vector<1x64xf32> to vector<2x64xf32>
    %505 = arith.mulf %503, %504 : vector<2x64xf32>
    %cst_205 = arith.constant dense<0.000000e+00> : vector<2xf32>
    %506 = vector.multi_reduction <add>, %505, %cst_205 [1] : vector<2x64xf32> to vector<2xf32>
    %507 = vector.shape_cast %506 : vector<2xf32> to vector<2x1xf32>
    %508 = vector.extract_strided_slice %495 {offsets = [32, 0], sizes = [16, 64], strides = [1, 1]} : vector<96x64xf32> to vector<16x64xf32>
    %509 = vector.shape_cast %508 : vector<16x64xf32> to vector<2x8x64xf32>
    %cst_206 = arith.constant dense<0xFF800000> : vector<2x64xf32>
    %510 = vector.multi_reduction <maximumf>, %509, %cst_206 [1] : vector<2x8x64xf32> to vector<2x64xf32>
    %511 = arith.maximumf %498, %510 : vector<2x64xf32>
    %512 = vector.broadcast %499 : vector<1x64xf32> to vector<2x64xf32>
    %513 = arith.mulf %511, %512 : vector<2x64xf32>
    %cst_207 = arith.constant dense<0.000000e+00> : vector<2xf32>
    %514 = vector.multi_reduction <add>, %513, %cst_207 [1] : vector<2x64xf32> to vector<2xf32>
    %515 = vector.shape_cast %514 : vector<2xf32> to vector<2x1xf32>
    %516 = vector.extract_strided_slice %495 {offsets = [48, 0], sizes = [16, 64], strides = [1, 1]} : vector<96x64xf32> to vector<16x64xf32>
    %517 = vector.shape_cast %516 : vector<16x64xf32> to vector<2x8x64xf32>
    %cst_208 = arith.constant dense<0xFF800000> : vector<2x64xf32>
    %518 = vector.multi_reduction <maximumf>, %517, %cst_208 [1] : vector<2x8x64xf32> to vector<2x64xf32>
    %519 = arith.maximumf %498, %518 : vector<2x64xf32>
    %520 = vector.broadcast %499 : vector<1x64xf32> to vector<2x64xf32>
    %521 = arith.mulf %519, %520 : vector<2x64xf32>
    %cst_209 = arith.constant dense<0.000000e+00> : vector<2xf32>
    %522 = vector.multi_reduction <add>, %521, %cst_209 [1] : vector<2x64xf32> to vector<2xf32>
    %523 = vector.shape_cast %522 : vector<2xf32> to vector<2x1xf32>
    %524 = vector.extract_strided_slice %495 {offsets = [64, 0], sizes = [16, 64], strides = [1, 1]} : vector<96x64xf32> to vector<16x64xf32>
    %525 = vector.shape_cast %524 : vector<16x64xf32> to vector<2x8x64xf32>
    %cst_210 = arith.constant dense<0xFF800000> : vector<2x64xf32>
    %526 = vector.multi_reduction <maximumf>, %525, %cst_210 [1] : vector<2x8x64xf32> to vector<2x64xf32>
    %527 = arith.maximumf %498, %526 : vector<2x64xf32>
    %528 = vector.broadcast %499 : vector<1x64xf32> to vector<2x64xf32>
    %529 = arith.mulf %527, %528 : vector<2x64xf32>
    %cst_211 = arith.constant dense<0.000000e+00> : vector<2xf32>
    %530 = vector.multi_reduction <add>, %529, %cst_211 [1] : vector<2x64xf32> to vector<2xf32>
    %531 = vector.shape_cast %530 : vector<2xf32> to vector<2x1xf32>
    %532 = vector.extract_strided_slice %495 {offsets = [80, 0], sizes = [16, 64], strides = [1, 1]} : vector<96x64xf32> to vector<16x64xf32>
    %533 = vector.shape_cast %532 : vector<16x64xf32> to vector<2x8x64xf32>
    %cst_212 = arith.constant dense<0xFF800000> : vector<2x64xf32>
    %534 = vector.multi_reduction <maximumf>, %533, %cst_212 [1] : vector<2x8x64xf32> to vector<2x64xf32>
    %535 = arith.maximumf %498, %534 : vector<2x64xf32>
    %536 = vector.broadcast %499 : vector<1x64xf32> to vector<2x64xf32>
    %537 = arith.mulf %535, %536 : vector<2x64xf32>
    %cst_213 = arith.constant dense<0.000000e+00> : vector<2xf32>
    %538 = vector.multi_reduction <add>, %537, %cst_213 [1] : vector<2x64xf32> to vector<2xf32>
    %539 = vector.shape_cast %538 : vector<2xf32> to vector<2x1xf32>
    %540 = tpu.concatenate %507, %515, %523, %531, %539 in 1 : vector<2x1xf32>, vector<2x1xf32>, vector<2x1xf32>, vector<2x1xf32>, vector<2x1xf32> -> vector<2x5xf32>
    %c0_214 = arith.constant 0 : index
    %c0_215 = arith.constant 0 : index
    %541 = vector.load %arg15[%c0_214, %c0_215] : memref<1x1xf32, #tpu.memory_space<vmem>>, vector<1x1xf32>
    %542 = vector.broadcast %541 : vector<1x1xf32> to vector<2x5xf32>
    %543 = arith.addf %540, %542 : vector<2x5xf32>
    %c0_216 = arith.constant 0 : index
    %c0_217 = arith.constant 0 : index
    %544 = vector.load %arg16[%c0_216, %c0_217] : memref<2x5xf32, #tpu.memory_space<vmem>>, vector<2x5xf32>
    tpu.vector_store %arg16[%c0_216, %c0_217], %543 {strides = array<i32>} : memref<2x5xf32, #tpu.memory_space<vmem>>, vector<2x5xf32>,
    return
  }
}

</mosaic_0001>

<llo_original>
// kernel: _tvqa_qa_only.1
$region0: #{_tvqa_qa_only.1}
  #allocation0 [shape = 'u32[]', space=smem, size = 0x4, offset = 0x4, fixed_abs, tag = 'smem constant byte address 0x4 - core index']
  #allocation1 [shape = 'u32[144,128]{1,0:T(1,128)}', space=vmem, size = 0x12000, scoped, tag = 'internal scratch']
  #allocation2 [shape = 'bf16[96,256]{1,0:T(8,128)(2,1)}', space=vmem, size = 0xc000, scoped, tag = 'scratch operand']
  #allocation3 [shape = 'f32[1,1]{1,0:T(1,128)S(1)}', space=vmem, size = 0x200, scoped, tag = 'scoped memory for _tvqa_qa_only.1']
  %s0 = inlined_call_operand.vmem [shape: f32[2,8,768], index: 0, kind: input, shape index: {}]
  %s1 = inlined_call_operand.hbm [shape: f32[2,8,768], index: 1, kind: input, shape index: {}]
  %s2 = inlined_call_operand.hbm [shape: f32[2,8,768], index: 2, kind: input, shape index: {}]
  %s3 = inlined_call_operand.hbm [shape: f32[2,8,768], index: 3, kind: input, shape index: {}]
  %s4 = inlined_call_operand.hbm [shape: f32[2,8,768], index: 4, kind: input, shape index: {}]
  %s5 = inlined_call_operand.hbm [shape: f32[2,8,768], index: 5, kind: input, shape index: {}]
  %s6 = inlined_call_operand.hbm [shape: bf16[768,256], index: 6, kind: input, shape index: {}]
  %s7 = inlined_call_operand.vmem [shape: f32[1,256], index: 7, kind: input, shape index: {}]
  %s8 = inlined_call_operand.hbm [shape: bf16[768,256], index: 8, kind: input, shape index: {}]
  %s9 = inlined_call_operand.vmem [shape: f32[1,256], index: 9, kind: input, shape index: {}]
  %s10 = inlined_call_operand.hbm [shape: bf16[256,128], index: 10, kind: input, shape index: {}]
  %s11 = inlined_call_operand.vmem [shape: f32[1,128], index: 11, kind: input, shape index: {}]
  %s12 = inlined_call_operand.vmem [shape: bf16[128,64], index: 12, kind: input, shape index: {}]
  %s13 = inlined_call_operand.vmem [shape: f32[1,64], index: 13, kind: input, shape index: {}]
  %s14 = inlined_call_operand.vmem [shape: f32[1,64], index: 14, kind: input, shape index: {}]
  %s15 = inlined_call_operand.<no memory space> [shape: f32[1,1], index: 15, kind: input, shape index: {}]
  %s16 = inlined_call_operand.hbm [shape: f32[2,5], index: 16, kind: output, shape index: {}]
  %s17 = sld [smem:[#allocation0]]
  $region106: #{_tvqa_qa_only.1} parent=0
    _
  %s19 = ssub.s32 1, %s17
  %s20 = scalar_select 0, %s19, %s17
  %v21 = vstv %s15
  %22 = vst [vmem:[#allocation3] sm:$0x1] %v21
  $region1: #{_tvqa_qa_only.1} parent=0
    #allocation4 [shape = 'u8[49152]{0}', space=vmem, size = 0xc000, scoped, tag = 'input window, operand 1, single buffered']
    #allocation5 [shape = 's32[1]{0}', space=sflag, size = 0x4, scoped, tag = 'scoped memory for _tvqa_qa_only.1']
    #allocation6 [shape = 's32[1]{0}', space=sflag, size = 0x4, scoped, tag = 'scoped memory for _tvqa_qa_only.1']
    #allocation7 [shape = 'u8[49152]{0}', space=vmem, size = 0xc000, scoped, tag = 'input window, operand 2, single buffered']
    #allocation8 [shape = 's32[1]{0}', space=sflag, size = 0x4, scoped, tag = 'scoped memory for _tvqa_qa_only.1']
    #allocation9 [shape = 'u8[49152]{0}', space=vmem, size = 0xc000, scoped, tag = 'input window, operand 3, single buffered']
    #allocation10 [shape = 'u8[49152]{0}', space=vmem, size = 0xc000, scoped, tag = 'input window, operand 4, single buffered']
    #allocation11 [shape = 's32[1]{0}', space=sflag, size = 0x4, scoped, tag = 'scoped memory for _tvqa_qa_only.1']
    #allocation12 [shape = 'u8[49152]{0}', space=vmem, size = 0xc000, scoped, tag = 'input window, operand 5, single buffered']
    #allocation13 [shape = 'u8[393216]{0}', space=vmem, size = 0x60000, scoped, tag = 'input window, operand 6, single buffered']
    #allocation14 [shape = 's32[1]{0}', space=sflag, size = 0x4, scoped, tag = 'scoped memory for _tvqa_qa_only.1']
    #allocation15 [shape = 'u8[393216]{0}', space=vmem, size = 0x60000, scoped, tag = 'input window, operand 8, single buffered']
    #allocation16 [shape = 'u8[65536]{0}', space=vmem, size = 0x10000, scoped, tag = 'input window, operand 10, single buffered']
    #allocation17 [shape = 's32[1]{0}', space=sflag, size = 0x4, scoped, tag = 'scoped memory for _tvqa_qa_only.1']
    #allocation18 [shape = 'u8[1024]{0}', space=vmem, size = 0x400, scoped, tag = 'output window, operand 0, single buffered']
    %23 = vsyncpa [#allocation5], 0
    %24 = vsyncpa [#allocation8], 0
    %25 = vsyncpa [#allocation11], 0
    %26 = vsyncpa [#allocation14], 0
    %27 = vsyncpa [#allocation17], 0
    %28 = vsyncpa [#allocation6], 0
    // Predicated region
    $region2: #{_tvqa_qa_only.1} parent=1 // pred_check
      _
    $region3: #{_tvqa_qa_only.1} parent=1 // pred_check_branch
      %30 = sbr.rel (0) target = $region5
    $region4: #{_tvqa_qa_only.1} parent=1 // pred_region
      _
    $region5: #{_tvqa_qa_only.1} parent=1 // pred_fallthru
      _
    // Predicated region
    $region6: #{_tvqa_qa_only.1} parent=1 // pred_check
      _
    $region7: #{_tvqa_qa_only.1} parent=1 // pred_check_branch
      %32 = sbr.rel (0) target = $region9
    $region8: #{_tvqa_qa_only.1} parent=1 // pred_region
      %s34 = ssub.s32 1536, 1536
      %35 = vsyncadd [#allocation5], %s34
      %s36 = sshll.u32 [#allocation4], 4
      %s37 = int_to_ptr.vmem [resolvable:$true] %s36
      %42 = dma.hbm_to_vmem [thread:$0]  %s1, 1536, %s37, [#allocation5], 768, 768, 48
    $region9: #{_tvqa_qa_only.1} parent=1 // pred_fallthru
      _
    // Predicated region
    $region10: #{_tvqa_qa_only.1} parent=1 // pred_check
      _
    $region11: #{_tvqa_qa_only.1} parent=1 // pred_check_branch
      %44 = sbr.rel (0) target = $region13
    $region12: #{_tvqa_qa_only.1} parent=1 // pred_region
      %s46 = ssub.s32 1536, 1536
      %47 = vsyncadd [#allocation8], %s46
      %s48 = sshll.u32 [#allocation7], 4
      %s49 = int_to_ptr.vmem [resolvable:$true] %s48
      %54 = dma.hbm_to_vmem [thread:$0]  %s2, 1536, %s49, [#allocation8], 768, 768, 48
    $region13: #{_tvqa_qa_only.1} parent=1 // pred_fallthru
      _
    // Predicated region
    $region14: #{_tvqa_qa_only.1} parent=1 // pred_check
      _
    $region15: #{_tvqa_qa_only.1} parent=1 // pred_check_branch
      %56 = sbr.rel (0) target = $region17
    $region16: #{_tvqa_qa_only.1} parent=1 // pred_region
      %s58 = ssub.s32 1536, 1536
      %59 = vsyncadd [#allocation8], %s58
      %s60 = sshll.u32 [#allocation9], 4
      %s61 = int_to_ptr.vmem [resolvable:$true] %s60
      %66 = dma.hbm_to_vmem [thread:$0]  %s3, 1536, %s61, [#allocation8], 768, 768, 48
    $region17: #{_tvqa_qa_only.1} parent=1 // pred_fallthru
      _
    // Predicated region
    $region18: #{_tvqa_qa_only.1} parent=1 // pred_check
      _
    $region19: #{_tvqa_qa_only.1} parent=1 // pred_check_branch
      %68 = sbr.rel (0) target = $region21
    $region20: #{_tvqa_qa_only.1} parent=1 // pred_region
      %s70 = ssub.s32 1536, 1536
      %71 = vsyncadd [#allocation11], %s70
      %s72 = sshll.u32 [#allocation10], 4
      %s73 = int_to_ptr.vmem [resolvable:$true] %s72
      %78 = dma.hbm_to_vmem [thread:$0]  %s4, 1536, %s73, [#allocation11], 768, 768, 48
    $region21: #{_tvqa_qa_only.1} parent=1 // pred_fallthru
      _
    // Predicated region
    $region22: #{_tvqa_qa_only.1} parent=1 // pred_check
      _
    $region23: #{_tvqa_qa_only.1} parent=1 // pred_check_branch
      %80 = sbr.rel (0) target = $region25
    $region24: #{_tvqa_qa_only.1} parent=1 // pred_region
      %s82 = ssub.s32 1536, 1536
      %83 = vsyncadd [#allocation11], %s82
      %s84 = sshll.u32 [#allocation12], 4
      %s85 = int_to_ptr.vmem [resolvable:$true] %s84
      %90 = dma.hbm_to_vmem [thread:$0]  %s5, 1536, %s85, [#allocation11], 768, 768, 48
    $region25: #{_tvqa_qa_only.1} parent=1 // pred_fallthru
      _
    // Predicated region
    $region26: #{_tvqa_qa_only.1} parent=1 // pred_check
      _
    $region27: #{_tvqa_qa_only.1} parent=1 // pred_check_branch
      %92 = sbr.rel (0) target = $region29
    $region28: #{_tvqa_qa_only.1} parent=1 // pred_region
      %s94 = ssub.s32 12288, 12288
      %95 = vsyncadd [#allocation14], %s94
      %s96 = sshll.u32 [#allocation13], 4
      %s97 = int_to_ptr.vmem [resolvable:$true] %s96
      %102 = dma.hbm_to_vmem [thread:$0]  %s6, 12288, %s97, [#allocation14], 128, 128, 8
    $region29: #{_tvqa_qa_only.1} parent=1 // pred_fallthru
      _
    // Predicated region
    $region30: #{_tvqa_qa_only.1} parent=1 // pred_check
      _
    $region31: #{_tvqa_qa_only.1} parent=1 // pred_check_branch
      %104 = sbr.rel (0) target = $region33
    $region32: #{_tvqa_qa_only.1} parent=1 // pred_region
      _
    $region33: #{_tvqa_qa_only.1} parent=1 // pred_fallthru
      _
    // Predicated region
    $region34: #{_tvqa_qa_only.1} parent=1 // pred_check
      _
    $region35: #{_tvqa_qa_only.1} parent=1 // pred_check_branch
      %106 = sbr.rel (0) target = $region37
    $region36: #{_tvqa_qa_only.1} parent=1 // pred_region
      %s108 = ssub.s32 12288, 12288
      %109 = vsyncadd [#allocation14], %s108
      %s110 = sshll.u32 [#allocation15], 4
      %s111 = int_to_ptr.vmem [resolvable:$true] %s110
      %116 = dma.hbm_to_vmem [thread:$0]  %s8, 12288, %s111, [#allocation14], 128, 128, 8
    $region37: #{_tvqa_qa_only.1} parent=1 // pred_fallthru
      _
    // Predicated region
    $region38: #{_tvqa_qa_only.1} parent=1 // pred_check
      _
    $region39: #{_tvqa_qa_only.1} parent=1 // pred_check_branch
      %118 = sbr.rel (0) target = $region41
    $region40: #{_tvqa_qa_only.1} parent=1 // pred_region
      _
    $region41: #{_tvqa_qa_only.1} parent=1 // pred_fallthru
      _
    // Predicated region
    $region42: #{_tvqa_qa_only.1} parent=1 // pred_check
      _
    $region43: #{_tvqa_qa_only.1} parent=1 // pred_check_branch
      %120 = sbr.rel (0) target = $region45
    $region44: #{_tvqa_qa_only.1} parent=1 // pred_region
      %s122 = ssub.s32 2048, 2048
      %123 = vsyncadd [#allocation17], %s122
      %s124 = sshll.u32 [#allocation16], 4
      %s125 = int_to_ptr.vmem [resolvable:$true] %s124
      %130 = dma.hbm_to_vmem [thread:$0]  %s10, 2048, %s125, [#allocation17], 64, 64, 4
    $region45: #{_tvqa_qa_only.1} parent=1 // pred_fallthru
      _
    // Predicated region
    $region46: #{_tvqa_qa_only.1} parent=1 // pred_check
      _
    $region47: #{_tvqa_qa_only.1} parent=1 // pred_check_branch
      %132 = sbr.rel (0) target = $region49
    $region48: #{_tvqa_qa_only.1} parent=1 // pred_region
      _
    $region49: #{_tvqa_qa_only.1} parent=1 // pred_fallthru
      _
    // Predicated region
    $region50: #{_tvqa_qa_only.1} parent=1 // pred_check
      _
    $region51: #{_tvqa_qa_only.1} parent=1 // pred_check_branch
      %134 = sbr.rel (0) target = $region53
    $region52: #{_tvqa_qa_only.1} parent=1 // pred_region
      _
    $region53: #{_tvqa_qa_only.1} parent=1 // pred_fallthru
      _
    // Predicated region
    $region54: #{_tvqa_qa_only.1} parent=1 // pred_check
      _
    $region55: #{_tvqa_qa_only.1} parent=1 // pred_check_branch
      %136 = sbr.rel (0) target = $region57
    $region56: #{_tvqa_qa_only.1} parent=1 // pred_region
      _
    $region57: #{_tvqa_qa_only.1} parent=1 // pred_fallthru
      _
    // Predicated region
    $region58: #{_tvqa_qa_only.1} parent=1 // pred_check
      _
    $region59: #{_tvqa_qa_only.1} parent=1 // pred_check_branch
      %138 = sbr.rel (0) target = $region61
    $region60: #{_tvqa_qa_only.1} parent=1 // pred_region
      _
    $region61: #{_tvqa_qa_only.1} parent=1 // pred_fallthru
      _
    // Predicated region
    $region62: #{_tvqa_qa_only.1} parent=1 // pred_check
      _
    $region63: #{_tvqa_qa_only.1} parent=1 // pred_check_branch
      %140 = sbr.rel (0) target = $region65
    $region64: #{_tvqa_qa_only.1} parent=1 // pred_region
      _
    $region65: #{_tvqa_qa_only.1} parent=1 // pred_fallthru
      _
    // Predicated region
    $region66: #{_tvqa_qa_only.1} parent=1 // pred_check
      _
    $region67: #{_tvqa_qa_only.1} parent=1 // pred_check_branch
      %142 = sbr.rel (0) target = $region69
    $region68: #{_tvqa_qa_only.1} parent=1 // pred_region
      %143 = dma.done [#allocation5], 1536
    $region69: #{_tvqa_qa_only.1} parent=1 // pred_fallthru
      _
    // Predicated region
    $region70: #{_tvqa_qa_only.1} parent=1 // pred_check
      _
    $region71: #{_tvqa_qa_only.1} parent=1 // pred_check_branch
      %145 = sbr.rel (0) target = $region73
    $region72: #{_tvqa_qa_only.1} parent=1 // pred_region
      %146 = dma.done [#allocation8], 1536
    $region73: #{_tvqa_qa_only.1} parent=1 // pred_fallthru
      _
    // Predicated region
    $region74: #{_tvqa_qa_only.1} parent=1 // pred_check
      _
    $region75: #{_tvqa_qa_only.1} parent=1 // pred_check_branch
      %148 = sbr.rel (0) target = $region77
    $region76: #{_tvqa_qa_only.1} parent=1 // pred_region
      %149 = dma.done [#allocation8], 1536
    $region77: #{_tvqa_qa_only.1} parent=1 // pred_fallthru
      _
    // Predicated region
    $region78: #{_tvqa_qa_only.1} parent=1 // pred_check
      _
    $region79: #{_tvqa_qa_only.1} parent=1 // pred_check_branch
      %151 = sbr.rel (0) target = $region81
    $region80: #{_tvqa_qa_only.1} parent=1 // pred_region
      %152 = dma.done [#allocation11], 1536
    $region81: #{_tvqa_qa_only.1} parent=1 // pred_fallthru
      _
    // Predicated region
    $region82: #{_tvqa_qa_only.1} parent=1 // pred_check
      _
    $region83: #{_tvqa_qa_only.1} parent=1 // pred_check_branch
      %154 = sbr.rel (0) target = $region85
    $region84: #{_tvqa_qa_only.1} parent=1 // pred_region
      %155 = dma.done [#allocation11], 1536
    $region85: #{_tvqa_qa_only.1} parent=1 // pred_fallthru
      _
    // Predicated region
    $region86: #{_tvqa_qa_only.1} parent=1 // pred_check
      _
    $region87: #{_tvqa_qa_only.1} parent=1 // pred_check_branch
      %157 = sbr.rel (0) target = $region89
    $region88: #{_tvqa_qa_only.1} parent=1 // pred_region
      %158 = dma.done [#allocation14], 12288
    $region89: #{_tvqa_qa_only.1} parent=1 // pred_fallthru
      _
    // Predicated region
    $region90: #{_tvqa_qa_only.1} parent=1 // pred_check
      _
    $region91: #{_tvqa_qa_only.1} parent=1 // pred_check_branch
      %160 = sbr.rel (0) target = $region93
    $region92: #{_tvqa_qa_only.1} parent=1 // pred_region
      %161 = dma.done [#allocation14], 12288
    $region93: #{_tvqa_qa_only.1} parent=1 // pred_fallthru
      _
    // Predicated region
    $region94: #{_tvqa_qa_only.1} parent=1 // pred_check
      _
    $region95: #{_tvqa_qa_only.1} parent=1 // pred_check_branch
      %163 = sbr.rel (0) target = $region97
    $region96: #{_tvqa_qa_only.1} parent=1 // pred_region
      %164 = dma.done [#allocation17], 2048
    $region97: #{_tvqa_qa_only.1} parent=1 // pred_fallthru
      _
    %v166 = vld [vmem:[%s0] sm:$0xff]
    %v167 = vld [vmem:[%s0 + $0x8] sm:$0xff]
    %v168 = vld [vmem:[%s0 + $0x10] sm:$0xff]
    %v169 = vld [vmem:[%s0 + $0x18] sm:$0xff]
    %v170 = vld [vmem:[%s0 + $0x20] sm:$0xff]
    %v171 = vld [vmem:[%s0 + $0x28] sm:$0xff]
    %v172 = vld [vmem:[%s0 + $0x30] sm:$0xff]
    %v173 = vld [vmem:[%s0 + $0x38] sm:$0xff]
    %v174 = vld [vmem:[%s0 + $0x40] sm:$0xff]
    %v175 = vld [vmem:[%s0 + $0x48] sm:$0xff]
    %v176 = vld [vmem:[%s0 + $0x50] sm:$0xff]
    %v177 = vld [vmem:[%s0 + $0x58] sm:$0xff]
    %v178 = vpack.c.bf16 %v172, %v166
    %v179 = vpack.c.bf16 %v173, %v167
    %v180 = vpack.c.bf16 %v174, %v168
    %v181 = vpack.c.bf16 %v175, %v169
    %v182 = vpack.c.bf16 %v176, %v170
    %v183 = vpack.c.bf16 %v177, %v171
    %v184 = vld [vmem:[#allocation13] sm:$0xff]
    %v185 = vld [vmem:[#allocation13 + $0x8] sm:$0xff]
    %v186 = vld [vmem:[#allocation13 + $0x10] sm:$0xff]
    %v187 = vld [vmem:[#allocation13 + $0x18] sm:$0xff]
    %v188 = vld [vmem:[#allocation13 + $0x20] sm:$0xff]
    %v189 = vld [vmem:[#allocation13 + $0x28] sm:$0xff]
    %v190 = vld [vmem:[#allocation13 + $0x30] sm:$0xff]
    %v191 = vld [vmem:[#allocation13 + $0x38] sm:$0xff]
    %v192 = vld [vmem:[#allocation13 + $0x40] sm:$0xff]
    %v193 = vld [vmem:[#allocation13 + $0x48] sm:$0xff]
    %v194 = vld [vmem:[#allocation13 + $0x50] sm:$0xff]
    %v195 = vld [vmem:[#allocation13 + $0x58] sm:$0xff]
    %v196 = vld [vmem:[#allocation13 + $0x60] sm:$0xff]
    %v197 = vld [vmem:[#allocation13 + $0x68] sm:$0xff]
    %v198 = vld [vmem:[#allocation13 + $0x70] sm:$0xff]
    %v199 = vld [vmem:[#allocation13 + $0x78] sm:$0xff]
    %v200 = vld [vmem:[#allocation13 + $0x80] sm:$0xff]
    %v201 = vld [vmem:[#allocation13 + $0x88] sm:$0xff]
    %v202 = vld [vmem:[#allocation13 + $0x90] sm:$0xff]
    %v203 = vld [vmem:[#allocation13 + $0x98] sm:$0xff]
    %v204 = vld [vmem:[#allocation13 + $0xa0] sm:$0xff]
    %v205 = vld [vmem:[#allocation13 + $0xa8] sm:$0xff]
    %v206 = vld [vmem:[#allocation13 + $0xb0] sm:$0xff]
    %v207 = vld [vmem:[#allocation13 + $0xb8] sm:$0xff]
    %v208 = vld [vmem:[#allocation13 + $0xc0] sm:$0xff]
    %v209 = vld [vmem:[#allocation13 + $0xc8] sm:$0xff]
    %v210 = vld [vmem:[#allocation13 + $0xd0] sm:$0xff]
    %v211 = vld [vmem:[#allocation13 + $0xd8] sm:$0xff]
    %v212 = vld [vmem:[#allocation13 + $0xe0] sm:$0xff]
    %v213 = vld [vmem:[#allocation13 + $0xe8] sm:$0xff]
    %v214 = vld [vmem:[#allocation13 + $0xf0] sm:$0xff]
    %v215 = vld [vmem:[#allocation13 + $0xf8] sm:$0xff]
    %v216 = vld [vmem:[#allocation13 + $0x100] sm:$0xff]
    %v217 = vld [vmem:[#allocation13 + $0x108] sm:$0xff]
    %v218 = vld [vmem:[#allocation13 + $0x110] sm:$0xff]
    %v219 = vld [vmem:[#allocation13 + $0x118] sm:$0xff]
    %v220 = vld [vmem:[#allocation13 + $0x120] sm:$0xff]
    %v221 = vld [vmem:[#allocation13 + $0x128] sm:$0xff]
    %v222 = vld [vmem:[#allocation13 + $0x130] sm:$0xff]
    %v223 = vld [vmem:[#allocation13 + $0x138] sm:$0xff]
    %v224 = vld [vmem:[#allocation13 + $0x140] sm:$0xff]
    %v225 = vld [vmem:[#allocation13 + $0x148] sm:$0xff]
    %v226 = vld [vmem:[#allocation13 + $0x150] sm:$0xff]
    %v227 = vld [vmem:[#allocation13 + $0x158] sm:$0xff]
    %v228 = vld [vmem:[#allocation13 + $0x160] sm:$0xff]
    %v229 = vld [vmem:[#allocation13 + $0x168] sm:$0xff]
    %v230 = vld [vmem:[#allocation13 + $0x170] sm:$0xff]
    %v231 = vld [vmem:[#allocation13 + $0x178] sm:$0xff]
    %v232 = vld [vmem:[#allocation13 + $0x180] sm:$0xff]
    %v233 = vld [vmem:[#allocation13 + $0x188] sm:$0xff]
    %v234 = vld [vmem:[#allocation13 + $0x190] sm:$0xff]
    %v235 = vld [vmem:[#allocation13 + $0x198] sm:$0xff]
    %v236 = vld [vmem:[#allocation13 + $0x1a0] sm:$0xff]
    %v237 = vld [vmem:[#allocation13 + $0x1a8] sm:$0xff]
    %v238 = vld [vmem:[#allocation13 + $0x1b0] sm:$0xff]
    %v239 = vld [vmem:[#allocation13 + $0x1b8] sm:$0xff]
    %v240 = vld [vmem:[#allocation13 + $0x1c0] sm:$0xff]
    %v241 = vld [vmem:[#allocation13 + $0x1c8] sm:$0xff]
    %v242 = vld [vmem:[#allocation13 + $0x1d0] sm:$0xff]
    %v243 = vld [vmem:[#allocation13 + $0x1d8] sm:$0xff]
    %v244 = vld [vmem:[#allocation13 + $0x1e0] sm:$0xff]
    %v245 = vld [vmem:[#allocation13 + $0x1e8] sm:$0xff]
    %v246 = vld [vmem:[#allocation13 + $0x1f0] sm:$0xff]
    %v247 = vld [vmem:[#allocation13 + $0x1f8] sm:$0xff]
    %v248 = vld [vmem:[#allocation13 + $0x200] sm:$0xff]
    %v249 = vld [vmem:[#allocation13 + $0x208] sm:$0xff]
    %v250 = vld [vmem:[#allocation13 + $0x210] sm:$0xff]
    %v251 = vld [vmem:[#allocation13 + $0x218] sm:$0xff]
    %v252 = vld [vmem:[#allocation13 + $0x220] sm:$0xff]
    %v253 = vld [vmem:[#allocation13 + $0x228] sm:$0xff]
    %v254 = vld [vmem:[#allocation13 + $0x230] sm:$0xff]
    %v255 = vld [vmem:[#allocation13 + $0x238] sm:$0xff]
    %v256 = vld [vmem:[#allocation13 + $0x240] sm:$0xff]
    %v257 = vld [vmem:[#allocation13 + $0x248] sm:$0xff]
    %v258 = vld [vmem:[#allocation13 + $0x250] sm:$0xff]
    %v259 = vld [vmem:[#allocation13 + $0x258] sm:$0xff]
    %v260 = vld [vmem:[#allocation13 + $0x260] sm:$0xff]
    %v261 = vld [vmem:[#allocation13 + $0x268] sm:$0xff]
    %v262 = vld [vmem:[#allocation13 + $0x270] sm:$0xff]
    %v263 = vld [vmem:[#allocation13 + $0x278] sm:$0xff]
    %v264 = vld [vmem:[#allocation13 + $0x280] sm:$0xff]
    %v265 = vld [vmem:[#allocation13 + $0x288] sm:$0xff]
    %v266 = vld [vmem:[#allocation13 + $0x290] sm:$0xff]
    %v267 = vld [vmem:[#allocation13 + $0x298] sm:$0xff]
    %v268 = vld [vmem:[#allocation13 + $0x2a0] sm:$0xff]
    %v269 = vld [vmem:[#allocation13 + $0x2a8] sm:$0xff]
    %v270 = vld [vmem:[#allocation13 + $0x2b0] sm:$0xff]
    %v271 = vld [vmem:[#allocation13 + $0x2b8] sm:$0xff]
    %v272 = vld [vmem:[#allocation13 + $0x2c0] sm:$0xff]
    %v273 = vld [vmem:[#allocation13 + $0x2c8] sm:$0xff]
    %v274 = vld [vmem:[#allocation13 + $0x2d0] sm:$0xff]
    %v275 = vld [vmem:[#allocation13 + $0x2d8] sm:$0xff]
    %v276 = vld [vmem:[#allocation13 + $0x2e0] sm:$0xff]
    %v277 = vld [vmem:[#allocation13 + $0x2e8] sm:$0xff]
    %v278 = vld [vmem:[#allocation13 + $0x2f0] sm:$0xff]
    %v279 = vld [vmem:[#allocation13 + $0x2f8] sm:$0xff]
    %v280 = vld [vmem:[%s7] sm:$0x3]
    %v282 = vlaneseq
    %v283 = vshrl.u32 %v282, 7
    %v284 = vsub.s32 0, %v283
    %v285 = vrot.slane %v280, %v284
    %v286 = vlaneseq
    %v287 = vshrl.u32 %v286, 7
    %v288 = vsub.s32 1, %v287
    %v289 = vrot.slane %v280, %v288
    %v388 = vunpack.c.l.b16 %v184
    %v389 = vunpack.c.h.b16 %v184
    %v390 = vunpack.c.l.b16 %v185
    %v391 = vunpack.c.h.b16 %v185
    %v392 = vunpack.c.l.b16 %v186
    %v393 = vunpack.c.h.b16 %v186
    %v394 = vunpack.c.l.b16 %v187
    %v395 = vunpack.c.h.b16 %v187
    %v396 = vunpack.c.l.b16 %v188
    %v397 = vunpack.c.h.b16 %v188
    %v398 = vunpack.c.l.b16 %v189
    %v399 = vunpack.c.h.b16 %v189
    %v400 = vunpack.c.l.b16 %v190
    %v401 = vunpack.c.h.b16 %v190
    %v402 = vunpack.c.l.b16 %v191
    %v403 = vunpack.c.h.b16 %v191
    %v404 = vunpack.c.l.b16 %v192
    %v405 = vunpack.c.h.b16 %v192
    %v406 = vunpack.c.l.b16 %v193
    %v407 = vunpack.c.h.b16 %v193
    %v408 = vunpack.c.l.b16 %v194
    %v409 = vunpack.c.h.b16 %v194
    %v410 = vunpack.c.l.b16 %v195
    %v411 = vunpack.c.h.b16 %v195
    %v412 = vunpack.c.l.b16 %v196
    %v413 = vunpack.c.h.b16 %v196
    %v414 = vunpack.c.l.b16 %v197
    %v415 = vunpack.c.h.b16 %v197
    %v416 = vunpack.c.l.b16 %v198
    %v417 = vunpack.c.h.b16 %v198
    %v418 = vunpack.c.l.b16 %v199
    %v419 = vunpack.c.h.b16 %v199
    %v420 = vunpack.c.l.b16 %v200
    %v421 = vunpack.c.h.b16 %v200
    %v422 = vunpack.c.l.b16 %v201
    %v423 = vunpack.c.h.b16 %v201
    %v424 = vunpack.c.l.b16 %v202
    %v425 = vunpack.c.h.b16 %v202
    %v426 = vunpack.c.l.b16 %v203
    %v427 = vunpack.c.h.b16 %v203
    %v428 = vunpack.c.l.b16 %v204
    %v429 = vunpack.c.h.b16 %v204
    %v430 = vunpack.c.l.b16 %v205
    %v431 = vunpack.c.h.b16 %v205
    %v432 = vunpack.c.l.b16 %v206
    %v433 = vunpack.c.h.b16 %v206
    %v434 = vunpack.c.l.b16 %v207
    %v435 = vunpack.c.h.b16 %v207
    %v436 = vunpack.c.l.b16 %v208
    %v437 = vunpack.c.h.b16 %v208
    %v438 = vunpack.c.l.b16 %v209
    %v439 = vunpack.c.h.b16 %v209
    %v440 = vunpack.c.l.b16 %v210
    %v441 = vunpack.c.h.b16 %v210
    %v442 = vunpack.c.l.b16 %v211
    %v443 = vunpack.c.h.b16 %v211
    %v444 = vunpack.c.l.b16 %v212
    %v445 = vunpack.c.h.b16 %v212
    %v446 = vunpack.c.l.b16 %v213
    %v447 = vunpack.c.h.b16 %v213
    %v448 = vunpack.c.l.b16 %v214
    %v449 = vunpack.c.h.b16 %v214
    %v450 = vunpack.c.l.b16 %v215
    %v451 = vunpack.c.h.b16 %v215
    %v452 = vunpack.c.l.b16 %v216
    %v453 = vunpack.c.h.b16 %v216
    %v454 = vunpack.c.l.b16 %v217
    %v455 = vunpack.c.h.b16 %v217
    %v456 = vunpack.c.l.b16 %v218
    %v457 = vunpack.c.h.b16 %v218
    %v458 = vunpack.c.l.b16 %v219
    %v459 = vunpack.c.h.b16 %v219
    %v460 = vunpack.c.l.b16 %v220
    %v461 = vunpack.c.h.b16 %v220
    %v462 = vunpack.c.l.b16 %v221
    %v463 = vunpack.c.h.b16 %v221
    %v464 = vunpack.c.l.b16 %v222
    %v465 = vunpack.c.h.b16 %v222
    %v466 = vunpack.c.l.b16 %v223
    %v467 = vunpack.c.h.b16 %v223
    %v468 = vunpack.c.l.b16 %v224
    %v469 = vunpack.c.h.b16 %v224
    %v470 = vunpack.c.l.b16 %v225
    %v471 = vunpack.c.h.b16 %v225
    %v472 = vunpack.c.l.b16 %v226
    %v473 = vunpack.c.h.b16 %v226
    %v474 = vunpack.c.l.b16 %v227
    %v475 = vunpack.c.h.b16 %v227
    %v476 = vunpack.c.l.b16 %v228
    %v477 = vunpack.c.h.b16 %v228
    %v478 = vunpack.c.l.b16 %v229
    %v479 = vunpack.c.h.b16 %v229
    %v480 = vunpack.c.l.b16 %v230
    %v481 = vunpack.c.h.b16 %v230
    %v482 = vunpack.c.l.b16 %v231
    %v483 = vunpack.c.h.b16 %v231
    %v484 = vunpack.c.l.b16 %v232
    %v485 = vunpack.c.h.b16 %v232
    %v486 = vunpack.c.l.b16 %v233
    %v487 = vunpack.c.h.b16 %v233
    %v488 = vunpack.c.l.b16 %v234
    %v489 = vunpack.c.h.b16 %v234
    %v490 = vunpack.c.l.b16 %v235
    %v491 = vunpack.c.h.b16 %v235
    %v492 = vunpack.c.l.b16 %v236
    %v493 = vunpack.c.h.b16 %v236
    %v494 = vunpack.c.l.b16 %v237
    %v495 = vunpack.c.h.b16 %v237
    %v496 = vunpack.c.l.b16 %v238
    %v497 = vunpack.c.h.b16 %v238
    %v498 = vunpack.c.l.b16 %v239
    %v499 = vunpack.c.h.b16 %v239
    %v500 = vunpack.c.l.b16 %v240
    %v501 = vunpack.c.h.b16 %v240
    %v502 = vunpack.c.l.b16 %v241
    %v503 = vunpack.c.h.b16 %v241
    %v504 = vunpack.c.l.b16 %v242
    %v505 = vunpack.c.h.b16 %v242
    %v506 = vunpack.c.l.b16 %v243
    %v507 = vunpack.c.h.b16 %v243
    %v508 = vunpack.c.l.b16 %v244
    %v509 = vunpack.c.h.b16 %v244
    %v510 = vunpack.c.l.b16 %v245
    %v511 = vunpack.c.h.b16 %v245
    %v512 = vunpack.c.l.b16 %v246
    %v513 = vunpack.c.h.b16 %v246
    %v514 = vunpack.c.l.b16 %v247
    %v515 = vunpack.c.h.b16 %v247
    %v516 = vunpack.c.l.b16 %v248
    %v517 = vunpack.c.h.b16 %v248
    %v518 = vunpack.c.l.b16 %v249
    %v519 = vunpack.c.h.b16 %v249
    %v520 = vunpack.c.l.b16 %v250
    %v521 = vunpack.c.h.b16 %v250
    %v522 = vunpack.c.l.b16 %v251
    %v523 = vunpack.c.h.b16 %v251
    %v524 = vunpack.c.l.b16 %v252
    %v525 = vunpack.c.h.b16 %v252
    %v526 = vunpack.c.l.b16 %v253
    %v527 = vunpack.c.h.b16 %v253
    %v528 = vunpack.c.l.b16 %v254
    %v529 = vunpack.c.h.b16 %v254
    %v530 = vunpack.c.l.b16 %v255
    %v531 = vunpack.c.h.b16 %v255
    %v532 = vunpack.c.l.b16 %v256
    %v533 = vunpack.c.h.b16 %v256
    %v534 = vunpack.c.l.b16 %v257
    %v535 = vunpack.c.h.b16 %v257
    %v536 = vunpack.c.l.b16 %v258
    %v537 = vunpack.c.h.b16 %v258
    %v538 = vunpack.c.l.b16 %v259
    %v539 = vunpack.c.h.b16 %v259
    %v540 = vunpack.c.l.b16 %v260
    %v541 = vunpack.c.h.b16 %v260
    %v542 = vunpack.c.l.b16 %v261
    %v543 = vunpack.c.h.b16 %v261
    %v544 = vunpack.c.l.b16 %v262
    %v545 = vunpack.c.h.b16 %v262
    %v546 = vunpack.c.l.b16 %v263
    %v547 = vunpack.c.h.b16 %v263
    %v548 = vunpack.c.l.b16 %v264
    %v549 = vunpack.c.h.b16 %v264
    %v550 = vunpack.c.l.b16 %v265
    %v551 = vunpack.c.h.b16 %v265
    %v552 = vunpack.c.l.b16 %v266
    %v553 = vunpack.c.h.b16 %v266
    %v554 = vunpack.c.l.b16 %v267
    %v555 = vunpack.c.h.b16 %v267
    %v556 = vunpack.c.l.b16 %v268
    %v557 = vunpack.c.h.b16 %v268
    %v558 = vunpack.c.l.b16 %v269
    %v559 = vunpack.c.h.b16 %v269
    %v560 = vunpack.c.l.b16 %v270
    %v561 = vunpack.c.h.b16 %v270
    %v562 = vunpack.c.l.b16 %v271
    %v563 = vunpack.c.h.b16 %v271
    %v564 = vunpack.c.l.b16 %v272
    %v565 = vunpack.c.h.b16 %v272
    %v566 = vunpack.c.l.b16 %v273
    %v567 = vunpack.c.h.b16 %v273
    %v568 = vunpack.c.l.b16 %v274
    %v569 = vunpack.c.h.b16 %v274
    %v570 = vunpack.c.l.b16 %v275
    %v571 = vunpack.c.h.b16 %v275
    %v572 = vunpack.c.l.b16 %v276
    %v573 = vunpack.c.h.b16 %v276
    %v574 = vunpack.c.l.b16 %v277
    %v575 = vunpack.c.h.b16 %v277
    %v576 = vunpack.c.l.b16 %v278
    %v577 = vunpack.c.h.b16 %v278
    %v578 = vunpack.c.l.b16 %v279
    %v579 = vunpack.c.h.b16 %v279
    %v580 = vpack.c.b16 %v390, %v388
    %v581 = vpack.c.b16 %v391, %v389
    %v582 = vpack.c.b16 %v394, %v392
    %v583 = vpack.c.b16 %v395, %v393
    %v584 = vpack.c.b16 %v398, %v396
    %v585 = vpack.c.b16 %v399, %v397
    %v586 = vpack.c.b16 %v402, %v400
    %v587 = vpack.c.b16 %v403, %v401
    %v588 = vpack.c.b16 %v406, %v404
    %v589 = vpack.c.b16 %v407, %v405
    %v590 = vpack.c.b16 %v410, %v408
    %v591 = vpack.c.b16 %v411, %v409
    %v592 = vpack.c.b16 %v414, %v412
    %v593 = vpack.c.b16 %v415, %v413
    %v594 = vpack.c.b16 %v418, %v416
    %v595 = vpack.c.b16 %v419, %v417
    %v596 = vpack.c.b16 %v422, %v420
    %v597 = vpack.c.b16 %v423, %v421
    %v598 = vpack.c.b16 %v426, %v424
    %v599 = vpack.c.b16 %v427, %v425
    %v600 = vpack.c.b16 %v430, %v428
    %v601 = vpack.c.b16 %v431, %v429
    %v602 = vpack.c.b16 %v434, %v432
    %v603 = vpack.c.b16 %v435, %v433
    %v604 = vpack.c.b16 %v438, %v436
    %v605 = vpack.c.b16 %v439, %v437
    %v606 = vpack.c.b16 %v442, %v440
    %v607 = vpack.c.b16 %v443, %v441
    %v608 = vpack.c.b16 %v446, %v444
    %v609 = vpack.c.b16 %v447, %v445
    %v610 = vpack.c.b16 %v450, %v448
    %v611 = vpack.c.b16 %v451, %v449
    %v612 = vpack.c.b16 %v454, %v452
    %v613 = vpack.c.b16 %v455, %v453
    %v614 = vpack.c.b16 %v458, %v456
    %v615 = vpack.c.b16 %v459, %v457
    %v616 = vpack.c.b16 %v462, %v460
    %v617 = vpack.c.b16 %v463, %v461
    %v618 = vpack.c.b16 %v466, %v464
    %v619 = vpack.c.b16 %v467, %v465
    %v620 = vpack.c.b16 %v470, %v468
    %v621 = vpack.c.b16 %v471, %v469
    %v622 = vpack.c.b16 %v474, %v472
    %v623 = vpack.c.b16 %v475, %v473
    %v624 = vpack.c.b16 %v478, %v476
    %v625 = vpack.c.b16 %v479, %v477
    %v626 = vpack.c.b16 %v482, %v480
    %v627 = vpack.c.b16 %v483, %v481
    %v628 = vpack.c.b16 %v486, %v484
    %v629 = vpack.c.b16 %v487, %v485
    %v630 = vpack.c.b16 %v490, %v488
    %v631 = vpack.c.b16 %v491, %v489
    %v632 = vpack.c.b16 %v494, %v492
    %v633 = vpack.c.b16 %v495, %v493
    %v634 = vpack.c.b16 %v498, %v496
    %v635 = vpack.c.b16 %v499, %v497
    %v636 = vpack.c.b16 %v502, %v500
    %v637 = vpack.c.b16 %v503, %v501
    %v638 = vpack.c.b16 %v506, %v504
    %v639 = vpack.c.b16 %v507, %v505
    %v640 = vpack.c.b16 %v510, %v508
    %v641 = vpack.c.b16 %v511, %v509
    %v642 = vpack.c.b16 %v514, %v512
    %v643 = vpack.c.b16 %v515, %v513
    %v644 = vpack.c.b16 %v518, %v516
    %v645 = vpack.c.b16 %v519, %v517
    %v646 = vpack.c.b16 %v522, %v520
    %v647 = vpack.c.b16 %v523, %v521
    %v648 = vpack.c.b16 %v526, %v524
    %v649 = vpack.c.b16 %v527, %v525
    %v650 = vpack.c.b16 %v530, %v528
    %v651 = vpack.c.b16 %v531, %v529
    %v652 = vpack.c.b16 %v534, %v532
    %v653 = vpack.c.b16 %v535, %v533
    %v654 = vpack.c.b16 %v538, %v536
    %v655 = vpack.c.b16 %v539, %v537
    %v656 = vpack.c.b16 %v542, %v540
    %v657 = vpack.c.b16 %v543, %v541
    %v658 = vpack.c.b16 %v546, %v544
    %v659 = vpack.c.b16 %v547, %v545
    %v660 = vpack.c.b16 %v550, %v548
    %v661 = vpack.c.b16 %v551, %v549
    %v662 = vpack.c.b16 %v554, %v552
    %v663 = vpack.c.b16 %v555, %v553
    %v664 = vpack.c.b16 %v558, %v556
    %v665 = vpack.c.b16 %v559, %v557
    %v666 = vpack.c.b16 %v562, %v560
    %v667 = vpack.c.b16 %v563, %v561
    %v668 = vpack.c.b16 %v566, %v564
    %v669 = vpack.c.b16 %v567, %v565
    %v670 = vpack.c.b16 %v570, %v568
    %v671 = vpack.c.b16 %v571, %v569
    %v672 = vpack.c.b16 %v574, %v572
    %v673 = vpack.c.b16 %v575, %v573
    %v674 = vpack.c.b16 %v578, %v576
    %v675 = vpack.c.b16 %v579, %v577
    %772 = vmatprep.subr.bf16.mxu0 %v595
    %773 = vmatpush1.bf16.msra.mxu0 %v594
    %774 = vmatprep.subr.bf16.mxu0 %v593
    %775 = vmatpush1.bf16.msra.mxu0 %v592
    %776 = vmatprep.subr.bf16.mxu0 %v591
    %777 = vmatpush1.bf16.msra.mxu0 %v590
    %778 = vmatprep.subr.bf16.mxu0 %v589
    %779 = vmatpush1.bf16.msra.mxu0 %v588
    %780 = vmatprep.subr.bf16.mxu0 %v587
    %781 = vmatpush1.bf16.msra.mxu0 %v586
    %782 = vmatprep.subr.bf16.mxu0 %v585
    %783 = vmatpush1.bf16.msra.mxu0 %v584
    %784 = vmatprep.subr.bf16.mxu0 %v583
    %785 = vmatpush1.bf16.msra.mxu0 %v582
    %786 = vmatprep.subr.bf16.mxu0 %v581
    %787 = vmatpush1.bf16.msra.mxu0 %v580
    %788 = vmatprep.subr.bf16.mxu0 %v611
    %789 = vmatpush2.bf16.msra.mxu0 %v610
    %790 = vmatprep.subr.bf16.mxu0 %v609
    %791 = vmatpush2.bf16.msra.mxu0 %v608
    %792 = vmatprep.subr.bf16.mxu0 %v607
    %793 = vmatpush2.bf16.msra.mxu0 %v606
    %794 = vmatprep.subr.bf16.mxu0 %v605
    %795 = vmatpush2.bf16.msra.mxu0 %v604
    %796 = vmatprep.subr.bf16.mxu0 %v603
    %797 = vmatpush2.bf16.msra.mxu0 %v602
    %798 = vmatprep.subr.bf16.mxu0 %v601
    %799 = vmatpush2.bf16.msra.mxu0 %v600
    %800 = vmatprep.subr.bf16.mxu0 %v599
    %801 = vmatpush2.bf16.msra.mxu0 %v598
    %802 = vmatprep.subr.bf16.mxu0 %v597
    %803 = vmatpush2.bf16.msra.mxu0 %v596
    %804 = vmatprep.mubr.bf16.mxu0 %v179
    %805 = vmatmul.mubr.bf16.gmra.mxu0 %v178
    %v806 = vpop.f32.mrf.mxu0
    %v807 = vadd.f32 %v285, %v806
    %v808 = vpop.f32.mrf.mxu0
    %v809 = vadd.f32 %v289, %v808
    %v810 = vpop.f32.mrf.mxu0
    %v811 = vadd.f32 %v285, %v810
    %v812 = vpop.f32.mrf.mxu0
    %v813 = vadd.f32 %v289, %v812
    %814 = vdwg.mxu0
    %815 = vmatprep.subr.bf16.mxu0 %v627
    %816 = vmatpush1.bf16.msra.mxu0 %v626
    %817 = vmatprep.subr.bf16.mxu0 %v625
    %818 = vmatpush1.bf16.msra.mxu0 %v624
    %819 = vmatprep.subr.bf16.mxu0 %v623
    %820 = vmatpush1.bf16.msra.mxu0 %v622
    %821 = vmatprep.subr.bf16.mxu0 %v621
    %822 = vmatpush1.bf16.msra.mxu0 %v620
    %823 = vmatprep.subr.bf16.mxu0 %v619
    %824 = vmatpush1.bf16.msra.mxu0 %v618
    %825 = vmatprep.subr.bf16.mxu0 %v617
    %826 = vmatpush1.bf16.msra.mxu0 %v616
    %827 = vmatprep.subr.bf16.mxu0 %v615
    %828 = vmatpush1.bf16.msra.mxu0 %v614
    %829 = vmatprep.subr.bf16.mxu0 %v613
    %830 = vmatpush1.bf16.msra.mxu0 %v612
    %831 = vmatprep.subr.bf16.mxu0 %v643
    %832 = vmatpush2.bf16.msra.mxu0 %v642
    %833 = vmatprep.subr.bf16.mxu0 %v641
    %834 = vmatpush2.bf16.msra.mxu0 %v640
    %835 = vmatprep.subr.bf16.mxu0 %v639
    %836 = vmatpush2.bf16.msra.mxu0 %v638
    %837 = vmatprep.subr.bf16.mxu0 %v637
    %838 = vmatpush2.bf16.msra.mxu0 %v636
    %839 = vmatprep.subr.bf16.mxu0 %v635
    %840 = vmatpush2.bf16.msra.mxu0 %v634
    %841 = vmatprep.subr.bf16.mxu0 %v633
    %842 = vmatpush2.bf16.msra.mxu0 %v632
    %843 = vmatprep.subr.bf16.mxu0 %v631
    %844 = vmatpush2.bf16.msra.mxu0 %v630
    %845 = vmatprep.subr.bf16.mxu0 %v629
    %846 = vmatpush2.bf16.msra.mxu0 %v628
    %847 = vmatprep.mubr.bf16.mxu0 %v181
    %848 = vmatmul.mubr.bf16.gmra.mxu0 %v180
    %v849 = vpop.f32.mrf.mxu0
    %v850 = vadd.f32 %v807, %v849
    %v851 = vpop.f32.mrf.mxu0
    %v852 = vadd.f32 %v809, %v851
    %v853 = vpop.f32.mrf.mxu0
    %v854 = vadd.f32 %v811, %v853
    %v855 = vpop.f32.mrf.mxu0
    %v856 = vadd.f32 %v813, %v855
    %857 = vdwg.mxu0
    %858 = vmatprep.subr.bf16.mxu0 %v659
    %859 = vmatpush1.bf16.msra.mxu0 %v658
    %860 = vmatprep.subr.bf16.mxu0 %v657
    %861 = vmatpush1.bf16.msra.mxu0 %v656
    %862 = vmatprep.subr.bf16.mxu0 %v655
    %863 = vmatpush1.bf16.msra.mxu0 %v654
    %864 = vmatprep.subr.bf16.mxu0 %v653
    %865 = vmatpush1.bf16.msra.mxu0 %v652
    %866 = vmatprep.subr.bf16.mxu0 %v651
    %867 = vmatpush1.bf16.msra.mxu0 %v650
    %868 = vmatprep.subr.bf16.mxu0 %v649
    %869 = vmatpush1.bf16.msra.mxu0 %v648
    %870 = vmatprep.subr.bf16.mxu0 %v647
    %871 = vmatpush1.bf16.msra.mxu0 %v646
    %872 = vmatprep.subr.bf16.mxu0 %v645
    %873 = vmatpush1.bf16.msra.mxu0 %v644
    %874 = vmatprep.subr.bf16.mxu0 %v675
    %875 = vmatpush2.bf16.msra.mxu0 %v674
    %876 = vmatprep.subr.bf16.mxu0 %v673
    %877 = vmatpush2.bf16.msra.mxu0 %v672
    %878 = vmatprep.subr.bf16.mxu0 %v671
    %879 = vmatpush2.bf16.msra.mxu0 %v670
    %880 = vmatprep.subr.bf16.mxu0 %v669
    %881 = vmatpush2.bf16.msra.mxu0 %v668
    %882 = vmatprep.subr.bf16.mxu0 %v667
    %883 = vmatpush2.bf16.msra.mxu0 %v666
    %884 = vmatprep.subr.bf16.mxu0 %v665
    %885 = vmatpush2.bf16.msra.mxu0 %v664
    %886 = vmatprep.subr.bf16.mxu0 %v663
    %887 = vmatpush2.bf16.msra.mxu0 %v662
    %888 = vmatprep.subr.bf16.mxu0 %v661
    %889 = vmatpush2.bf16.msra.mxu0 %v660
    %890 = vmatprep.mubr.bf16.mxu0 %v183
    %891 = vmatmul.mubr.bf16.gmra.mxu0 %v182
    %v892 = vpop.f32.mrf.mxu0
    %v893 = vadd.f32 %v850, %v892
    %v894 = vpop.f32.mrf.mxu0
    %v895 = vadd.f32 %v852, %v894
    %v896 = vpop.f32.mrf.mxu0
    %v897 = vadd.f32 %v854, %v896
    %v898 = vpop.f32.mrf.mxu0
    %v899 = vadd.f32 %v856, %v898
    %900 = vdwg.mxu0
    %v901 = vmul.f32 %v893, 0.5
    %v902 = vmul.f32 %v895, 0.5
    %v903 = vmul.f32 %v897, 0.5
    %v904 = vmul.f32 %v899, 0.5
    %v905 = vmul.f32 %v893, 0.70710677
    %v906 = vmul.f32 %v895, 0.70710677
    %v907 = vmul.f32 %v897, 0.70710677
    %v908 = vmul.f32 %v899, 0.70710677
    %v909 = vand.u32 2147483647, %v905
    %v910 = vand.u32 2147483647, %v906
    %v911 = vand.u32 2147483647, %v907
    %v912 = vand.u32 2147483647, %v908
    %v913 = vmul.f32 %v909, 0.5
    %v914 = vmul.f32 %v910, 0.5
    %v915 = vmul.f32 %v911, 0.5
    %v916 = vmul.f32 %v912, 0.5
    %v917 = vadd.f32 %v913, 1.0
    %v918 = vadd.f32 %v914, 1.0
    %v919 = vadd.f32 %v915, 1.0
    %v920 = vadd.f32 %v916, 1.0
    %v921 = vrcp.pop %v917
    %v922 = vrcp.pop %v918
    %v923 = vrcp.pop %v919
    %v924 = vrcp.pop %v920
    %v925 = vmul.f32 %v921, 0.17087276
    %v926 = vmul.f32 %v922, 0.17087276
    %v927 = vmul.f32 %v923, 0.17087276
    %v928 = vmul.f32 %v924, 0.17087276
    %v929 = vadd.f32 %v925, -0.82215226
    %v930 = vadd.f32 %v926, -0.82215226
    %v931 = vadd.f32 %v927, -0.82215226
    %v932 = vadd.f32 %v928, -0.82215226
    %v933 = vmul.f32 %v921, %v929
    %v934 = vmul.f32 %v922, %v930
    %v935 = vmul.f32 %v923, %v931
    %v936 = vmul.f32 %v924, %v932
    %v937 = vadd.f32 %v933, 1.4885159
    %v938 = vadd.f32 %v934, 1.4885159
    %v939 = vadd.f32 %v935, 1.4885159
    %v940 = vadd.f32 %v936, 1.4885159
    %v941 = vmul.f32 %v921, %v937
    %v942 = vmul.f32 %v922, %v938
    %v943 = vmul.f32 %v923, %v939
    %v944 = vmul.f32 %v924, %v940
    %v945 = vadd.f32 %v941, -1.135204
    %v946 = vadd.f32 %v942, -1.135204
    %v947 = vadd.f32 %v943, -1.135204
    %v948 = vadd.f32 %v944, -1.135204
    %v949 = vmul.f32 %v921, %v945
    %v950 = vmul.f32 %v922, %v946
    %v951 = vmul.f32 %v923, %v947
    %v952 = vmul.f32 %v924, %v948
    %v953 = vadd.f32 %v949, 0.27886808
    %v954 = vadd.f32 %v950, 0.27886808
    %v955 = vadd.f32 %v951, 0.27886808
    %v956 = vadd.f32 %v952, 0.27886808
    %v957 = vmul.f32 %v921, %v953
    %v958 = vmul.f32 %v922, %v954
    %v959 = vmul.f32 %v923, %v955
    %v960 = vmul.f32 %v924, %v956
    %v961 = vadd.f32 %v957, -0.18628806
    %v962 = vadd.f32 %v958, -0.18628806
    %v963 = vadd.f32 %v959, -0.18628806
    %v964 = vadd.f32 %v960, -0.18628806
    %v965 = vmul.f32 %v921, %v961
    %v966 = vmul.f32 %v922, %v962
    %v967 = vmul.f32 %v923, %v963
    %v968 = vmul.f32 %v924, %v964
    %v969 = vadd.f32 %v965, 0.09678418
    %v970 = vadd.f32 %v966, 0.09678418
    %v971 = vadd.f32 %v967, 0.09678418
    %v972 = vadd.f32 %v968, 0.09678418
    %v973 = vmul.f32 %v921, %v969
    %v974 = vmul.f32 %v922, %v970
    %v975 = vmul.f32 %v923, %v971
    %v976 = vmul.f32 %v924, %v972
    %v977 = vadd.f32 %v973, 0.37409195
    %v978 = vadd.f32 %v974, 0.37409195
    %v979 = vadd.f32 %v975, 0.37409195
    %v980 = vadd.f32 %v976, 0.37409195
    %v981 = vmul.f32 %v921, %v977
    %v982 = vmul.f32 %v922, %v978
    %v983 = vmul.f32 %v923, %v979
    %v984 = vmul.f32 %v924, %v980
    %v985 = vadd.f32 %v981, 1.0000237
    %v986 = vadd.f32 %v982, 1.0000237
    %v987 = vadd.f32 %v983, 1.0000237
    %v988 = vadd.f32 %v984, 1.0000237
    %v989 = vmul.f32 %v921, %v985
    %v990 = vmul.f32 %v922, %v986
    %v991 = vmul.f32 %v923, %v987
    %v992 = vmul.f32 %v924, %v988
    %v993 = vadd.f32 %v989, -1.2655122
    %v994 = vadd.f32 %v990, -1.2655122
    %v995 = vadd.f32 %v991, -1.2655122
    %v996 = vadd.f32 %v992, -1.2655122
    %v997 = vsub.f32 0.0, %v909
    %v998 = vsub.f32 0.0, %v910
    %v999 = vsub.f32 0.0, %v911
    %v1000 = vsub.f32 0.0, %v912
    %v1001 = vmul.f32 %v997, %v909
    %v1002 = vmul.f32 %v998, %v910
    %v1003 = vmul.f32 %v999, %v911
    %v1004 = vmul.f32 %v1000, %v912
    %v1005 = vadd.f32 %v1001, %v993
    %v1006 = vadd.f32 %v1002, %v994
    %v1007 = vadd.f32 %v1003, %v995
    %v1008 = vadd.f32 %v1004, %v996
    %v1009 = vmul.f32 %v1005, 1.442695
    %v1010 = vpow.pop %v1009
    %v1011 = vmul.f32 %v1006, 1.442695
    %v1012 = vpow.pop %v1011
    %v1013 = vmul.f32 %v1007, 1.442695
    %v1014 = vpow.pop %v1013
    %v1015 = vmul.f32 %v1008, 1.442695
    %v1016 = vpow.pop %v1015
    %v1017 = vmul.f32 %v921, %v1010
    %v1018 = vmul.f32 %v922, %v1012
    %v1019 = vmul.f32 %v923, %v1014
    %v1020 = vmul.f32 %v924, %v1016
    %vm1021 = vcmp.ge.f32.partialorder %v905, 0.0
    %vm1022 = vcmp.ge.f32.partialorder %v906, 0.0
    %vm1023 = vcmp.ge.f32.partialorder %v907, 0.0
    %vm1024 = vcmp.ge.f32.partialorder %v908, 0.0
    %v1025 = vsub.f32 1.0, %v1017
    %v1026 = vsub.f32 1.0, %v1018
    %v1027 = vsub.f32 1.0, %v1019
    %v1028 = vsub.f32 1.0, %v1020
    %v1029 = vsub.f32 %v1017, 1.0
    %v1030 = vsub.f32 %v1018, 1.0
    %v1031 = vsub.f32 %v1019, 1.0
    %v1032 = vsub.f32 %v1020, 1.0
    %v1033 = vsel %vm1021, %v1025, %v1029
    %v1034 = vsel %vm1022, %v1026, %v1030
    %v1035 = vsel %vm1023, %v1027, %v1031
    %v1036 = vsel %vm1024, %v1028, %v1032
    %v1037 = vadd.f32 %v1033, 1.0
    %v1038 = vadd.f32 %v1034, 1.0
    %v1039 = vadd.f32 %v1035, 1.0
    %v1040 = vadd.f32 %v1036, 1.0
    %v1041 = vmul.f32 %v901, %v1037
    %v1042 = vmul.f32 %v902, %v1038
    %v1043 = vmul.f32 %v903, %v1039
    %v1044 = vmul.f32 %v904, %v1040
    %v1045 = vpack.c.bf16 %v1043, %v1041
    %v1046 = vpack.c.bf16 %v1044, %v1042
    %v1049 = vunpack.c.l.b16 %v1045
    %v1050 = vunpack.c.l.b16 %v1046
    %v1051 = vunpack.c.h.b16 %v1045
    %v1052 = vunpack.c.h.b16 %v1046
    %v1053 = vpack.c.b16 %v1050, %v1049
    %v1054 = vpack.c.b16 %v1052, %v1051
    %1057 = vst [vmem:[#allocation2] sm:$0xff] %v1053
    %1058 = vst [vmem:[#allocation2 + $0x8] sm:$0xff] %v1054
    %v1059 = vld [vmem:[#allocation15] sm:$0xff]
    %v1060 = vld [vmem:[#allocation15 + $0x8] sm:$0xff]
    %v1061 = vld [vmem:[#allocation15 + $0x10] sm:$0xff]
    %v1062 = vld [vmem:[#allocation15 + $0x18] sm:$0xff]
    %v1063 = vld [vmem:[#allocation15 + $0x20] sm:$0xff]
    %v1064 = vld [vmem:[#allocation15 + $0x28] sm:$0xff]
    %v1065 = vld [vmem:[#allocation15 + $0x30] sm:$0xff]
    %v1066 = vld [vmem:[#allocation15 + $0x38] sm:$0xff]
    %v1067 = vld [vmem:[#allocation15 + $0x40] sm:$0xff]
    %v1068 = vld [vmem:[#allocation15 + $0x48] sm:$0xff]
    %v1069 = vld [vmem:[#allocation15 + $0x50] sm:$0xff]
    %v1070 = vld [vmem:[#allocation15 + $0x58] sm:$0xff]
    %v1071 = vld [vmem:[#allocation15 + $0x60] sm:$0xff]
    %v1072 = vld [vmem:[#allocation15 + $0x68] sm:$0xff]
    %v1073 = vld [vmem:[#allocation15 + $0x70] sm:$0xff]
    %v1074 = vld [vmem:[#allocation15 + $0x78] sm:$0xff]
    %v1075 = vld [vmem:[#allocation15 + $0x80] sm:$0xff]
    %v1076 = vld [vmem:[#allocation15 + $0x88] sm:$0xff]
    %v1077 = vld [vmem:[#allocation15 + $0x90] sm:$0xff]
    %v1078 = vld [vmem:[#allocation15 + $0x98] sm:$0xff]
    %v1079 = vld [vmem:[#allocation15 + $0xa0] sm:$0xff]
    %v1080 = vld [vmem:[#allocation15 + $0xa8] sm:$0xff]
    %v1081 = vld [vmem:[#allocation15 + $0xb0] sm:$0xff]
    %v1082 = vld [vmem:[#allocation15 + $0xb8] sm:$0xff]
    %v1083 = vld [vmem:[#allocation15 + $0xc0] sm:$0xff]
    %v1084 = vld [vmem:[#allocation15 + $0xc8] sm:$0xff]
    %v1085 = vld [vmem:[#allocation15 + $0xd0] sm:$0xff]
    %v1086 = vld [vmem:[#allocation15 + $0xd8] sm:$0xff]
    %v1087 = vld [vmem:[#allocation15 + $0xe0] sm:$0xff]
    %v1088 = vld [vmem:[#allocation15 + $0xe8] sm:$0xff]
    %v1089 = vld [vmem:[#allocation15 + $0xf0] sm:$0xff]
    %v1090 = vld [vmem:[#allocation15 + $0xf8] sm:$0xff]
    %v1091 = vld [vmem:[#allocation15 + $0x100] sm:$0xff]
    %v1092 = vld [vmem:[#allocation15 + $0x108] sm:$0xff]
    %v1093 = vld [vmem:[#allocation15 + $0x110] sm:$0xff]
    %v1094 = vld [vmem:[#allocation15 + $0x118] sm:$0xff]
    %v1095 = vld [vmem:[#allocation15 + $0x120] sm:$0xff]
    %v1096 = vld [vmem:[#allocation15 + $0x128] sm:$0xff]
    %v1097 = vld [vmem:[#allocation15 + $0x130] sm:$0xff]
    %v1098 = vld [vmem:[#allocation15 + $0x138] sm:$0xff]
    %v1099 = vld [vmem:[#allocation15 + $0x140] sm:$0xff]
    %v1100 = vld [vmem:[#allocation15 + $0x148] sm:$0xff]
    %v1101 = vld [vmem:[#allocation15 + $0x150] sm:$0xff]
    %v1102 = vld [vmem:[#allocation15 + $0x158] sm:$0xff]
    %v1103 = vld [vmem:[#allocation15 + $0x160] sm:$0xff]
    %v1104 = vld [vmem:[#allocation15 + $0x168] sm:$0xff]
    %v1105 = vld [vmem:[#allocation15 + $0x170] sm:$0xff]
    %v1106 = vld [vmem:[#allocation15 + $0x178] sm:$0xff]
    %v1107 = vld [vmem:[#allocation15 + $0x180] sm:$0xff]
    %v1108 = vld [vmem:[#allocation15 + $0x188] sm:$0xff]
    %v1109 = vld [vmem:[#allocation15 + $0x190] sm:$0xff]
    %v1110 = vld [vmem:[#allocation15 + $0x198] sm:$0xff]
    %v1111 = vld [vmem:[#allocation15 + $0x1a0] sm:$0xff]
    %v1112 = vld [vmem:[#allocation15 + $0x1a8] sm:$0xff]
    %v1113 = vld [vmem:[#allocation15 + $0x1b0] sm:$0xff]
    %v1114 = vld [vmem:[#allocation15 + $0x1b8] sm:$0xff]
    %v1115 = vld [vmem:[#allocation15 + $0x1c0] sm:$0xff]
    %v1116 = vld [vmem:[#allocation15 + $0x1c8] sm:$0xff]
    %v1117 = vld [vmem:[#allocation15 + $0x1d0] sm:$0xff]
    %v1118 = vld [vmem:[#allocation15 + $0x1d8] sm:$0xff]
    %v1119 = vld [vmem:[#allocation15 + $0x1e0] sm:$0xff]
    %v1120 = vld [vmem:[#allocation15 + $0x1e8] sm:$0xff]
    %v1121 = vld [vmem:[#allocation15 + $0x1f0] sm:$0xff]
    %v1122 = vld [vmem:[#allocation15 + $0x1f8] sm:$0xff]
    %v1123 = vld [vmem:[#allocation15 + $0x200] sm:$0xff]
    %v1124 = vld [vmem:[#allocation15 + $0x208] sm:$0xff]
    %v1125 = vld [vmem:[#allocation15 + $0x210] sm:$0xff]
    %v1126 = vld [vmem:[#allocation15 + $0x218] sm:$0xff]
    %v1127 = vld [vmem:[#allocation15 + $0x220] sm:$0xff]
    %v1128 = vld [vmem:[#allocation15 + $0x228] sm:$0xff]
    %v1129 = vld [vmem:[#allocation15 + $0x230] sm:$0xff]
    %v1130 = vld [vmem:[#allocation15 + $0x238] sm:$0xff]
    %v1131 = vld [vmem:[#allocation15 + $0x240] sm:$0xff]
    %v1132 = vld [vmem:[#allocation15 + $0x248] sm:$0xff]
    %v1133 = vld [vmem:[#allocation15 + $0x250] sm:$0xff]
    %v1134 = vld [vmem:[#allocation15 + $0x258] sm:$0xff]
    %v1135 = vld [vmem:[#allocation15 + $0x260] sm:$0xff]
    %v1136 = vld [vmem:[#allocation15 + $0x268] sm:$0xff]
    %v1137 = vld [vmem:[#allocation15 + $0x270] sm:$0xff]
    %v1138 = vld [vmem:[#allocation15 + $0x278] sm:$0xff]
    %v1139 = vld [vmem:[#allocation15 + $0x280] sm:$0xff]
    %v1140 = vld [vmem:[#allocation15 + $0x288] sm:$0xff]
    %v1141 = vld [vmem:[#allocation15 + $0x290] sm:$0xff]
    %v1142 = vld [vmem:[#allocation15 + $0x298] sm:$0xff]
    %v1143 = vld [vmem:[#allocation15 + $0x2a0] sm:$0xff]
    %v1144 = vld [vmem:[#allocation15 + $0x2a8] sm:$0xff]
    %v1145 = vld [vmem:[#allocation15 + $0x2b0] sm:$0xff]
    %v1146 = vld [vmem:[#allocation15 + $0x2b8] sm:$0xff]
    %v1147 = vld [vmem:[#allocation15 + $0x2c0] sm:$0xff]
    %v1148 = vld [vmem:[#allocation15 + $0x2c8] sm:$0xff]
    %v1149 = vld [vmem:[#allocation15 + $0x2d0] sm:$0xff]
    %v1150 = vld [vmem:[#allocation15 + $0x2d8] sm:$0xff]
    %v1151 = vld [vmem:[#allocation15 + $0x2e0] sm:$0xff]
    %v1152 = vld [vmem:[#allocation15 + $0x2e8] sm:$0xff]
    %v1153 = vld [vmem:[#allocation15 + $0x2f0] sm:$0xff]
    %v1154 = vld [vmem:[#allocation15 + $0x2f8] sm:$0xff]
    %v1155 = vld [vmem:[%s9] sm:$0x3]
    %v1156 = vld [vmem:[#allocation4] sm:$0xff]
    %v1157 = vld [vmem:[#allocation4 + $0x8] sm:$0xff]
    %v1158 = vld [vmem:[#allocation4 + $0x10] sm:$0xff]
    %v1159 = vld [vmem:[#allocation4 + $0x18] sm:$0xff]
    %v1160 = vld [vmem:[#allocation4 + $0x20] sm:$0xff]
    %v1161 = vld [vmem:[#allocation4 + $0x28] sm:$0xff]
    %v1162 = vld [vmem:[#allocation4 + $0x30] sm:$0xff]
    %v1163 = vld [vmem:[#allocation4 + $0x38] sm:$0xff]
    %v1164 = vld [vmem:[#allocation4 + $0x40] sm:$0xff]
    %v1165 = vld [vmem:[#allocation4 + $0x48] sm:$0xff]
    %v1166 = vld [vmem:[#allocation4 + $0x50] sm:$0xff]
    %v1167 = vld [vmem:[#allocation4 + $0x58] sm:$0xff]
    %v1168 = vpack.c.bf16 %v1162, %v1156
    %v1169 = vpack.c.bf16 %v1163, %v1157
    %v1170 = vpack.c.bf16 %v1164, %v1158
    %v1171 = vpack.c.bf16 %v1165, %v1159
    %v1172 = vpack.c.bf16 %v1166, %v1160
    %v1173 = vpack.c.bf16 %v1167, %v1161
    %v1175 = vlaneseq
    %v1176 = vshrl.u32 %v1175, 7
    %v1177 = vsub.s32 0, %v1176
    %v1178 = vrot.slane %v1155, %v1177
    %v1179 = vlaneseq
    %v1180 = vshrl.u32 %v1179, 7
    %v1181 = vsub.s32 1, %v1180
    %v1182 = vrot.slane %v1155, %v1181
    %v1281 = vunpack.c.l.b16 %v1059
    %v1282 = vunpack.c.h.b16 %v1059
    %v1283 = vunpack.c.l.b16 %v1060
    %v1284 = vunpack.c.h.b16 %v1060
    %v1285 = vunpack.c.l.b16 %v1061
    %v1286 = vunpack.c.h.b16 %v1061
    %v1287 = vunpack.c.l.b16 %v1062
    %v1288 = vunpack.c.h.b16 %v1062
    %v1289 = vunpack.c.l.b16 %v1063
    %v1290 = vunpack.c.h.b16 %v1063
    %v1291 = vunpack.c.l.b16 %v1064
    %v1292 = vunpack.c.h.b16 %v1064
    %v1293 = vunpack.c.l.b16 %v1065
    %v1294 = vunpack.c.h.b16 %v1065
    %v1295 = vunpack.c.l.b16 %v1066
    %v1296 = vunpack.c.h.b16 %v1066
    %v1297 = vunpack.c.l.b16 %v1067
    %v1298 = vunpack.c.h.b16 %v1067
    %v1299 = vunpack.c.l.b16 %v1068
    %v1300 = vunpack.c.h.b16 %v1068
    %v1301 = vunpack.c.l.b16 %v1069
    %v1302 = vunpack.c.h.b16 %v1069
    %v1303 = vunpack.c.l.b16 %v1070
    %v1304 = vunpack.c.h.b16 %v1070
    %v1305 = vunpack.c.l.b16 %v1071
    %v1306 = vunpack.c.h.b16 %v1071
    %v1307 = vunpack.c.l.b16 %v1072
    %v1308 = vunpack.c.h.b16 %v1072
    %v1309 = vunpack.c.l.b16 %v1073
    %v1310 = vunpack.c.h.b16 %v1073
    %v1311 = vunpack.c.l.b16 %v1074
    %v1312 = vunpack.c.h.b16 %v1074
    %v1313 = vunpack.c.l.b16 %v1075
    %v1314 = vunpack.c.h.b16 %v1075
    %v1315 = vunpack.c.l.b16 %v1076
    %v1316 = vunpack.c.h.b16 %v1076
    %v1317 = vunpack.c.l.b16 %v1077
    %v1318 = vunpack.c.h.b16 %v1077
    %v1319 = vunpack.c.l.b16 %v1078
    %v1320 = vunpack.c.h.b16 %v1078
    %v1321 = vunpack.c.l.b16 %v1079
    %v1322 = vunpack.c.h.b16 %v1079
    %v1323 = vunpack.c.l.b16 %v1080
    %v1324 = vunpack.c.h.b16 %v1080
    %v1325 = vunpack.c.l.b16 %v1081
    %v1326 = vunpack.c.h.b16 %v1081
    %v1327 = vunpack.c.l.b16 %v1082
    %v1328 = vunpack.c.h.b16 %v1082
    %v1329 = vunpack.c.l.b16 %v1083
    %v1330 = vunpack.c.h.b16 %v1083
    %v1331 = vunpack.c.l.b16 %v1084
    %v1332 = vunpack.c.h.b16 %v1084
    %v1333 = vunpack.c.l.b16 %v1085
    %v1334 = vunpack.c.h.b16 %v1085
    %v1335 = vunpack.c.l.b16 %v1086
    %v1336 = vunpack.c.h.b16 %v1086
    %v1337 = vunpack.c.l.b16 %v1087
    %v1338 = vunpack.c.h.b16 %v1087
    %v1339 = vunpack.c.l.b16 %v1088
    %v1340 = vunpack.c.h.b16 %v1088
    %v1341 = vunpack.c.l.b16 %v1089
    %v1342 = vunpack.c.h.b16 %v1089
    %v1343 = vunpack.c.l.b16 %v1090
    %v1344 = vunpack.c.h.b16 %v1090
    %v1345 = vunpack.c.l.b16 %v1091
    %v1346 = vunpack.c.h.b16 %v1091
    %v1347 = vunpack.c.l.b16 %v1092
    %v1348 = vunpack.c.h.b16 %v1092
    %v1349 = vunpack.c.l.b16 %v1093
    %v1350 = vunpack.c.h.b16 %v1093
    %v1351 = vunpack.c.l.b16 %v1094
    %v1352 = vunpack.c.h.b16 %v1094
    %v1353 = vunpack.c.l.b16 %v1095
    %v1354 = vunpack.c.h.b16 %v1095
    %v1355 = vunpack.c.l.b16 %v1096
    %v1356 = vunpack.c.h.b16 %v1096
    %v1357 = vunpack.c.l.b16 %v1097
    %v1358 = vunpack.c.h.b16 %v1097
    %v1359 = vunpack.c.l.b16 %v1098
    %v1360 = vunpack.c.h.b16 %v1098
    %v1361 = vunpack.c.l.b16 %v1099
    %v1362 = vunpack.c.h.b16 %v1099
    %v1363 = vunpack.c.l.b16 %v1100
    %v1364 = vunpack.c.h.b16 %v1100
    %v1365 = vunpack.c.l.b16 %v1101
    %v1366 = vunpack.c.h.b16 %v1101
    %v1367 = vunpack.c.l.b16 %v1102
    %v1368 = vunpack.c.h.b16 %v1102
    %v1369 = vunpack.c.l.b16 %v1103
    %v1370 = vunpack.c.h.b16 %v1103
    %v1371 = vunpack.c.l.b16 %v1104
    %v1372 = vunpack.c.h.b16 %v1104
    %v1373 = vunpack.c.l.b16 %v1105
    %v1374 = vunpack.c.h.b16 %v1105
    %v1375 = vunpack.c.l.b16 %v1106
    %v1376 = vunpack.c.h.b16 %v1106
    %v1377 = vunpack.c.l.b16 %v1107
    %v1378 = vunpack.c.h.b16 %v1107
    %v1379 = vunpack.c.l.b16 %v1108
    %v1380 = vunpack.c.h.b16 %v1108
    %v1381 = vunpack.c.l.b16 %v1109
    %v1382 = vunpack.c.h.b16 %v1109
    %v1383 = vunpack.c.l.b16 %v1110
    %v1384 = vunpack.c.h.b16 %v1110
    %v1385 = vunpack.c.l.b16 %v1111
    %v1386 = vunpack.c.h.b16 %v1111
    %v1387 = vunpack.c.l.b16 %v1112
    %v1388 = vunpack.c.h.b16 %v1112
    %v1389 = vunpack.c.l.b16 %v1113
    %v1390 = vunpack.c.h.b16 %v1113
    %v1391 = vunpack.c.l.b16 %v1114
    %v1392 = vunpack.c.h.b16 %v1114
    %v1393 = vunpack.c.l.b16 %v1115
    %v1394 = vunpack.c.h.b16 %v1115
    %v1395 = vunpack.c.l.b16 %v1116
    %v1396 = vunpack.c.h.b16 %v1116
    %v1397 = vunpack.c.l.b16 %v1117
    %v1398 = vunpack.c.h.b16 %v1117
    %v1399 = vunpack.c.l.b16 %v1118
    %v1400 = vunpack.c.h.b16 %v1118
    %v1401 = vunpack.c.l.b16 %v1119
    %v1402 = vunpack.c.h.b16 %v1119
    %v1403 = vunpack.c.l.b16 %v1120
    %v1404 = vunpack.c.h.b16 %v1120
    %v1405 = vunpack.c.l.b16 %v1121
    %v1406 = vunpack.c.h.b16 %v1121
    %v1407 = vunpack.c.l.b16 %v1122
    %v1408 = vunpack.c.h.b16 %v1122
    %v1409 = vunpack.c.l.b16 %v1123
    %v1410 = vunpack.c.h.b16 %v1123
    %v1411 = vunpack.c.l.b16 %v1124
    %v1412 = vunpack.c.h.b16 %v1124
    %v1413 = vunpack.c.l.b16 %v1125
    %v1414 = vunpack.c.h.b16 %v1125
    %v1415 = vunpack.c.l.b16 %v1126
    %v1416 = vunpack.c.h.b16 %v1126
    %v1417 = vunpack.c.l.b16 %v1127
    %v1418 = vunpack.c.h.b16 %v1127
    %v1419 = vunpack.c.l.b16 %v1128
    %v1420 = vunpack.c.h.b16 %v1128
    %v1421 = vunpack.c.l.b16 %v1129
    %v1422 = vunpack.c.h.b16 %v1129
    %v1423 = vunpack.c.l.b16 %v1130
    %v1424 = vunpack.c.h.b16 %v1130
    %v1425 = vunpack.c.l.b16 %v1131
    %v1426 = vunpack.c.h.b16 %v1131
    %v1427 = vunpack.c.l.b16 %v1132
    %v1428 = vunpack.c.h.b16 %v1132
    %v1429 = vunpack.c.l.b16 %v1133
    %v1430 = vunpack.c.h.b16 %v1133
    %v1431 = vunpack.c.l.b16 %v1134
    %v1432 = vunpack.c.h.b16 %v1134
    %v1433 = vunpack.c.l.b16 %v1135
    %v1434 = vunpack.c.h.b16 %v1135
    %v1435 = vunpack.c.l.b16 %v1136
    %v1436 = vunpack.c.h.b16 %v1136
    %v1437 = vunpack.c.l.b16 %v1137
    %v1438 = vunpack.c.h.b16 %v1137
    %v1439 = vunpack.c.l.b16 %v1138
    %v1440 = vunpack.c.h.b16 %v1138
    %v1441 = vunpack.c.l.b16 %v1139
    %v1442 = vunpack.c.h.b16 %v1139
    %v1443 = vunpack.c.l.b16 %v1140
    %v1444 = vunpack.c.h.b16 %v1140
    %v1445 = vunpack.c.l.b16 %v1141
    %v1446 = vunpack.c.h.b16 %v1141
    %v1447 = vunpack.c.l.b16 %v1142
    %v1448 = vunpack.c.h.b16 %v1142
    %v1449 = vunpack.c.l.b16 %v1143
    %v1450 = vunpack.c.h.b16 %v1143
    %v1451 = vunpack.c.l.b16 %v1144
    %v1452 = vunpack.c.h.b16 %v1144
    %v1453 = vunpack.c.l.b16 %v1145
    %v1454 = vunpack.c.h.b16 %v1145
    %v1455 = vunpack.c.l.b16 %v1146
    %v1456 = vunpack.c.h.b16 %v1146
    %v1457 = vunpack.c.l.b16 %v1147
    %v1458 = vunpack.c.h.b16 %v1147
    %v1459 = vunpack.c.l.b16 %v1148
    %v1460 = vunpack.c.h.b16 %v1148
    %v1461 = vunpack.c.l.b16 %v1149
    %v1462 = vunpack.c.h.b16 %v1149
    %v1463 = vunpack.c.l.b16 %v1150
    %v1464 = vunpack.c.h.b16 %v1150
    %v1465 = vunpack.c.l.b16 %v1151
    %v1466 = vunpack.c.h.b16 %v1151
    %v1467 = vunpack.c.l.b16 %v1152
    %v1468 = vunpack.c.h.b16 %v1152
    %v1469 = vunpack.c.l.b16 %v1153
    %v1470 = vunpack.c.h.b16 %v1153
    %v1471 = vunpack.c.l.b16 %v1154
    %v1472 = vunpack.c.h.b16 %v1154
    %v1473 = vpack.c.b16 %v1283, %v1281
    %v1474 = vpack.c.b16 %v1284, %v1282
    %v1475 = vpack.c.b16 %v1287, %v1285
    %v1476 = vpack.c.b16 %v1288, %v1286
    %v1477 = vpack.c.b16 %v1291, %v1289
    %v1478 = vpack.c.b16 %v1292, %v1290
    %v1479 = vpack.c.b16 %v1295, %v1293
    %v1480 = vpack.c.b16 %v1296, %v1294
    %v1481 = vpack.c.b16 %v1299, %v1297
    %v1482 = vpack.c.b16 %v1300, %v1298
    %v1483 = vpack.c.b16 %v1303, %v1301
    %v1484 = vpack.c.b16 %v1304, %v1302
    %v1485 = vpack.c.b16 %v1307, %v1305
    %v1486 = vpack.c.b16 %v1308, %v1306
    %v1487 = vpack.c.b16 %v1311, %v1309
    %v1488 = vpack.c.b16 %v1312, %v1310
    %v1489 = vpack.c.b16 %v1315, %v1313
    %v1490 = vpack.c.b16 %v1316, %v1314
    %v1491 = vpack.c.b16 %v1319, %v1317
    %v1492 = vpack.c.b16 %v1320, %v1318
    %v1493 = vpack.c.b16 %v1323, %v1321
    %v1494 = vpack.c.b16 %v1324, %v1322
    %v1495 = vpack.c.b16 %v1327, %v1325
    %v1496 = vpack.c.b16 %v1328, %v1326
    %v1497 = vpack.c.b16 %v1331, %v1329
    %v1498 = vpack.c.b16 %v1332, %v1330
    %v1499 = vpack.c.b16 %v1335, %v1333
    %v1500 = vpack.c.b16 %v1336, %v1334
    %v1501 = vpack.c.b16 %v1339, %v1337
    %v1502 = vpack.c.b16 %v1340, %v1338
    %v1503 = vpack.c.b16 %v1343, %v1341
    %v1504 = vpack.c.b16 %v1344, %v1342
    %v1505 = vpack.c.b16 %v1347, %v1345
    %v1506 = vpack.c.b16 %v1348, %v1346
    %v1507 = vpack.c.b16 %v1351, %v1349
    %v1508 = vpack.c.b16 %v1352, %v1350
    %v1509 = vpack.c.b16 %v1355, %v1353
    %v1510 = vpack.c.b16 %v1356, %v1354
    %v1511 = vpack.c.b16 %v1359, %v1357
    %v1512 = vpack.c.b16 %v1360, %v1358
    %v1513 = vpack.c.b16 %v1363, %v1361
    %v1514 = vpack.c.b16 %v1364, %v1362
    %v1515 = vpack.c.b16 %v1367, %v1365
    %v1516 = vpack.c.b16 %v1368, %v1366
    %v1517 = vpack.c.b16 %v1371, %v1369
    %v1518 = vpack.c.b16 %v1372, %v1370
    %v1519 = vpack.c.b16 %v1375, %v1373
    %v1520 = vpack.c.b16 %v1376, %v1374
    %v1521 = vpack.c.b16 %v1379, %v1377
    %v1522 = vpack.c.b16 %v1380, %v1378
    %v1523 = vpack.c.b16 %v1383, %v1381
    %v1524 = vpack.c.b16 %v1384, %v1382
    %v1525 = vpack.c.b16 %v1387, %v1385
    %v1526 = vpack.c.b16 %v1388, %v1386
    %v1527 = vpack.c.b16 %v1391, %v1389
    %v1528 = vpack.c.b16 %v1392, %v1390
    %v1529 = vpack.c.b16 %v1395, %v1393
    %v1530 = vpack.c.b16 %v1396, %v1394
    %v1531 = vpack.c.b16 %v1399, %v1397
    %v1532 = vpack.c.b16 %v1400, %v1398
    %v1533 = vpack.c.b16 %v1403, %v1401
    %v1534 = vpack.c.b16 %v1404, %v1402
    %v1535 = vpack.c.b16 %v1407, %v1405
    %v1536 = vpack.c.b16 %v1408, %v1406
    %v1537 = vpack.c.b16 %v1411, %v1409
    %v1538 = vpack.c.b16 %v1412, %v1410
    %v1539 = vpack.c.b16 %v1415, %v1413
    %v1540 = vpack.c.b16 %v1416, %v1414
    %v1541 = vpack.c.b16 %v1419, %v1417
    %v1542 = vpack.c.b16 %v1420, %v1418
    %v1543 = vpack.c.b16 %v1423, %v1421
    %v1544 = vpack.c.b16 %v1424, %v1422
    %v1545 = vpack.c.b16 %v1427, %v1425
    %v1546 = vpack.c.b16 %v1428, %v1426
    %v1547 = vpack.c.b16 %v1431, %v1429
    %v1548 = vpack.c.b16 %v1432, %v1430
    %v1549 = vpack.c.b16 %v1435, %v1433
    %v1550 = vpack.c.b16 %v1436, %v1434
    %v1551 = vpack.c.b16 %v1439, %v1437
    %v1552 = vpack.c.b16 %v1440, %v1438
    %v1553 = vpack.c.b16 %v1443, %v1441
    %v1554 = vpack.c.b16 %v1444, %v1442
    %v1555 = vpack.c.b16 %v1447, %v1445
    %v1556 = vpack.c.b16 %v1448, %v1446
    %v1557 = vpack.c.b16 %v1451, %v1449
    %v1558 = vpack.c.b16 %v1452, %v1450
    %v1559 = vpack.c.b16 %v1455, %v1453
    %v1560 = vpack.c.b16 %v1456, %v1454
    %v1561 = vpack.c.b16 %v1459, %v1457
    %v1562 = vpack.c.b16 %v1460, %v1458
    %v1563 = vpack.c.b16 %v1463, %v1461
    %v1564 = vpack.c.b16 %v1464, %v1462
    %v1565 = vpack.c.b16 %v1467, %v1465
    %v1566 = vpack.c.b16 %v1468, %v1466
    %v1567 = vpack.c.b16 %v1471, %v1469
    %v1568 = vpack.c.b16 %v1472, %v1470
    %1665 = vmatprep.subr.bf16.mxu0 %v1488
    %1666 = vmatpush1.bf16.msra.mxu0 %v1487
    %1667 = vmatprep.subr.bf16.mxu0 %v1486
    %1668 = vmatpush1.bf16.msra.mxu0 %v1485
    %1669 = vmatprep.subr.bf16.mxu0 %v1484
    %1670 = vmatpush1.bf16.msra.mxu0 %v1483
    %1671 = vmatprep.subr.bf16.mxu0 %v1482
    %1672 = vmatpush1.bf16.msra.mxu0 %v1481
    %1673 = vmatprep.subr.bf16.mxu0 %v1480
    %1674 = vmatpush1.bf16.msra.mxu0 %v1479
    %1675 = vmatprep.subr.bf16.mxu0 %v1478
    %1676 = vmatpush1.bf16.msra.mxu0 %v1477
    %1677 = vmatprep.subr.bf16.mxu0 %v1476
    %1678 = vmatpush1.bf16.msra.mxu0 %v1475
    %1679 = vmatprep.subr.bf16.mxu0 %v1474
    %1680 = vmatpush1.bf16.msra.mxu0 %v1473
    %1681 = vmatprep.subr.bf16.mxu0 %v1504
    %1682 = vmatpush2.bf16.msra.mxu0 %v1503
    %1683 = vmatprep.subr.bf16.mxu0 %v1502
    %1684 = vmatpush2.bf16.msra.mxu0 %v1501
    %1685 = vmatprep.subr.bf16.mxu0 %v1500
    %1686 = vmatpush2.bf16.msra.mxu0 %v1499
    %1687 = vmatprep.subr.bf16.mxu0 %v1498
    %1688 = vmatpush2.bf16.msra.mxu0 %v1497
    %1689 = vmatprep.subr.bf16.mxu0 %v1496
    %1690 = vmatpush2.bf16.msra.mxu0 %v1495
    %1691 = vmatprep.subr.bf16.mxu0 %v1494
    %1692 = vmatpush2.bf16.msra.mxu0 %v1493
    %1693 = vmatprep.subr.bf16.mxu0 %v1492
    %1694 = vmatpush2.bf16.msra.mxu0 %v1491
    %1695 = vmatprep.subr.bf16.mxu0 %v1490
    %1696 = vmatpush2.bf16.msra.mxu0 %v1489
    %1697 = vmatprep.mubr.bf16.mxu0 %v1169
    %1698 = vmatmul.mubr.bf16.gmra.mxu0 %v1168
    %v1699 = vpop.f32.mrf.mxu0
    %v1700 = vadd.f32 %v1178, %v1699
    %v1701 = vpop.f32.mrf.mxu0
    %v1702 = vadd.f32 %v1182, %v1701
    %v1703 = vpop.f32.mrf.mxu0
    %v1704 = vadd.f32 %v1178, %v1703
    %v1705 = vpop.f32.mrf.mxu0
    %v1706 = vadd.f32 %v1182, %v1705
    %1707 = vdwg.mxu0
    %1708 = vmatprep.subr.bf16.mxu0 %v1520
    %1709 = vmatpush1.bf16.msra.mxu0 %v1519
    %1710 = vmatprep.subr.bf16.mxu0 %v1518
    %1711 = vmatpush1.bf16.msra.mxu0 %v1517
    %1712 = vmatprep.subr.bf16.mxu0 %v1516
    %1713 = vmatpush1.bf16.msra.mxu0 %v1515
    %1714 = vmatprep.subr.bf16.mxu0 %v1514
    %1715 = vmatpush1.bf16.msra.mxu0 %v1513
    %1716 = vmatprep.subr.bf16.mxu0 %v1512
    %1717 = vmatpush1.bf16.msra.mxu0 %v1511
    %1718 = vmatprep.subr.bf16.mxu0 %v1510
    %1719 = vmatpush1.bf16.msra.mxu0 %v1509
    %1720 = vmatprep.subr.bf16.mxu0 %v1508
    %1721 = vmatpush1.bf16.msra.mxu0 %v1507
    %1722 = vmatprep.subr.bf16.mxu0 %v1506
    %1723 = vmatpush1.bf16.msra.mxu0 %v1505
    %1724 = vmatprep.subr.bf16.mxu0 %v1536
    %1725 = vmatpush2.bf16.msra.mxu0 %v1535
    %1726 = vmatprep.subr.bf16.mxu0 %v1534
    %1727 = vmatpush2.bf16.msra.mxu0 %v1533
    %1728 = vmatprep.subr.bf16.mxu0 %v1532
    %1729 = vmatpush2.bf16.msra.mxu0 %v1531
    %1730 = vmatprep.subr.bf16.mxu0 %v1530
    %1731 = vmatpush2.bf16.msra.mxu0 %v1529
    %1732 = vmatprep.subr.bf16.mxu0 %v1528
    %1733 = vmatpush2.bf16.msra.mxu0 %v1527
    %1734 = vmatprep.subr.bf16.mxu0 %v1526
    %1735 = vmatpush2.bf16.msra.mxu0 %v1525
    %1736 = vmatprep.subr.bf16.mxu0 %v1524
    %1737 = vmatpush2.bf16.msra.mxu0 %v1523
    %1738 = vmatprep.subr.bf16.mxu0 %v1522
    %1739 = vmatpush2.bf16.msra.mxu0 %v1521
    %1740 = vmatprep.mubr.bf16.mxu0 %v1171
    %1741 = vmatmul.mubr.bf16.gmra.mxu0 %v1170
    %v1742 = vpop.f32.mrf.mxu0
    %v1743 = vadd.f32 %v1700, %v1742
    %v1744 = vpop.f32.mrf.mxu0
    %v1745 = vadd.f32 %v1702, %v1744
    %v1746 = vpop.f32.mrf.mxu0
    %v1747 = vadd.f32 %v1704, %v1746
    %v1748 = vpop.f32.mrf.mxu0
    %v1749 = vadd.f32 %v1706, %v1748
    %1750 = vdwg.mxu0
    %1751 = vmatprep.subr.bf16.mxu0 %v1552
    %1752 = vmatpush1.bf16.msra.mxu0 %v1551
    %1753 = vmatprep.subr.bf16.mxu0 %v1550
    %1754 = vmatpush1.bf16.msra.mxu0 %v1549
    %1755 = vmatprep.subr.bf16.mxu0 %v1548
    %1756 = vmatpush1.bf16.msra.mxu0 %v1547
    %1757 = vmatprep.subr.bf16.mxu0 %v1546
    %1758 = vmatpush1.bf16.msra.mxu0 %v1545
    %1759 = vmatprep.subr.bf16.mxu0 %v1544
    %1760 = vmatpush1.bf16.msra.mxu0 %v1543
    %1761 = vmatprep.subr.bf16.mxu0 %v1542
    %1762 = vmatpush1.bf16.msra.mxu0 %v1541
    %1763 = vmatprep.subr.bf16.mxu0 %v1540
    %1764 = vmatpush1.bf16.msra.mxu0 %v1539
    %1765 = vmatprep.subr.bf16.mxu0 %v1538
    %1766 = vmatpush1.bf16.msra.mxu0 %v1537
    %1767 = vmatprep.subr.bf16.mxu0 %v1568
    %1768 = vmatpush2.bf16.msra.mxu0 %v1567
    %1769 = vmatprep.subr.bf16.mxu0 %v1566
    %1770 = vmatpush2.bf16.msra.mxu0 %v1565
    %1771 = vmatprep.subr.bf16.mxu0 %v1564
    %1772 = vmatpush2.bf16.msra.mxu0 %v1563
    %1773 = vmatprep.subr.bf16.mxu0 %v1562
    %1774 = vmatpush2.bf16.msra.mxu0 %v1561
    %1775 = vmatprep.subr.bf16.mxu0 %v1560
    %1776 = vmatpush2.bf16.msra.mxu0 %v1559
    %1777 = vmatprep.subr.bf16.mxu0 %v1558
    %1778 = vmatpush2.bf16.msra.mxu0 %v1557
    %1779 = vmatprep.subr.bf16.mxu0 %v1556
    %1780 = vmatpush2.bf16.msra.mxu0 %v1555
    %1781 = vmatprep.subr.bf16.mxu0 %v1554
    %1782 = vmatpush2.bf16.msra.mxu0 %v1553
    %1783 = vmatprep.mubr.bf16.mxu0 %v1173
    %1784 = vmatmul.mubr.bf16.gmra.mxu0 %v1172
    %v1785 = vpop.f32.mrf.mxu0
    %v1786 = vadd.f32 %v1743, %v1785
    %v1787 = vpop.f32.mrf.mxu0
    %v1788 = vadd.f32 %v1745, %v1787
    %v1789 = vpop.f32.mrf.mxu0
    %v1790 = vadd.f32 %v1747, %v1789
    %v1791 = vpop.f32.mrf.mxu0
    %v1792 = vadd.f32 %v1749, %v1791
    %1793 = vdwg.mxu0
    %v1794 = vmul.f32 %v1786, 0.5
    %v1795 = vmul.f32 %v1788, 0.5
    %v1796 = vmul.f32 %v1790, 0.5
    %v1797 = vmul.f32 %v1792, 0.5
    %v1798 = vmul.f32 %v1786, 0.70710677
    %v1799 = vmul.f32 %v1788, 0.70710677
    %v1800 = vmul.f32 %v1790, 0.70710677
    %v1801 = vmul.f32 %v1792, 0.70710677
    %v1802 = vand.u32 2147483647, %v1798
    %v1803 = vand.u32 2147483647, %v1799
    %v1804 = vand.u32 2147483647, %v1800
    %v1805 = vand.u32 2147483647, %v1801
    %v1806 = vmul.f32 %v1802, 0.5
    %v1807 = vmul.f32 %v1803, 0.5
    %v1808 = vmul.f32 %v1804, 0.5
    %v1809 = vmul.f32 %v1805, 0.5
    %v1810 = vadd.f32 %v1806, 1.0
    %v1811 = vadd.f32 %v1807, 1.0
    %v1812 = vadd.f32 %v1808, 1.0
    %v1813 = vadd.f32 %v1809, 1.0
    %v1814 = vrcp.pop %v1810
    %v1815 = vrcp.pop %v1811
    %v1816 = vrcp.pop %v1812
    %v1817 = vrcp.pop %v1813
    %v1818 = vmul.f32 %v1814, 0.17087276
    %v1819 = vmul.f32 %v1815, 0.17087276
    %v1820 = vmul.f32 %v1816, 0.17087276
    %v1821 = vmul.f32 %v1817, 0.17087276
    %v1822 = vadd.f32 %v1818, -0.82215226
    %v1823 = vadd.f32 %v1819, -0.82215226
    %v1824 = vadd.f32 %v1820, -0.82215226
    %v1825 = vadd.f32 %v1821, -0.82215226
    %v1826 = vmul.f32 %v1814, %v1822
    %v1827 = vmul.f32 %v1815, %v1823
    %v1828 = vmul.f32 %v1816, %v1824
    %v1829 = vmul.f32 %v1817, %v1825
    %v1830 = vadd.f32 %v1826, 1.4885159
    %v1831 = vadd.f32 %v1827, 1.4885159
    %v1832 = vadd.f32 %v1828, 1.4885159
    %v1833 = vadd.f32 %v1829, 1.4885159
    %v1834 = vmul.f32 %v1814, %v1830
    %v1835 = vmul.f32 %v1815, %v1831
    %v1836 = vmul.f32 %v1816, %v1832
    %v1837 = vmul.f32 %v1817, %v1833
    %v1838 = vadd.f32 %v1834, -1.135204
    %v1839 = vadd.f32 %v1835, -1.135204
    %v1840 = vadd.f32 %v1836, -1.135204
    %v1841 = vadd.f32 %v1837, -1.135204
    %v1842 = vmul.f32 %v1814, %v1838
    %v1843 = vmul.f32 %v1815, %v1839
    %v1844 = vmul.f32 %v1816, %v1840
    %v1845 = vmul.f32 %v1817, %v1841
    %v1846 = vadd.f32 %v1842, 0.27886808
    %v1847 = vadd.f32 %v1843, 0.27886808
    %v1848 = vadd.f32 %v1844, 0.27886808
    %v1849 = vadd.f32 %v1845, 0.27886808
    %v1850 = vmul.f32 %v1814, %v1846
    %v1851 = vmul.f32 %v1815, %v1847
    %v1852 = vmul.f32 %v1816, %v1848
    %v1853 = vmul.f32 %v1817, %v1849
    %v1854 = vadd.f32 %v1850, -0.18628806
    %v1855 = vadd.f32 %v1851, -0.18628806
    %v1856 = vadd.f32 %v1852, -0.18628806
    %v1857 = vadd.f32 %v1853, -0.18628806
    %v1858 = vmul.f32 %v1814, %v1854
    %v1859 = vmul.f32 %v1815, %v1855
    %v1860 = vmul.f32 %v1816, %v1856
    %v1861 = vmul.f32 %v1817, %v1857
    %v1862 = vadd.f32 %v1858, 0.09678418
    %v1863 = vadd.f32 %v1859, 0.09678418
    %v1864 = vadd.f32 %v1860, 0.09678418
    %v1865 = vadd.f32 %v1861, 0.09678418
    %v1866 = vmul.f32 %v1814, %v1862
    %v1867 = vmul.f32 %v1815, %v1863
    %v1868 = vmul.f32 %v1816, %v1864
    %v1869 = vmul.f32 %v1817, %v1865
    %v1870 = vadd.f32 %v1866, 0.37409195
    %v1871 = vadd.f32 %v1867, 0.37409195
    %v1872 = vadd.f32 %v1868, 0.37409195
    %v1873 = vadd.f32 %v1869, 0.37409195
    %v1874 = vmul.f32 %v1814, %v1870
    %v1875 = vmul.f32 %v1815, %v1871
    %v1876 = vmul.f32 %v1816, %v1872
    %v1877 = vmul.f32 %v1817, %v1873
    %v1878 = vadd.f32 %v1874, 1.0000237
    %v1879 = vadd.f32 %v1875, 1.0000237
    %v1880 = vadd.f32 %v1876, 1.0000237
    %v1881 = vadd.f32 %v1877, 1.0000237
    %v1882 = vmul.f32 %v1814, %v1878
    %v1883 = vmul.f32 %v1815, %v1879
    %v1884 = vmul.f32 %v1816, %v1880
    %v1885 = vmul.f32 %v1817, %v1881
    %v1886 = vadd.f32 %v1882, -1.2655122
    %v1887 = vadd.f32 %v1883, -1.2655122
    %v1888 = vadd.f32 %v1884, -1.2655122
    %v1889 = vadd.f32 %v1885, -1.2655122
    %v1890 = vsub.f32 0.0, %v1802
    %v1891 = vsub.f32 0.0, %v1803
    %v1892 = vsub.f32 0.0, %v1804
    %v1893 = vsub.f32 0.0, %v1805
    %v1894 = vmul.f32 %v1890, %v1802
    %v1895 = vmul.f32 %v1891, %v1803
    %v1896 = vmul.f32 %v1892, %v1804
    %v1897 = vmul.f32 %v1893, %v1805
    %v1898 = vadd.f32 %v1894, %v1886
    %v1899 = vadd.f32 %v1895, %v1887
    %v1900 = vadd.f32 %v1896, %v1888
    %v1901 = vadd.f32 %v1897, %v1889
    %v1902 = vmul.f32 %v1898, 1.442695
    %v1903 = vpow.pop %v1902
    %v1904 = vmul.f32 %v1899, 1.442695
    %v1905 = vpow.pop %v1904
    %v1906 = vmul.f32 %v1900, 1.442695
    %v1907 = vpow.pop %v1906
    %v1908 = vmul.f32 %v1901, 1.442695
    %v1909 = vpow.pop %v1908
    %v1910 = vmul.f32 %v1814, %v1903
    %v1911 = vmul.f32 %v1815, %v1905
    %v1912 = vmul.f32 %v1816, %v1907
    %v1913 = vmul.f32 %v1817, %v1909
    %vm1914 = vcmp.ge.f32.partialorder %v1798, 0.0
    %vm1915 = vcmp.ge.f32.partialorder %v1799, 0.0
    %vm1916 = vcmp.ge.f32.partialorder %v1800, 0.0
    %vm1917 = vcmp.ge.f32.partialorder %v1801, 0.0
    %v1918 = vsub.f32 1.0, %v1910
    %v1919 = vsub.f32 1.0, %v1911
    %v1920 = vsub.f32 1.0, %v1912
    %v1921 = vsub.f32 1.0, %v1913
    %v1922 = vsub.f32 %v1910, 1.0
    %v1923 = vsub.f32 %v1911, 1.0
    %v1924 = vsub.f32 %v1912, 1.0
    %v1925 = vsub.f32 %v1913, 1.0
    %v1926 = vsel %vm1914, %v1918, %v1922
    %v1927 = vsel %vm1915, %v1919, %v1923
    %v1928 = vsel %vm1916, %v1920, %v1924
    %v1929 = vsel %vm1917, %v1921, %v1925
    %v1930 = vadd.f32 %v1926, 1.0
    %v1931 = vadd.f32 %v1927, 1.0
    %v1932 = vadd.f32 %v1928, 1.0
    %v1933 = vadd.f32 %v1929, 1.0
    %v1934 = vmul.f32 %v1794, %v1930
    %v1935 = vmul.f32 %v1795, %v1931
    %v1936 = vmul.f32 %v1796, %v1932
    %v1937 = vmul.f32 %v1797, %v1933
    %v1938 = vpack.c.bf16 %v1936, %v1934
    %v1939 = vpack.c.bf16 %v1937, %v1935
    %v1942 = vunpack.c.l.b16 %v1938
    %v1943 = vunpack.c.l.b16 %v1939
    %v1944 = vunpack.c.h.b16 %v1938
    %v1945 = vunpack.c.h.b16 %v1939
    %v1946 = vpack.c.b16 %v1943, %v1942
    %v1947 = vpack.c.b16 %v1945, %v1944
    %1950 = vst [vmem:[#allocation2 + $0x10] sm:$0xff] %v1946
    %1951 = vst [vmem:[#allocation2 + $0x18] sm:$0xff] %v1947
    %v1952 = vld [vmem:[#allocation7] sm:$0xff]
    %v1953 = vld [vmem:[#allocation7 + $0x8] sm:$0xff]
    %v1954 = vld [vmem:[#allocation7 + $0x10] sm:$0xff]
    %v1955 = vld [vmem:[#allocation7 + $0x18] sm:$0xff]
    %v1956 = vld [vmem:[#allocation7 + $0x20] sm:$0xff]
    %v1957 = vld [vmem:[#allocation7 + $0x28] sm:$0xff]
    %v1958 = vld [vmem:[#allocation7 + $0x30] sm:$0xff]
    %v1959 = vld [vmem:[#allocation7 + $0x38] sm:$0xff]
    %v1960 = vld [vmem:[#allocation7 + $0x40] sm:$0xff]
    %v1961 = vld [vmem:[#allocation7 + $0x48] sm:$0xff]
    %v1962 = vld [vmem:[#allocation7 + $0x50] sm:$0xff]
    %v1963 = vld [vmem:[#allocation7 + $0x58] sm:$0xff]
    %v1964 = vpack.c.bf16 %v1958, %v1952
    %v1965 = vpack.c.bf16 %v1959, %v1953
    %v1966 = vpack.c.bf16 %v1960, %v1954
    %v1967 = vpack.c.bf16 %v1961, %v1955
    %v1968 = vpack.c.bf16 %v1962, %v1956
    %v1969 = vpack.c.bf16 %v1963, %v1957
    %1970 = vmatprep.subr.bf16.mxu0 %v1488
    %1971 = vmatpush1.bf16.msra.mxu0 %v1487
    %1972 = vmatprep.subr.bf16.mxu0 %v1486
    %1973 = vmatpush1.bf16.msra.mxu0 %v1485
    %1974 = vmatprep.subr.bf16.mxu0 %v1484
    %1975 = vmatpush1.bf16.msra.mxu0 %v1483
    %1976 = vmatprep.subr.bf16.mxu0 %v1482
    %1977 = vmatpush1.bf16.msra.mxu0 %v1481
    %1978 = vmatprep.subr.bf16.mxu0 %v1480
    %1979 = vmatpush1.bf16.msra.mxu0 %v1479
    %1980 = vmatprep.subr.bf16.mxu0 %v1478
    %1981 = vmatpush1.bf16.msra.mxu0 %v1477
    %1982 = vmatprep.subr.bf16.mxu0 %v1476
    %1983 = vmatpush1.bf16.msra.mxu0 %v1475
    %1984 = vmatprep.subr.bf16.mxu0 %v1474
    %1985 = vmatpush1.bf16.msra.mxu0 %v1473
    %1986 = vmatprep.subr.bf16.mxu0 %v1504
    %1987 = vmatpush2.bf16.msra.mxu0 %v1503
    %1988 = vmatprep.subr.bf16.mxu0 %v1502
    %1989 = vmatpush2.bf16.msra.mxu0 %v1501
    %1990 = vmatprep.subr.bf16.mxu0 %v1500
    %1991 = vmatpush2.bf16.msra.mxu0 %v1499
    %1992 = vmatprep.subr.bf16.mxu0 %v1498
    %1993 = vmatpush2.bf16.msra.mxu0 %v1497
    %1994 = vmatprep.subr.bf16.mxu0 %v1496
    %1995 = vmatpush2.bf16.msra.mxu0 %v1495
    %1996 = vmatprep.subr.bf16.mxu0 %v1494
    %1997 = vmatpush2.bf16.msra.mxu0 %v1493
    %1998 = vmatprep.subr.bf16.mxu0 %v1492
    %1999 = vmatpush2.bf16.msra.mxu0 %v1491
    %2000 = vmatprep.subr.bf16.mxu0 %v1490
    %2001 = vmatpush2.bf16.msra.mxu0 %v1489
    %2002 = vmatprep.mubr.bf16.mxu0 %v1965
    %2003 = vmatmul.mubr.bf16.gmra.mxu0 %v1964
    %v2004 = vpop.f32.mrf.mxu0
    %v2005 = vadd.f32 %v1178, %v2004
    %v2006 = vpop.f32.mrf.mxu0
    %v2007 = vadd.f32 %v1182, %v2006
    %v2008 = vpop.f32.mrf.mxu0
    %v2009 = vadd.f32 %v1178, %v2008
    %v2010 = vpop.f32.mrf.mxu0
    %v2011 = vadd.f32 %v1182, %v2010
    %2012 = vdwg.mxu0
    %2013 = vmatprep.subr.bf16.mxu0 %v1520
    %2014 = vmatpush1.bf16.msra.mxu0 %v1519
    %2015 = vmatprep.subr.bf16.mxu0 %v1518
    %2016 = vmatpush1.bf16.msra.mxu0 %v1517
    %2017 = vmatprep.subr.bf16.mxu0 %v1516
    %2018 = vmatpush1.bf16.msra.mxu0 %v1515
    %2019 = vmatprep.subr.bf16.mxu0 %v1514
    %2020 = vmatpush1.bf16.msra.mxu0 %v1513
    %2021 = vmatprep.subr.bf16.mxu0 %v1512
    %2022 = vmatpush1.bf16.msra.mxu0 %v1511
    %2023 = vmatprep.subr.bf16.mxu0 %v1510
    %2024 = vmatpush1.bf16.msra.mxu0 %v1509
    %2025 = vmatprep.subr.bf16.mxu0 %v1508
    %2026 = vmatpush1.bf16.msra.mxu0 %v1507
    %2027 = vmatprep.subr.bf16.mxu0 %v1506
    %2028 = vmatpush1.bf16.msra.mxu0 %v1505
    %2029 = vmatprep.subr.bf16.mxu0 %v1536
    %2030 = vmatpush2.bf16.msra.mxu0 %v1535
    %2031 = vmatprep.subr.bf16.mxu0 %v1534
    %2032 = vmatpush2.bf16.msra.mxu0 %v1533
    %2033 = vmatprep.subr.bf16.mxu0 %v1532
    %2034 = vmatpush2.bf16.msra.mxu0 %v1531
    %2035 = vmatprep.subr.bf16.mxu0 %v1530
    %2036 = vmatpush2.bf16.msra.mxu0 %v1529
    %2037 = vmatprep.subr.bf16.mxu0 %v1528
    %2038 = vmatpush2.bf16.msra.mxu0 %v1527
    %2039 = vmatprep.subr.bf16.mxu0 %v1526
    %2040 = vmatpush2.bf16.msra.mxu0 %v1525
    %2041 = vmatprep.subr.bf16.mxu0 %v1524
    %2042 = vmatpush2.bf16.msra.mxu0 %v1523
    %2043 = vmatprep.subr.bf16.mxu0 %v1522
    %2044 = vmatpush2.bf16.msra.mxu0 %v1521
    %2045 = vmatprep.mubr.bf16.mxu0 %v1967
    %2046 = vmatmul.mubr.bf16.gmra.mxu0 %v1966
    %v2047 = vpop.f32.mrf.mxu0
    %v2048 = vadd.f32 %v2005, %v2047
    %v2049 = vpop.f32.mrf.mxu0
    %v2050 = vadd.f32 %v2007, %v2049
    %v2051 = vpop.f32.mrf.mxu0
    %v2052 = vadd.f32 %v2009, %v2051
    %v2053 = vpop.f32.mrf.mxu0
    %v2054 = vadd.f32 %v2011, %v2053
    %2055 = vdwg.mxu0
    %2056 = vmatprep.subr.bf16.mxu0 %v1552
    %2057 = vmatpush1.bf16.msra.mxu0 %v1551
    %2058 = vmatprep.subr.bf16.mxu0 %v1550
    %2059 = vmatpush1.bf16.msra.mxu0 %v1549
    %2060 = vmatprep.subr.bf16.mxu0 %v1548
    %2061 = vmatpush1.bf16.msra.mxu0 %v1547
    %2062 = vmatprep.subr.bf16.mxu0 %v1546
    %2063 = vmatpush1.bf16.msra.mxu0 %v1545
    %2064 = vmatprep.subr.bf16.mxu0 %v1544
    %2065 = vmatpush1.bf16.msra.mxu0 %v1543
    %2066 = vmatprep.subr.bf16.mxu0 %v1542
    %2067 = vmatpush1.bf16.msra.mxu0 %v1541
    %2068 = vmatprep.subr.bf16.mxu0 %v1540
    %2069 = vmatpush1.bf16.msra.mxu0 %v1539
    %2070 = vmatprep.subr.bf16.mxu0 %v1538
    %2071 = vmatpush1.bf16.msra.mxu0 %v1537
    %2072 = vmatprep.subr.bf16.mxu0 %v1568
    %2073 = vmatpush2.bf16.msra.mxu0 %v1567
    %2074 = vmatprep.subr.bf16.mxu0 %v1566
    %2075 = vmatpush2.bf16.msra.mxu0 %v1565
    %2076 = vmatprep.subr.bf16.mxu0 %v1564
    %2077 = vmatpush2.bf16.msra.mxu0 %v1563
    %2078 = vmatprep.subr.bf16.mxu0 %v1562
    %2079 = vmatpush2.bf16.msra.mxu0 %v1561
    %2080 = vmatprep.subr.bf16.mxu0 %v1560
    %2081 = vmatpush2.bf16.msra.mxu0 %v1559
    %2082 = vmatprep.subr.bf16.mxu0 %v1558
    %2083 = vmatpush2.bf16.msra.mxu0 %v1557
    %2084 = vmatprep.subr.bf16.mxu0 %v1556
    %2085 = vmatpush2.bf16.msra.mxu0 %v1555
    %2086 = vmatprep.subr.bf16.mxu0 %v1554
    %2087 = vmatpush2.bf16.msra.mxu0 %v1553
    %2088 = vmatprep.mubr.bf16.mxu0 %v1969
    %2089 = vmatmul.mubr.bf16.gmra.mxu0 %v1968
    %v2090 = vpop.f32.mrf.mxu0
    %v2091 = vadd.f32 %v2048, %v2090
    %v2092 = vpop.f32.mrf.mxu0
    %v2093 = vadd.f32 %v2050, %v2092
    %v2094 = vpop.f32.mrf.mxu0
    %v2095 = vadd.f32 %v2052, %v2094
    %v2096 = vpop.f32.mrf.mxu0
    %v2097 = vadd.f32 %v2054, %v2096
    %2098 = vdwg.mxu0
    %v2099 = vmul.f32 %v2091, 0.5
    %v2100 = vmul.f32 %v2093, 0.5
    %v2101 = vmul.f32 %v2095, 0.5
    %v2102 = vmul.f32 %v2097, 0.5
    %v2103 = vmul.f32 %v2091, 0.70710677
    %v2104 = vmul.f32 %v2093, 0.70710677
    %v2105 = vmul.f32 %v2095, 0.70710677
    %v2106 = vmul.f32 %v2097, 0.70710677
    %v2107 = vand.u32 2147483647, %v2103
    %v2108 = vand.u32 2147483647, %v2104
    %v2109 = vand.u32 2147483647, %v2105
    %v2110 = vand.u32 2147483647, %v2106
    %v2111 = vmul.f32 %v2107, 0.5
    %v2112 = vmul.f32 %v2108, 0.5
    %v2113 = vmul.f32 %v2109, 0.5
    %v2114 = vmul.f32 %v2110, 0.5
    %v2115 = vadd.f32 %v2111, 1.0
    %v2116 = vadd.f32 %v2112, 1.0
    %v2117 = vadd.f32 %v2113, 1.0
    %v2118 = vadd.f32 %v2114, 1.0
    %v2119 = vrcp.pop %v2115
    %v2120 = vrcp.pop %v2116
    %v2121 = vrcp.pop %v2117
    %v2122 = vrcp.pop %v2118
    %v2123 = vmul.f32 %v2119, 0.17087276
    %v2124 = vmul.f32 %v2120, 0.17087276
    %v2125 = vmul.f32 %v2121, 0.17087276
    %v2126 = vmul.f32 %v2122, 0.17087276
    %v2127 = vadd.f32 %v2123, -0.82215226
    %v2128 = vadd.f32 %v2124, -0.82215226
    %v2129 = vadd.f32 %v2125, -0.82215226
    %v2130 = vadd.f32 %v2126, -0.82215226
    %v2131 = vmul.f32 %v2119, %v2127
    %v2132 = vmul.f32 %v2120, %v2128
    %v2133 = vmul.f32 %v2121, %v2129
    %v2134 = vmul.f32 %v2122, %v2130
    %v2135 = vadd.f32 %v2131, 1.4885159
    %v2136 = vadd.f32 %v2132, 1.4885159
    %v2137 = vadd.f32 %v2133, 1.4885159
    %v2138 = vadd.f32 %v2134, 1.4885159
    %v2139 = vmul.f32 %v2119, %v2135
    %v2140 = vmul.f32 %v2120, %v2136
    %v2141 = vmul.f32 %v2121, %v2137
    %v2142 = vmul.f32 %v2122, %v2138
    %v2143 = vadd.f32 %v2139, -1.135204
    %v2144 = vadd.f32 %v2140, -1.135204
    %v2145 = vadd.f32 %v2141, -1.135204
    %v2146 = vadd.f32 %v2142, -1.135204
    %v2147 = vmul.f32 %v2119, %v2143
    %v2148 = vmul.f32 %v2120, %v2144
    %v2149 = vmul.f32 %v2121, %v2145
    %v2150 = vmul.f32 %v2122, %v2146
    %v2151 = vadd.f32 %v2147, 0.27886808
    %v2152 = vadd.f32 %v2148, 0.27886808
    %v2153 = vadd.f32 %v2149, 0.27886808
    %v2154 = vadd.f32 %v2150, 0.27886808
    %v2155 = vmul.f32 %v2119, %v2151
    %v2156 = vmul.f32 %v2120, %v2152
    %v2157 = vmul.f32 %v2121, %v2153
    %v2158 = vmul.f32 %v2122, %v2154
    %v2159 = vadd.f32 %v2155, -0.18628806
    %v2160 = vadd.f32 %v2156, -0.18628806
    %v2161 = vadd.f32 %v2157, -0.18628806
    %v2162 = vadd.f32 %v2158, -0.18628806
    %v2163 = vmul.f32 %v2119, %v2159
    %v2164 = vmul.f32 %v2120, %v2160
    %v2165 = vmul.f32 %v2121, %v2161
    %v2166 = vmul.f32 %v2122, %v2162
    %v2167 = vadd.f32 %v2163, 0.09678418
    %v2168 = vadd.f32 %v2164, 0.09678418
    %v2169 = vadd.f32 %v2165, 0.09678418
    %v2170 = vadd.f32 %v2166, 0.09678418
    %v2171 = vmul.f32 %v2119, %v2167
    %v2172 = vmul.f32 %v2120, %v2168
    %v2173 = vmul.f32 %v2121, %v2169
    %v2174 = vmul.f32 %v2122, %v2170
    %v2175 = vadd.f32 %v2171, 0.37409195
    %v2176 = vadd.f32 %v2172, 0.37409195
    %v2177 = vadd.f32 %v2173, 0.37409195
    %v2178 = vadd.f32 %v2174, 0.37409195
    %v2179 = vmul.f32 %v2119, %v2175
    %v2180 = vmul.f32 %v2120, %v2176
    %v2181 = vmul.f32 %v2121, %v2177
    %v2182 = vmul.f32 %v2122, %v2178
    %v2183 = vadd.f32 %v2179, 1.0000237
    %v2184 = vadd.f32 %v2180, 1.0000237
    %v2185 = vadd.f32 %v2181, 1.0000237
    %v2186 = vadd.f32 %v2182, 1.0000237
    %v2187 = vmul.f32 %v2119, %v2183
    %v2188 = vmul.f32 %v2120, %v2184
    %v2189 = vmul.f32 %v2121, %v2185
    %v2190 = vmul.f32 %v2122, %v2186
    %v2191 = vadd.f32 %v2187, -1.2655122
    %v2192 = vadd.f32 %v2188, -1.2655122
    %v2193 = vadd.f32 %v2189, -1.2655122
    %v2194 = vadd.f32 %v2190, -1.2655122
    %v2195 = vsub.f32 0.0, %v2107
    %v2196 = vsub.f32 0.0, %v2108
    %v2197 = vsub.f32 0.0, %v2109
    %v2198 = vsub.f32 0.0, %v2110
    %v2199 = vmul.f32 %v2195, %v2107
    %v2200 = vmul.f32 %v2196, %v2108
    %v2201 = vmul.f32 %v2197, %v2109
    %v2202 = vmul.f32 %v2198, %v2110
    %v2203 = vadd.f32 %v2199, %v2191
    %v2204 = vadd.f32 %v2200, %v2192
    %v2205 = vadd.f32 %v2201, %v2193
    %v2206 = vadd.f32 %v2202, %v2194
    %v2207 = vmul.f32 %v2203, 1.442695
    %v2208 = vpow.pop %v2207
    %v2209 = vmul.f32 %v2204, 1.442695
    %v2210 = vpow.pop %v2209
    %v2211 = vmul.f32 %v2205, 1.442695
    %v2212 = vpow.pop %v2211
    %v2213 = vmul.f32 %v2206, 1.442695
    %v2214 = vpow.pop %v2213
    %v2215 = vmul.f32 %v2119, %v2208
    %v2216 = vmul.f32 %v2120, %v2210
    %v2217 = vmul.f32 %v2121, %v2212
    %v2218 = vmul.f32 %v2122, %v2214
    %vm2219 = vcmp.ge.f32.partialorder %v2103, 0.0
    %vm2220 = vcmp.ge.f32.partialorder %v2104, 0.0
    %vm2221 = vcmp.ge.f32.partialorder %v2105, 0.0
    %vm2222 = vcmp.ge.f32.partialorder %v2106, 0.0
    %v2223 = vsub.f32 1.0, %v2215
    %v2224 = vsub.f32 1.0, %v2216
    %v2225 = vsub.f32 1.0, %v2217
    %v2226 = vsub.f32 1.0, %v2218
    %v2227 = vsub.f32 %v2215, 1.0
    %v2228 = vsub.f32 %v2216, 1.0
    %v2229 = vsub.f32 %v2217, 1.0
    %v2230 = vsub.f32 %v2218, 1.0
    %v2231 = vsel %vm2219, %v2223, %v2227
    %v2232 = vsel %vm2220, %v2224, %v2228
    %v2233 = vsel %vm2221, %v2225, %v2229
    %v2234 = vsel %vm2222, %v2226, %v2230
    %v2235 = vadd.f32 %v2231, 1.0
    %v2236 = vadd.f32 %v2232, 1.0
    %v2237 = vadd.f32 %v2233, 1.0
    %v2238 = vadd.f32 %v2234, 1.0
    %v2239 = vmul.f32 %v2099, %v2235
    %v2240 = vmul.f32 %v2100, %v2236
    %v2241 = vmul.f32 %v2101, %v2237
    %v2242 = vmul.f32 %v2102, %v2238
    %v2243 = vpack.c.bf16 %v2241, %v2239
    %v2244 = vpack.c.bf16 %v2242, %v2240
    %v2247 = vunpack.c.l.b16 %v2243
    %v2248 = vunpack.c.l.b16 %v2244
    %v2249 = vunpack.c.h.b16 %v2243
    %v2250 = vunpack.c.h.b16 %v2244
    %v2251 = vpack.c.b16 %v2248, %v2247
    %v2252 = vpack.c.b16 %v2250, %v2249
    %2255 = vst [vmem:[#allocation2 + $0x20] sm:$0xff] %v2251
    %2256 = vst [vmem:[#allocation2 + $0x28] sm:$0xff] %v2252
    %v2257 = vld [vmem:[#allocation9] sm:$0xff]
    %v2258 = vld [vmem:[#allocation9 + $0x8] sm:$0xff]
    %v2259 = vld [vmem:[#allocation9 + $0x10] sm:$0xff]
    %v2260 = vld [vmem:[#allocation9 + $0x18] sm:$0xff]
    %v2261 = vld [vmem:[#allocation9 + $0x20] sm:$0xff]
    %v2262 = vld [vmem:[#allocation9 + $0x28] sm:$0xff]
    %v2263 = vld [vmem:[#allocation9 + $0x30] sm:$0xff]
    %v2264 = vld [vmem:[#allocation9 + $0x38] sm:$0xff]
    %v2265 = vld [vmem:[#allocation9 + $0x40] sm:$0xff]
    %v2266 = vld [vmem:[#allocation9 + $0x48] sm:$0xff]
    %v2267 = vld [vmem:[#allocation9 + $0x50] sm:$0xff]
    %v2268 = vld [vmem:[#allocation9 + $0x58] sm:$0xff]
    %v2269 = vpack.c.bf16 %v2263, %v2257
    %v2270 = vpack.c.bf16 %v2264, %v2258
    %v2271 = vpack.c.bf16 %v2265, %v2259
    %v2272 = vpack.c.bf16 %v2266, %v2260
    %v2273 = vpack.c.bf16 %v2267, %v2261
    %v2274 = vpack.c.bf16 %v2268, %v2262
    %2275 = vmatprep.subr.bf16.mxu0 %v1488
    %2276 = vmatpush1.bf16.msra.mxu0 %v1487
    %2277 = vmatprep.subr.bf16.mxu0 %v1486
    %2278 = vmatpush1.bf16.msra.mxu0 %v1485
    %2279 = vmatprep.subr.bf16.mxu0 %v1484
    %2280 = vmatpush1.bf16.msra.mxu0 %v1483
    %2281 = vmatprep.subr.bf16.mxu0 %v1482
    %2282 = vmatpush1.bf16.msra.mxu0 %v1481
    %2283 = vmatprep.subr.bf16.mxu0 %v1480
    %2284 = vmatpush1.bf16.msra.mxu0 %v1479
    %2285 = vmatprep.subr.bf16.mxu0 %v1478
    %2286 = vmatpush1.bf16.msra.mxu0 %v1477
    %2287 = vmatprep.subr.bf16.mxu0 %v1476
    %2288 = vmatpush1.bf16.msra.mxu0 %v1475
    %2289 = vmatprep.subr.bf16.mxu0 %v1474
    %2290 = vmatpush1.bf16.msra.mxu0 %v1473
    %2291 = vmatprep.subr.bf16.mxu0 %v1504
    %2292 = vmatpush2.bf16.msra.mxu0 %v1503
    %2293 = vmatprep.subr.bf16.mxu0 %v1502
    %2294 = vmatpush2.bf16.msra.mxu0 %v1501
    %2295 = vmatprep.subr.bf16.mxu0 %v1500
    %2296 = vmatpush2.bf16.msra.mxu0 %v1499
    %2297 = vmatprep.subr.bf16.mxu0 %v1498
    %2298 = vmatpush2.bf16.msra.mxu0 %v1497
    %2299 = vmatprep.subr.bf16.mxu0 %v1496
    %2300 = vmatpush2.bf16.msra.mxu0 %v1495
    %2301 = vmatprep.subr.bf16.mxu0 %v1494
    %2302 = vmatpush2.bf16.msra.mxu0 %v1493
    %2303 = vmatprep.subr.bf16.mxu0 %v1492
    %2304 = vmatpush2.bf16.msra.mxu0 %v1491
    %2305 = vmatprep.subr.bf16.mxu0 %v1490
    %2306 = vmatpush2.bf16.msra.mxu0 %v1489
    %2307 = vmatprep.mubr.bf16.mxu0 %v2270
    %2308 = vmatmul.mubr.bf16.gmra.mxu0 %v2269
    %v2309 = vpop.f32.mrf.mxu0
    %v2310 = vadd.f32 %v1178, %v2309
    %v2311 = vpop.f32.mrf.mxu0
    %v2312 = vadd.f32 %v1182, %v2311
    %v2313 = vpop.f32.mrf.mxu0
    %v2314 = vadd.f32 %v1178, %v2313
    %v2315 = vpop.f32.mrf.mxu0
    %v2316 = vadd.f32 %v1182, %v2315
    %2317 = vdwg.mxu0
    %2318 = vmatprep.subr.bf16.mxu0 %v1520
    %2319 = vmatpush1.bf16.msra.mxu0 %v1519
    %2320 = vmatprep.subr.bf16.mxu0 %v1518
    %2321 = vmatpush1.bf16.msra.mxu0 %v1517
    %2322 = vmatprep.subr.bf16.mxu0 %v1516
    %2323 = vmatpush1.bf16.msra.mxu0 %v1515
    %2324 = vmatprep.subr.bf16.mxu0 %v1514
    %2325 = vmatpush1.bf16.msra.mxu0 %v1513
    %2326 = vmatprep.subr.bf16.mxu0 %v1512
    %2327 = vmatpush1.bf16.msra.mxu0 %v1511
    %2328 = vmatprep.subr.bf16.mxu0 %v1510
    %2329 = vmatpush1.bf16.msra.mxu0 %v1509
    %2330 = vmatprep.subr.bf16.mxu0 %v1508
    %2331 = vmatpush1.bf16.msra.mxu0 %v1507
    %2332 = vmatprep.subr.bf16.mxu0 %v1506
    %2333 = vmatpush1.bf16.msra.mxu0 %v1505
    %2334 = vmatprep.subr.bf16.mxu0 %v1536
    %2335 = vmatpush2.bf16.msra.mxu0 %v1535
    %2336 = vmatprep.subr.bf16.mxu0 %v1534
    %2337 = vmatpush2.bf16.msra.mxu0 %v1533
    %2338 = vmatprep.subr.bf16.mxu0 %v1532
    %2339 = vmatpush2.bf16.msra.mxu0 %v1531
    %2340 = vmatprep.subr.bf16.mxu0 %v1530
    %2341 = vmatpush2.bf16.msra.mxu0 %v1529
    %2342 = vmatprep.subr.bf16.mxu0 %v1528
    %2343 = vmatpush2.bf16.msra.mxu0 %v1527
    %2344 = vmatprep.subr.bf16.mxu0 %v1526
    %2345 = vmatpush2.bf16.msra.mxu0 %v1525
    %2346 = vmatprep.subr.bf16.mxu0 %v1524
    %2347 = vmatpush2.bf16.msra.mxu0 %v1523
    %2348 = vmatprep.subr.bf16.mxu0 %v1522
    %2349 = vmatpush2.bf16.msra.mxu0 %v1521
    %2350 = vmatprep.mubr.bf16.mxu0 %v2272
    %2351 = vmatmul.mubr.bf16.gmra.mxu0 %v2271
    %v2352 = vpop.f32.mrf.mxu0
    %v2353 = vadd.f32 %v2310, %v2352
    %v2354 = vpop.f32.mrf.mxu0
    %v2355 = vadd.f32 %v2312, %v2354
    %v2356 = vpop.f32.mrf.mxu0
    %v2357 = vadd.f32 %v2314, %v2356
    %v2358 = vpop.f32.mrf.mxu0
    %v2359 = vadd.f32 %v2316, %v2358
    %2360 = vdwg.mxu0
    %2361 = vmatprep.subr.bf16.mxu0 %v1552
    %2362 = vmatpush1.bf16.msra.mxu0 %v1551
    %2363 = vmatprep.subr.bf16.mxu0 %v1550
    %2364 = vmatpush1.bf16.msra.mxu0 %v1549
    %2365 = vmatprep.subr.bf16.mxu0 %v1548
    %2366 = vmatpush1.bf16.msra.mxu0 %v1547
    %2367 = vmatprep.subr.bf16.mxu0 %v1546
    %2368 = vmatpush1.bf16.msra.mxu0 %v1545
    %2369 = vmatprep.subr.bf16.mxu0 %v1544
    %2370 = vmatpush1.bf16.msra.mxu0 %v1543
    %2371 = vmatprep.subr.bf16.mxu0 %v1542
    %2372 = vmatpush1.bf16.msra.mxu0 %v1541
    %2373 = vmatprep.subr.bf16.mxu0 %v1540
    %2374 = vmatpush1.bf16.msra.mxu0 %v1539
    %2375 = vmatprep.subr.bf16.mxu0 %v1538
    %2376 = vmatpush1.bf16.msra.mxu0 %v1537
    %2377 = vmatprep.subr.bf16.mxu0 %v1568
    %2378 = vmatpush2.bf16.msra.mxu0 %v1567
    %2379 = vmatprep.subr.bf16.mxu0 %v1566
    %2380 = vmatpush2.bf16.msra.mxu0 %v1565
    %2381 = vmatprep.subr.bf16.mxu0 %v1564
    %2382 = vmatpush2.bf16.msra.mxu0 %v1563
    %2383 = vmatprep.subr.bf16.mxu0 %v1562
    %2384 = vmatpush2.bf16.msra.mxu0 %v1561
    %2385 = vmatprep.subr.bf16.mxu0 %v1560
    %2386 = vmatpush2.bf16.msra.mxu0 %v1559
    %2387 = vmatprep.subr.bf16.mxu0 %v1558
    %2388 = vmatpush2.bf16.msra.mxu0 %v1557
    %2389 = vmatprep.subr.bf16.mxu0 %v1556
    %2390 = vmatpush2.bf16.msra.mxu0 %v1555
    %2391 = vmatprep.subr.bf16.mxu0 %v1554
    %2392 = vmatpush2.bf16.msra.mxu0 %v1553
    %2393 = vmatprep.mubr.bf16.mxu0 %v2274
    %2394 = vmatmul.mubr.bf16.gmra.mxu0 %v2273
    %v2395 = vpop.f32.mrf.mxu0
    %v2396 = vadd.f32 %v2353, %v2395
    %v2397 = vpop.f32.mrf.mxu0
    %v2398 = vadd.f32 %v2355, %v2397
    %v2399 = vpop.f32.mrf.mxu0
    %v2400 = vadd.f32 %v2357, %v2399
    %v2401 = vpop.f32.mrf.mxu0
    %v2402 = vadd.f32 %v2359, %v2401
    %2403 = vdwg.mxu0
    %v2404 = vmul.f32 %v2396, 0.5
    %v2405 = vmul.f32 %v2398, 0.5
    %v2406 = vmul.f32 %v2400, 0.5
    %v2407 = vmul.f32 %v2402, 0.5
    %v2408 = vmul.f32 %v2396, 0.70710677
    %v2409 = vmul.f32 %v2398, 0.70710677
    %v2410 = vmul.f32 %v2400, 0.70710677
    %v2411 = vmul.f32 %v2402, 0.70710677
    %v2412 = vand.u32 2147483647, %v2408
    %v2413 = vand.u32 2147483647, %v2409
    %v2414 = vand.u32 2147483647, %v2410
    %v2415 = vand.u32 2147483647, %v2411
    %v2416 = vmul.f32 %v2412, 0.5
    %v2417 = vmul.f32 %v2413, 0.5
    %v2418 = vmul.f32 %v2414, 0.5
    %v2419 = vmul.f32 %v2415, 0.5
    %v2420 = vadd.f32 %v2416, 1.0
    %v2421 = vadd.f32 %v2417, 1.0
    %v2422 = vadd.f32 %v2418, 1.0
    %v2423 = vadd.f32 %v2419, 1.0
    %v2424 = vrcp.pop %v2420
    %v2425 = vrcp.pop %v2421
    %v2426 = vrcp.pop %v2422
    %v2427 = vrcp.pop %v2423
    %v2428 = vmul.f32 %v2424, 0.17087276
    %v2429 = vmul.f32 %v2425, 0.17087276
    %v2430 = vmul.f32 %v2426, 0.17087276
    %v2431 = vmul.f32 %v2427, 0.17087276
    %v2432 = vadd.f32 %v2428, -0.82215226
    %v2433 = vadd.f32 %v2429, -0.82215226
    %v2434 = vadd.f32 %v2430, -0.82215226
    %v2435 = vadd.f32 %v2431, -0.82215226
    %v2436 = vmul.f32 %v2424, %v2432
    %v2437 = vmul.f32 %v2425, %v2433
    %v2438 = vmul.f32 %v2426, %v2434
    %v2439 = vmul.f32 %v2427, %v2435
    %v2440 = vadd.f32 %v2436, 1.4885159
    %v2441 = vadd.f32 %v2437, 1.4885159
    %v2442 = vadd.f32 %v2438, 1.4885159
    %v2443 = vadd.f32 %v2439, 1.4885159
    %v2444 = vmul.f32 %v2424, %v2440
    %v2445 = vmul.f32 %v2425, %v2441
    %v2446 = vmul.f32 %v2426, %v2442
    %v2447 = vmul.f32 %v2427, %v2443
    %v2448 = vadd.f32 %v2444, -1.135204
    %v2449 = vadd.f32 %v2445, -1.135204
    %v2450 = vadd.f32 %v2446, -1.135204
    %v2451 = vadd.f32 %v2447, -1.135204
    %v2452 = vmul.f32 %v2424, %v2448
    %v2453 = vmul.f32 %v2425, %v2449
    %v2454 = vmul.f32 %v2426, %v2450
    %v2455 = vmul.f32 %v2427, %v2451
    %v2456 = vadd.f32 %v2452, 0.27886808
    %v2457 = vadd.f32 %v2453, 0.27886808
    %v2458 = vadd.f32 %v2454, 0.27886808
    %v2459 = vadd.f32 %v2455, 0.27886808
    %v2460 = vmul.f32 %v2424, %v2456
    %v2461 = vmul.f32 %v2425, %v2457
    %v2462 = vmul.f32 %v2426, %v2458
    %v2463 = vmul.f32 %v2427, %v2459
    %v2464 = vadd.f32 %v2460, -0.18628806
    %v2465 = vadd.f32 %v2461, -0.18628806
    %v2466 = vadd.f32 %v2462, -0.18628806
    %v2467 = vadd.f32 %v2463, -0.18628806
    %v2468 = vmul.f32 %v2424, %v2464
    %v2469 = vmul.f32 %v2425, %v2465
    %v2470 = vmul.f32 %v2426, %v2466
    %v2471 = vmul.f32 %v2427, %v2467
    %v2472 = vadd.f32 %v2468, 0.09678418
    %v2473 = vadd.f32 %v2469, 0.09678418
    %v2474 = vadd.f32 %v2470, 0.09678418
    %v2475 = vadd.f32 %v2471, 0.09678418
    %v2476 = vmul.f32 %v2424, %v2472
    %v2477 = vmul.f32 %v2425, %v2473
    %v2478 = vmul.f32 %v2426, %v2474
    %v2479 = vmul.f32 %v2427, %v2475
    %v2480 = vadd.f32 %v2476, 0.37409195
    %v2481 = vadd.f32 %v2477, 0.37409195
    %v2482 = vadd.f32 %v2478, 0.37409195
    %v2483 = vadd.f32 %v2479, 0.37409195
    %v2484 = vmul.f32 %v2424, %v2480
    %v2485 = vmul.f32 %v2425, %v2481
    %v2486 = vmul.f32 %v2426, %v2482
    %v2487 = vmul.f32 %v2427, %v2483
    %v2488 = vadd.f32 %v2484, 1.0000237
    %v2489 = vadd.f32 %v2485, 1.0000237
    %v2490 = vadd.f32 %v2486, 1.0000237
    %v2491 = vadd.f32 %v2487, 1.0000237
    %v2492 = vmul.f32 %v2424, %v2488
    %v2493 = vmul.f32 %v2425, %v2489
    %v2494 = vmul.f32 %v2426, %v2490
    %v2495 = vmul.f32 %v2427, %v2491
    %v2496 = vadd.f32 %v2492, -1.2655122
    %v2497 = vadd.f32 %v2493, -1.2655122
    %v2498 = vadd.f32 %v2494, -1.2655122
    %v2499 = vadd.f32 %v2495, -1.2655122
    %v2500 = vsub.f32 0.0, %v2412
    %v2501 = vsub.f32 0.0, %v2413
    %v2502 = vsub.f32 0.0, %v2414
    %v2503 = vsub.f32 0.0, %v2415
    %v2504 = vmul.f32 %v2500, %v2412
    %v2505 = vmul.f32 %v2501, %v2413
    %v2506 = vmul.f32 %v2502, %v2414
    %v2507 = vmul.f32 %v2503, %v2415
    %v2508 = vadd.f32 %v2504, %v2496
    %v2509 = vadd.f32 %v2505, %v2497
    %v2510 = vadd.f32 %v2506, %v2498
    %v2511 = vadd.f32 %v2507, %v2499
    %v2512 = vmul.f32 %v2508, 1.442695
    %v2513 = vpow.pop %v2512
    %v2514 = vmul.f32 %v2509, 1.442695
    %v2515 = vpow.pop %v2514
    %v2516 = vmul.f32 %v2510, 1.442695
    %v2517 = vpow.pop %v2516
    %v2518 = vmul.f32 %v2511, 1.442695
    %v2519 = vpow.pop %v2518
    %v2520 = vmul.f32 %v2424, %v2513
    %v2521 = vmul.f32 %v2425, %v2515
    %v2522 = vmul.f32 %v2426, %v2517
    %v2523 = vmul.f32 %v2427, %v2519
    %vm2524 = vcmp.ge.f32.partialorder %v2408, 0.0
    %vm2525 = vcmp.ge.f32.partialorder %v2409, 0.0
    %vm2526 = vcmp.ge.f32.partialorder %v2410, 0.0
    %vm2527 = vcmp.ge.f32.partialorder %v2411, 0.0
    %v2528 = vsub.f32 1.0, %v2520
    %v2529 = vsub.f32 1.0, %v2521
    %v2530 = vsub.f32 1.0, %v2522
    %v2531 = vsub.f32 1.0, %v2523
    %v2532 = vsub.f32 %v2520, 1.0
    %v2533 = vsub.f32 %v2521, 1.0
    %v2534 = vsub.f32 %v2522, 1.0
    %v2535 = vsub.f32 %v2523, 1.0
    %v2536 = vsel %vm2524, %v2528, %v2532
    %v2537 = vsel %vm2525, %v2529, %v2533
    %v2538 = vsel %vm2526, %v2530, %v2534
    %v2539 = vsel %vm2527, %v2531, %v2535
    %v2540 = vadd.f32 %v2536, 1.0
    %v2541 = vadd.f32 %v2537, 1.0
    %v2542 = vadd.f32 %v2538, 1.0
    %v2543 = vadd.f32 %v2539, 1.0
    %v2544 = vmul.f32 %v2404, %v2540
    %v2545 = vmul.f32 %v2405, %v2541
    %v2546 = vmul.f32 %v2406, %v2542
    %v2547 = vmul.f32 %v2407, %v2543
    %v2548 = vpack.c.bf16 %v2546, %v2544
    %v2549 = vpack.c.bf16 %v2547, %v2545
    %v2552 = vunpack.c.l.b16 %v2548
    %v2553 = vunpack.c.l.b16 %v2549
    %v2554 = vunpack.c.h.b16 %v2548
    %v2555 = vunpack.c.h.b16 %v2549
    %v2556 = vpack.c.b16 %v2553, %v2552
    %v2557 = vpack.c.b16 %v2555, %v2554
    %2560 = vst [vmem:[#allocation2 + $0x30] sm:$0xff] %v2556
    %2561 = vst [vmem:[#allocation2 + $0x38] sm:$0xff] %v2557
    %v2562 = vld [vmem:[#allocation10] sm:$0xff]
    %v2563 = vld [vmem:[#allocation10 + $0x8] sm:$0xff]
    %v2564 = vld [vmem:[#allocation10 + $0x10] sm:$0xff]
    %v2565 = vld [vmem:[#allocation10 + $0x18] sm:$0xff]
    %v2566 = vld [vmem:[#allocation10 + $0x20] sm:$0xff]
    %v2567 = vld [vmem:[#allocation10 + $0x28] sm:$0xff]
    %v2568 = vld [vmem:[#allocation10 + $0x30] sm:$0xff]
    %v2569 = vld [vmem:[#allocation10 + $0x38] sm:$0xff]
    %v2570 = vld [vmem:[#allocation10 + $0x40] sm:$0xff]
    %v2571 = vld [vmem:[#allocation10 + $0x48] sm:$0xff]
    %v2572 = vld [vmem:[#allocation10 + $0x50] sm:$0xff]
    %v2573 = vld [vmem:[#allocation10 + $0x58] sm:$0xff]
    %v2574 = vpack.c.bf16 %v2568, %v2562
    %v2575 = vpack.c.bf16 %v2569, %v2563
    %v2576 = vpack.c.bf16 %v2570, %v2564
    %v2577 = vpack.c.bf16 %v2571, %v2565
    %v2578 = vpack.c.bf16 %v2572, %v2566
    %v2579 = vpack.c.bf16 %v2573, %v2567
    %2580 = vmatprep.subr.bf16.mxu0 %v1488
    %2581 = vmatpush1.bf16.msra.mxu0 %v1487
    %2582 = vmatprep.subr.bf16.mxu0 %v1486
    %2583 = vmatpush1.bf16.msra.mxu0 %v1485
    %2584 = vmatprep.subr.bf16.mxu0 %v1484
    %2585 = vmatpush1.bf16.msra.mxu0 %v1483
    %2586 = vmatprep.subr.bf16.mxu0 %v1482
    %2587 = vmatpush1.bf16.msra.mxu0 %v1481
    %2588 = vmatprep.subr.bf16.mxu0 %v1480
    %2589 = vmatpush1.bf16.msra.mxu0 %v1479
    %2590 = vmatprep.subr.bf16.mxu0 %v1478
    %2591 = vmatpush1.bf16.msra.mxu0 %v1477
    %2592 = vmatprep.subr.bf16.mxu0 %v1476
    %2593 = vmatpush1.bf16.msra.mxu0 %v1475
    %2594 = vmatprep.subr.bf16.mxu0 %v1474
    %2595 = vmatpush1.bf16.msra.mxu0 %v1473
    %2596 = vmatprep.subr.bf16.mxu0 %v1504
    %2597 = vmatpush2.bf16.msra.mxu0 %v1503
    %2598 = vmatprep.subr.bf16.mxu0 %v1502
    %2599 = vmatpush2.bf16.msra.mxu0 %v1501
    %2600 = vmatprep.subr.bf16.mxu0 %v1500
    %2601 = vmatpush2.bf16.msra.mxu0 %v1499
    %2602 = vmatprep.subr.bf16.mxu0 %v1498
    %2603 = vmatpush2.bf16.msra.mxu0 %v1497
    %2604 = vmatprep.subr.bf16.mxu0 %v1496
    %2605 = vmatpush2.bf16.msra.mxu0 %v1495
    %2606 = vmatprep.subr.bf16.mxu0 %v1494
    %2607 = vmatpush2.bf16.msra.mxu0 %v1493
    %2608 = vmatprep.subr.bf16.mxu0 %v1492
    %2609 = vmatpush2.bf16.msra.mxu0 %v1491
    %2610 = vmatprep.subr.bf16.mxu0 %v1490
    %2611 = vmatpush2.bf16.msra.mxu0 %v1489
    %2612 = vmatprep.mubr.bf16.mxu0 %v2575
    %2613 = vmatmul.mubr.bf16.gmra.mxu0 %v2574
    %v2614 = vpop.f32.mrf.mxu0
    %v2615 = vadd.f32 %v1178, %v2614
    %v2616 = vpop.f32.mrf.mxu0
    %v2617 = vadd.f32 %v1182, %v2616
    %v2618 = vpop.f32.mrf.mxu0
    %v2619 = vadd.f32 %v1178, %v2618
    %v2620 = vpop.f32.mrf.mxu0
    %v2621 = vadd.f32 %v1182, %v2620
    %2622 = vdwg.mxu0
    %2623 = vmatprep.subr.bf16.mxu0 %v1520
    %2624 = vmatpush1.bf16.msra.mxu0 %v1519
    %2625 = vmatprep.subr.bf16.mxu0 %v1518
    %2626 = vmatpush1.bf16.msra.mxu0 %v1517
    %2627 = vmatprep.subr.bf16.mxu0 %v1516
    %2628 = vmatpush1.bf16.msra.mxu0 %v1515
    %2629 = vmatprep.subr.bf16.mxu0 %v1514
    %2630 = vmatpush1.bf16.msra.mxu0 %v1513
    %2631 = vmatprep.subr.bf16.mxu0 %v1512
    %2632 = vmatpush1.bf16.msra.mxu0 %v1511
    %2633 = vmatprep.subr.bf16.mxu0 %v1510
    %2634 = vmatpush1.bf16.msra.mxu0 %v1509
    %2635 = vmatprep.subr.bf16.mxu0 %v1508
    %2636 = vmatpush1.bf16.msra.mxu0 %v1507
    %2637 = vmatprep.subr.bf16.mxu0 %v1506
    %2638 = vmatpush1.bf16.msra.mxu0 %v1505
    %2639 = vmatprep.subr.bf16.mxu0 %v1536
    %2640 = vmatpush2.bf16.msra.mxu0 %v1535
    %2641 = vmatprep.subr.bf16.mxu0 %v1534
    %2642 = vmatpush2.bf16.msra.mxu0 %v1533
    %2643 = vmatprep.subr.bf16.mxu0 %v1532
    %2644 = vmatpush2.bf16.msra.mxu0 %v1531
    %2645 = vmatprep.subr.bf16.mxu0 %v1530
    %2646 = vmatpush2.bf16.msra.mxu0 %v1529
    %2647 = vmatprep.subr.bf16.mxu0 %v1528
    %2648 = vmatpush2.bf16.msra.mxu0 %v1527
    %2649 = vmatprep.subr.bf16.mxu0 %v1526
    %2650 = vmatpush2.bf16.msra.mxu0 %v1525
    %2651 = vmatprep.subr.bf16.mxu0 %v1524
    %2652 = vmatpush2.bf16.msra.mxu0 %v1523
    %2653 = vmatprep.subr.bf16.mxu0 %v1522
    %2654 = vmatpush2.bf16.msra.mxu0 %v1521
    %2655 = vmatprep.mubr.bf16.mxu0 %v2577
    %2656 = vmatmul.mubr.bf16.gmra.mxu0 %v2576
    %v2657 = vpop.f32.mrf.mxu0
    %v2658 = vadd.f32 %v2615, %v2657
    %v2659 = vpop.f32.mrf.mxu0
    %v2660 = vadd.f32 %v2617, %v2659
    %v2661 = vpop.f32.mrf.mxu0
    %v2662 = vadd.f32 %v2619, %v2661
    %v2663 = vpop.f32.mrf.mxu0
    %v2664 = vadd.f32 %v2621, %v2663
    %2665 = vdwg.mxu0
    %2666 = vmatprep.subr.bf16.mxu0 %v1552
    %2667 = vmatpush1.bf16.msra.mxu0 %v1551
    %2668 = vmatprep.subr.bf16.mxu0 %v1550
    %2669 = vmatpush1.bf16.msra.mxu0 %v1549
    %2670 = vmatprep.subr.bf16.mxu0 %v1548
    %2671 = vmatpush1.bf16.msra.mxu0 %v1547
    %2672 = vmatprep.subr.bf16.mxu0 %v1546
    %2673 = vmatpush1.bf16.msra.mxu0 %v1545
    %2674 = vmatprep.subr.bf16.mxu0 %v1544
    %2675 = vmatpush1.bf16.msra.mxu0 %v1543
    %2676 = vmatprep.subr.bf16.mxu0 %v1542
    %2677 = vmatpush1.bf16.msra.mxu0 %v1541
    %2678 = vmatprep.subr.bf16.mxu0 %v1540
    %2679 = vmatpush1.bf16.msra.mxu0 %v1539
    %2680 = vmatprep.subr.bf16.mxu0 %v1538
    %2681 = vmatpush1.bf16.msra.mxu0 %v1537
    %2682 = vmatprep.subr.bf16.mxu0 %v1568
    %2683 = vmatpush2.bf16.msra.mxu0 %v1567
    %2684 = vmatprep.subr.bf16.mxu0 %v1566
    %2685 = vmatpush2.bf16.msra.mxu0 %v1565
    %2686 = vmatprep.subr.bf16.mxu0 %v1564
    %2687 = vmatpush2.bf16.msra.mxu0 %v1563
    %2688 = vmatprep.subr.bf16.mxu0 %v1562
    %2689 = vmatpush2.bf16.msra.mxu0 %v1561
    %2690 = vmatprep.subr.bf16.mxu0 %v1560
    %2691 = vmatpush2.bf16.msra.mxu0 %v1559
    %2692 = vmatprep.subr.bf16.mxu0 %v1558
    %2693 = vmatpush2.bf16.msra.mxu0 %v1557
    %2694 = vmatprep.subr.bf16.mxu0 %v1556
    %2695 = vmatpush2.bf16.msra.mxu0 %v1555
    %2696 = vmatprep.subr.bf16.mxu0 %v1554
    %2697 = vmatpush2.bf16.msra.mxu0 %v1553
    %2698 = vmatprep.mubr.bf16.mxu0 %v2579
    %2699 = vmatmul.mubr.bf16.gmra.mxu0 %v2578
    %v2700 = vpop.f32.mrf.mxu0
    %v2701 = vadd.f32 %v2658, %v2700
    %v2702 = vpop.f32.mrf.mxu0
    %v2703 = vadd.f32 %v2660, %v2702
    %v2704 = vpop.f32.mrf.mxu0
    %v2705 = vadd.f32 %v2662, %v2704
    %v2706 = vpop.f32.mrf.mxu0
    %v2707 = vadd.f32 %v2664, %v2706
    %2708 = vdwg.mxu0
    %v2709 = vmul.f32 %v2701, 0.5
    %v2710 = vmul.f32 %v2703, 0.5
    %v2711 = vmul.f32 %v2705, 0.5
    %v2712 = vmul.f32 %v2707, 0.5
    %v2713 = vmul.f32 %v2701, 0.70710677
    %v2714 = vmul.f32 %v2703, 0.70710677
    %v2715 = vmul.f32 %v2705, 0.70710677
    %v2716 = vmul.f32 %v2707, 0.70710677
    %v2717 = vand.u32 2147483647, %v2713
    %v2718 = vand.u32 2147483647, %v2714
    %v2719 = vand.u32 2147483647, %v2715
    %v2720 = vand.u32 2147483647, %v2716
    %v2721 = vmul.f32 %v2717, 0.5
    %v2722 = vmul.f32 %v2718, 0.5
    %v2723 = vmul.f32 %v2719, 0.5
    %v2724 = vmul.f32 %v2720, 0.5
    %v2725 = vadd.f32 %v2721, 1.0
    %v2726 = vadd.f32 %v2722, 1.0
    %v2727 = vadd.f32 %v2723, 1.0
    %v2728 = vadd.f32 %v2724, 1.0
    %v2729 = vrcp.pop %v2725
    %v2730 = vrcp.pop %v2726
    %v2731 = vrcp.pop %v2727
    %v2732 = vrcp.pop %v2728
    %v2733 = vmul.f32 %v2729, 0.17087276
    %v2734 = vmul.f32 %v2730, 0.17087276
    %v2735 = vmul.f32 %v2731, 0.17087276
    %v2736 = vmul.f32 %v2732, 0.17087276
    %v2737 = vadd.f32 %v2733, -0.82215226
    %v2738 = vadd.f32 %v2734, -0.82215226
    %v2739 = vadd.f32 %v2735, -0.82215226
    %v2740 = vadd.f32 %v2736, -0.82215226
    %v2741 = vmul.f32 %v2729, %v2737
    %v2742 = vmul.f32 %v2730, %v2738
    %v2743 = vmul.f32 %v2731, %v2739
    %v2744 = vmul.f32 %v2732, %v2740
    %v2745 = vadd.f32 %v2741, 1.4885159
    %v2746 = vadd.f32 %v2742, 1.4885159
    %v2747 = vadd.f32 %v2743, 1.4885159
    %v2748 = vadd.f32 %v2744, 1.4885159
    %v2749 = vmul.f32 %v2729, %v2745
    %v2750 = vmul.f32 %v2730, %v2746
    %v2751 = vmul.f32 %v2731, %v2747
    %v2752 = vmul.f32 %v2732, %v2748
    %v2753 = vadd.f32 %v2749, -1.135204
    %v2754 = vadd.f32 %v2750, -1.135204
    %v2755 = vadd.f32 %v2751, -1.135204
    %v2756 = vadd.f32 %v2752, -1.135204
    %v2757 = vmul.f32 %v2729, %v2753
    %v2758 = vmul.f32 %v2730, %v2754
    %v2759 = vmul.f32 %v2731, %v2755
    %v2760 = vmul.f32 %v2732, %v2756
    %v2761 = vadd.f32 %v2757, 0.27886808
    %v2762 = vadd.f32 %v2758, 0.27886808
    %v2763 = vadd.f32 %v2759, 0.27886808
    %v2764 = vadd.f32 %v2760, 0.27886808
    %v2765 = vmul.f32 %v2729, %v2761
    %v2766 = vmul.f32 %v2730, %v2762
    %v2767 = vmul.f32 %v2731, %v2763
    %v2768 = vmul.f32 %v2732, %v2764
    %v2769 = vadd.f32 %v2765, -0.18628806
    %v2770 = vadd.f32 %v2766, -0.18628806
    %v2771 = vadd.f32 %v2767, -0.18628806
    %v2772 = vadd.f32 %v2768, -0.18628806
    %v2773 = vmul.f32 %v2729, %v2769
    %v2774 = vmul.f32 %v2730, %v2770
    %v2775 = vmul.f32 %v2731, %v2771
    %v2776 = vmul.f32 %v2732, %v2772
    %v2777 = vadd.f32 %v2773, 0.09678418
    %v2778 = vadd.f32 %v2774, 0.09678418
    %v2779 = vadd.f32 %v2775, 0.09678418
    %v2780 = vadd.f32 %v2776, 0.09678418
    %v2781 = vmul.f32 %v2729, %v2777
    %v2782 = vmul.f32 %v2730, %v2778
    %v2783 = vmul.f32 %v2731, %v2779
    %v2784 = vmul.f32 %v2732, %v2780
    %v2785 = vadd.f32 %v2781, 0.37409195
    %v2786 = vadd.f32 %v2782, 0.37409195
    %v2787 = vadd.f32 %v2783, 0.37409195
    %v2788 = vadd.f32 %v2784, 0.37409195
    %v2789 = vmul.f32 %v2729, %v2785
    %v2790 = vmul.f32 %v2730, %v2786
    %v2791 = vmul.f32 %v2731, %v2787
    %v2792 = vmul.f32 %v2732, %v2788
    %v2793 = vadd.f32 %v2789, 1.0000237
    %v2794 = vadd.f32 %v2790, 1.0000237
    %v2795 = vadd.f32 %v2791, 1.0000237
    %v2796 = vadd.f32 %v2792, 1.0000237
    %v2797 = vmul.f32 %v2729, %v2793
    %v2798 = vmul.f32 %v2730, %v2794
    %v2799 = vmul.f32 %v2731, %v2795
    %v2800 = vmul.f32 %v2732, %v2796
    %v2801 = vadd.f32 %v2797, -1.2655122
    %v2802 = vadd.f32 %v2798, -1.2655122
    %v2803 = vadd.f32 %v2799, -1.2655122
    %v2804 = vadd.f32 %v2800, -1.2655122
    %v2805 = vsub.f32 0.0, %v2717
    %v2806 = vsub.f32 0.0, %v2718
    %v2807 = vsub.f32 0.0, %v2719
    %v2808 = vsub.f32 0.0, %v2720
    %v2809 = vmul.f32 %v2805, %v2717
    %v2810 = vmul.f32 %v2806, %v2718
    %v2811 = vmul.f32 %v2807, %v2719
    %v2812 = vmul.f32 %v2808, %v2720
    %v2813 = vadd.f32 %v2809, %v2801
    %v2814 = vadd.f32 %v2810, %v2802
    %v2815 = vadd.f32 %v2811, %v2803
    %v2816 = vadd.f32 %v2812, %v2804
    %v2817 = vmul.f32 %v2813, 1.442695
    %v2818 = vpow.pop %v2817
    %v2819 = vmul.f32 %v2814, 1.442695
    %v2820 = vpow.pop %v2819
    %v2821 = vmul.f32 %v2815, 1.442695
    %v2822 = vpow.pop %v2821
    %v2823 = vmul.f32 %v2816, 1.442695
    %v2824 = vpow.pop %v2823
    %v2825 = vmul.f32 %v2729, %v2818
    %v2826 = vmul.f32 %v2730, %v2820
    %v2827 = vmul.f32 %v2731, %v2822
    %v2828 = vmul.f32 %v2732, %v2824
    %vm2829 = vcmp.ge.f32.partialorder %v2713, 0.0
    %vm2830 = vcmp.ge.f32.partialorder %v2714, 0.0
    %vm2831 = vcmp.ge.f32.partialorder %v2715, 0.0
    %vm2832 = vcmp.ge.f32.partialorder %v2716, 0.0
    %v2833 = vsub.f32 1.0, %v2825
    %v2834 = vsub.f32 1.0, %v2826
    %v2835 = vsub.f32 1.0, %v2827
    %v2836 = vsub.f32 1.0, %v2828
    %v2837 = vsub.f32 %v2825, 1.0
    %v2838 = vsub.f32 %v2826, 1.0
    %v2839 = vsub.f32 %v2827, 1.0
    %v2840 = vsub.f32 %v2828, 1.0
    %v2841 = vsel %vm2829, %v2833, %v2837
    %v2842 = vsel %vm2830, %v2834, %v2838
    %v2843 = vsel %vm2831, %v2835, %v2839
    %v2844 = vsel %vm2832, %v2836, %v2840
    %v2845 = vadd.f32 %v2841, 1.0
    %v2846 = vadd.f32 %v2842, 1.0
    %v2847 = vadd.f32 %v2843, 1.0
    %v2848 = vadd.f32 %v2844, 1.0
    %v2849 = vmul.f32 %v2709, %v2845
    %v2850 = vmul.f32 %v2710, %v2846
    %v2851 = vmul.f32 %v2711, %v2847
    %v2852 = vmul.f32 %v2712, %v2848
    %v2853 = vpack.c.bf16 %v2851, %v2849
    %v2854 = vpack.c.bf16 %v2852, %v2850
    %v2857 = vunpack.c.l.b16 %v2853
    %v2858 = vunpack.c.l.b16 %v2854
    %v2859 = vunpack.c.h.b16 %v2853
    %v2860 = vunpack.c.h.b16 %v2854
    %v2861 = vpack.c.b16 %v2858, %v2857
    %v2862 = vpack.c.b16 %v2860, %v2859
    %2865 = vst [vmem:[#allocation2 + $0x40] sm:$0xff] %v2861
    %2866 = vst [vmem:[#allocation2 + $0x48] sm:$0xff] %v2862
    %v2867 = vld [vmem:[#allocation12] sm:$0xff]
    %v2868 = vld [vmem:[#allocation12 + $0x8] sm:$0xff]
    %v2869 = vld [vmem:[#allocation12 + $0x10] sm:$0xff]
    %v2870 = vld [vmem:[#allocation12 + $0x18] sm:$0xff]
    %v2871 = vld [vmem:[#allocation12 + $0x20] sm:$0xff]
    %v2872 = vld [vmem:[#allocation12 + $0x28] sm:$0xff]
    %v2873 = vld [vmem:[#allocation12 + $0x30] sm:$0xff]
    %v2874 = vld [vmem:[#allocation12 + $0x38] sm:$0xff]
    %v2875 = vld [vmem:[#allocation12 + $0x40] sm:$0xff]
    %v2876 = vld [vmem:[#allocation12 + $0x48] sm:$0xff]
    %v2877 = vld [vmem:[#allocation12 + $0x50] sm:$0xff]
    %v2878 = vld [vmem:[#allocation12 + $0x58] sm:$0xff]
    %v2879 = vpack.c.bf16 %v2873, %v2867
    %v2880 = vpack.c.bf16 %v2874, %v2868
    %v2881 = vpack.c.bf16 %v2875, %v2869
    %v2882 = vpack.c.bf16 %v2876, %v2870
    %v2883 = vpack.c.bf16 %v2877, %v2871
    %v2884 = vpack.c.bf16 %v2878, %v2872
    %2885 = vmatprep.subr.bf16.mxu0 %v1488
    %2886 = vmatpush1.bf16.msra.mxu0 %v1487
    %2887 = vmatprep.subr.bf16.mxu0 %v1486
    %2888 = vmatpush1.bf16.msra.mxu0 %v1485
    %2889 = vmatprep.subr.bf16.mxu0 %v1484
    %2890 = vmatpush1.bf16.msra.mxu0 %v1483
    %2891 = vmatprep.subr.bf16.mxu0 %v1482
    %2892 = vmatpush1.bf16.msra.mxu0 %v1481
    %2893 = vmatprep.subr.bf16.mxu0 %v1480
    %2894 = vmatpush1.bf16.msra.mxu0 %v1479
    %2895 = vmatprep.subr.bf16.mxu0 %v1478
    %2896 = vmatpush1.bf16.msra.mxu0 %v1477
    %2897 = vmatprep.subr.bf16.mxu0 %v1476
    %2898 = vmatpush1.bf16.msra.mxu0 %v1475
    %2899 = vmatprep.subr.bf16.mxu0 %v1474
    %2900 = vmatpush1.bf16.msra.mxu0 %v1473
    %2901 = vmatprep.subr.bf16.mxu0 %v1504
    %2902 = vmatpush2.bf16.msra.mxu0 %v1503
    %2903 = vmatprep.subr.bf16.mxu0 %v1502
    %2904 = vmatpush2.bf16.msra.mxu0 %v1501
    %2905 = vmatprep.subr.bf16.mxu0 %v1500
    %2906 = vmatpush2.bf16.msra.mxu0 %v1499
    %2907 = vmatprep.subr.bf16.mxu0 %v1498
    %2908 = vmatpush2.bf16.msra.mxu0 %v1497
    %2909 = vmatprep.subr.bf16.mxu0 %v1496
    %2910 = vmatpush2.bf16.msra.mxu0 %v1495
    %2911 = vmatprep.subr.bf16.mxu0 %v1494
    %2912 = vmatpush2.bf16.msra.mxu0 %v1493
    %2913 = vmatprep.subr.bf16.mxu0 %v1492
    %2914 = vmatpush2.bf16.msra.mxu0 %v1491
    %2915 = vmatprep.subr.bf16.mxu0 %v1490
    %2916 = vmatpush2.bf16.msra.mxu0 %v1489
    %2917 = vmatprep.mubr.bf16.mxu0 %v2880
    %2918 = vmatmul.mubr.bf16.gmra.mxu0 %v2879
    %v2919 = vpop.f32.mrf.mxu0
    %v2920 = vadd.f32 %v1178, %v2919
    %v2921 = vpop.f32.mrf.mxu0
    %v2922 = vadd.f32 %v1182, %v2921
    %v2923 = vpop.f32.mrf.mxu0
    %v2924 = vadd.f32 %v1178, %v2923
    %v2925 = vpop.f32.mrf.mxu0
    %v2926 = vadd.f32 %v1182, %v2925
    %2927 = vdwg.mxu0
    %2928 = vmatprep.subr.bf16.mxu0 %v1520
    %2929 = vmatpush1.bf16.msra.mxu0 %v1519
    %2930 = vmatprep.subr.bf16.mxu0 %v1518
    %2931 = vmatpush1.bf16.msra.mxu0 %v1517
    %2932 = vmatprep.subr.bf16.mxu0 %v1516
    %2933 = vmatpush1.bf16.msra.mxu0 %v1515
    %2934 = vmatprep.subr.bf16.mxu0 %v1514
    %2935 = vmatpush1.bf16.msra.mxu0 %v1513
    %2936 = vmatprep.subr.bf16.mxu0 %v1512
    %2937 = vmatpush1.bf16.msra.mxu0 %v1511
    %2938 = vmatprep.subr.bf16.mxu0 %v1510
    %2939 = vmatpush1.bf16.msra.mxu0 %v1509
    %2940 = vmatprep.subr.bf16.mxu0 %v1508
    %2941 = vmatpush1.bf16.msra.mxu0 %v1507
    %2942 = vmatprep.subr.bf16.mxu0 %v1506
    %2943 = vmatpush1.bf16.msra.mxu0 %v1505
    %2944 = vmatprep.subr.bf16.mxu0 %v1536
    %2945 = vmatpush2.bf16.msra.mxu0 %v1535
    %2946 = vmatprep.subr.bf16.mxu0 %v1534
    %2947 = vmatpush2.bf16.msra.mxu0 %v1533
    %2948 = vmatprep.subr.bf16.mxu0 %v1532
    %2949 = vmatpush2.bf16.msra.mxu0 %v1531
    %2950 = vmatprep.subr.bf16.mxu0 %v1530
    %2951 = vmatpush2.bf16.msra.mxu0 %v1529
    %2952 = vmatprep.subr.bf16.mxu0 %v1528
    %2953 = vmatpush2.bf16.msra.mxu0 %v1527
    %2954 = vmatprep.subr.bf16.mxu0 %v1526
    %2955 = vmatpush2.bf16.msra.mxu0 %v1525
    %2956 = vmatprep.subr.bf16.mxu0 %v1524
    %2957 = vmatpush2.bf16.msra.mxu0 %v1523
    %2958 = vmatprep.subr.bf16.mxu0 %v1522
    %2959 = vmatpush2.bf16.msra.mxu0 %v1521
    %2960 = vmatprep.mubr.bf16.mxu0 %v2882
    %2961 = vmatmul.mubr.bf16.gmra.mxu0 %v2881
    %v2962 = vpop.f32.mrf.mxu0
    %v2963 = vadd.f32 %v2920, %v2962
    %v2964 = vpop.f32.mrf.mxu0
    %v2965 = vadd.f32 %v2922, %v2964
    %v2966 = vpop.f32.mrf.mxu0
    %v2967 = vadd.f32 %v2924, %v2966
    %v2968 = vpop.f32.mrf.mxu0
    %v2969 = vadd.f32 %v2926, %v2968
    %2970 = vdwg.mxu0
    %2971 = vmatprep.subr.bf16.mxu0 %v1552
    %2972 = vmatpush1.bf16.msra.mxu0 %v1551
    %2973 = vmatprep.subr.bf16.mxu0 %v1550
    %2974 = vmatpush1.bf16.msra.mxu0 %v1549
    %2975 = vmatprep.subr.bf16.mxu0 %v1548
    %2976 = vmatpush1.bf16.msra.mxu0 %v1547
    %2977 = vmatprep.subr.bf16.mxu0 %v1546
    %2978 = vmatpush1.bf16.msra.mxu0 %v1545
    %2979 = vmatprep.subr.bf16.mxu0 %v1544
    %2980 = vmatpush1.bf16.msra.mxu0 %v1543
    %2981 = vmatprep.subr.bf16.mxu0 %v1542
    %2982 = vmatpush1.bf16.msra.mxu0 %v1541
    %2983 = vmatprep.subr.bf16.mxu0 %v1540
    %2984 = vmatpush1.bf16.msra.mxu0 %v1539
    %2985 = vmatprep.subr.bf16.mxu0 %v1538
    %2986 = vmatpush1.bf16.msra.mxu0 %v1537
    %2987 = vmatprep.subr.bf16.mxu0 %v1568
    %2988 = vmatpush2.bf16.msra.mxu0 %v1567
    %2989 = vmatprep.subr.bf16.mxu0 %v1566
    %2990 = vmatpush2.bf16.msra.mxu0 %v1565
    %2991 = vmatprep.subr.bf16.mxu0 %v1564
    %2992 = vmatpush2.bf16.msra.mxu0 %v1563
    %2993 = vmatprep.subr.bf16.mxu0 %v1562
    %2994 = vmatpush2.bf16.msra.mxu0 %v1561
    %2995 = vmatprep.subr.bf16.mxu0 %v1560
    %2996 = vmatpush2.bf16.msra.mxu0 %v1559
    %2997 = vmatprep.subr.bf16.mxu0 %v1558
    %2998 = vmatpush2.bf16.msra.mxu0 %v1557
    %2999 = vmatprep.subr.bf16.mxu0 %v1556
    %3000 = vmatpush2.bf16.msra.mxu0 %v1555
    %3001 = vmatprep.subr.bf16.mxu0 %v1554
    %3002 = vmatpush2.bf16.msra.mxu0 %v1553
    %3003 = vmatprep.mubr.bf16.mxu0 %v2884
    %3004 = vmatmul.mubr.bf16.gmra.mxu0 %v2883
    %v3005 = vpop.f32.mrf.mxu0
    %v3006 = vadd.f32 %v2963, %v3005
    %v3007 = vpop.f32.mrf.mxu0
    %v3008 = vadd.f32 %v2965, %v3007
    %v3009 = vpop.f32.mrf.mxu0
    %v3010 = vadd.f32 %v2967, %v3009
    %v3011 = vpop.f32.mrf.mxu0
    %v3012 = vadd.f32 %v2969, %v3011
    %3013 = vdwg.mxu0
    %v3014 = vmul.f32 %v3006, 0.5
    %v3015 = vmul.f32 %v3008, 0.5
    %v3016 = vmul.f32 %v3010, 0.5
    %v3017 = vmul.f32 %v3012, 0.5
    %v3018 = vmul.f32 %v3006, 0.70710677
    %v3019 = vmul.f32 %v3008, 0.70710677
    %v3020 = vmul.f32 %v3010, 0.70710677
    %v3021 = vmul.f32 %v3012, 0.70710677
    %v3022 = vand.u32 2147483647, %v3018
    %v3023 = vand.u32 2147483647, %v3019
    %v3024 = vand.u32 2147483647, %v3020
    %v3025 = vand.u32 2147483647, %v3021
    %v3026 = vmul.f32 %v3022, 0.5
    %v3027 = vmul.f32 %v3023, 0.5
    %v3028 = vmul.f32 %v3024, 0.5
    %v3029 = vmul.f32 %v3025, 0.5
    %v3030 = vadd.f32 %v3026, 1.0
    %v3031 = vadd.f32 %v3027, 1.0
    %v3032 = vadd.f32 %v3028, 1.0
    %v3033 = vadd.f32 %v3029, 1.0
    %v3034 = vrcp.pop %v3030
    %v3035 = vrcp.pop %v3031
    %v3036 = vrcp.pop %v3032
    %v3037 = vrcp.pop %v3033
    %v3038 = vmul.f32 %v3034, 0.17087276
    %v3039 = vmul.f32 %v3035, 0.17087276
    %v3040 = vmul.f32 %v3036, 0.17087276
    %v3041 = vmul.f32 %v3037, 0.17087276
    %v3042 = vadd.f32 %v3038, -0.82215226
    %v3043 = vadd.f32 %v3039, -0.82215226
    %v3044 = vadd.f32 %v3040, -0.82215226
    %v3045 = vadd.f32 %v3041, -0.82215226
    %v3046 = vmul.f32 %v3034, %v3042
    %v3047 = vmul.f32 %v3035, %v3043
    %v3048 = vmul.f32 %v3036, %v3044
    %v3049 = vmul.f32 %v3037, %v3045
    %v3050 = vadd.f32 %v3046, 1.4885159
    %v3051 = vadd.f32 %v3047, 1.4885159
    %v3052 = vadd.f32 %v3048, 1.4885159
    %v3053 = vadd.f32 %v3049, 1.4885159
    %v3054 = vmul.f32 %v3034, %v3050
    %v3055 = vmul.f32 %v3035, %v3051
    %v3056 = vmul.f32 %v3036, %v3052
    %v3057 = vmul.f32 %v3037, %v3053
    %v3058 = vadd.f32 %v3054, -1.135204
    %v3059 = vadd.f32 %v3055, -1.135204
    %v3060 = vadd.f32 %v3056, -1.135204
    %v3061 = vadd.f32 %v3057, -1.135204
    %v3062 = vmul.f32 %v3034, %v3058
    %v3063 = vmul.f32 %v3035, %v3059
    %v3064 = vmul.f32 %v3036, %v3060
    %v3065 = vmul.f32 %v3037, %v3061
    %v3066 = vadd.f32 %v3062, 0.27886808
    %v3067 = vadd.f32 %v3063, 0.27886808
    %v3068 = vadd.f32 %v3064, 0.27886808
    %v3069 = vadd.f32 %v3065, 0.27886808
    %v3070 = vmul.f32 %v3034, %v3066
    %v3071 = vmul.f32 %v3035, %v3067
    %v3072 = vmul.f32 %v3036, %v3068
    %v3073 = vmul.f32 %v3037, %v3069
    %v3074 = vadd.f32 %v3070, -0.18628806
    %v3075 = vadd.f32 %v3071, -0.18628806
    %v3076 = vadd.f32 %v3072, -0.18628806
    %v3077 = vadd.f32 %v3073, -0.18628806
    %v3078 = vmul.f32 %v3034, %v3074
    %v3079 = vmul.f32 %v3035, %v3075
    %v3080 = vmul.f32 %v3036, %v3076
    %v3081 = vmul.f32 %v3037, %v3077
    %v3082 = vadd.f32 %v3078, 0.09678418
    %v3083 = vadd.f32 %v3079, 0.09678418
    %v3084 = vadd.f32 %v3080, 0.09678418
    %v3085 = vadd.f32 %v3081, 0.09678418
    %v3086 = vmul.f32 %v3034, %v3082
    %v3087 = vmul.f32 %v3035, %v3083
    %v3088 = vmul.f32 %v3036, %v3084
    %v3089 = vmul.f32 %v3037, %v3085
    %v3090 = vadd.f32 %v3086, 0.37409195
    %v3091 = vadd.f32 %v3087, 0.37409195
    %v3092 = vadd.f32 %v3088, 0.37409195
    %v3093 = vadd.f32 %v3089, 0.37409195
    %v3094 = vmul.f32 %v3034, %v3090
    %v3095 = vmul.f32 %v3035, %v3091
    %v3096 = vmul.f32 %v3036, %v3092
    %v3097 = vmul.f32 %v3037, %v3093
    %v3098 = vadd.f32 %v3094, 1.0000237
    %v3099 = vadd.f32 %v3095, 1.0000237
    %v3100 = vadd.f32 %v3096, 1.0000237
    %v3101 = vadd.f32 %v3097, 1.0000237
    %v3102 = vmul.f32 %v3034, %v3098
    %v3103 = vmul.f32 %v3035, %v3099
    %v3104 = vmul.f32 %v3036, %v3100
    %v3105 = vmul.f32 %v3037, %v3101
    %v3106 = vadd.f32 %v3102, -1.2655122
    %v3107 = vadd.f32 %v3103, -1.2655122
    %v3108 = vadd.f32 %v3104, -1.2655122
    %v3109 = vadd.f32 %v3105, -1.2655122
    %v3110 = vsub.f32 0.0, %v3022
    %v3111 = vsub.f32 0.0, %v3023
    %v3112 = vsub.f32 0.0, %v3024
    %v3113 = vsub.f32 0.0, %v3025
    %v3114 = vmul.f32 %v3110, %v3022
    %v3115 = vmul.f32 %v3111, %v3023
    %v3116 = vmul.f32 %v3112, %v3024
    %v3117 = vmul.f32 %v3113, %v3025
    %v3118 = vadd.f32 %v3114, %v3106
    %v3119 = vadd.f32 %v3115, %v3107
    %v3120 = vadd.f32 %v3116, %v3108
    %v3121 = vadd.f32 %v3117, %v3109
    %v3122 = vmul.f32 %v3118, 1.442695
    %v3123 = vpow.pop %v3122
    %v3124 = vmul.f32 %v3119, 1.442695
    %v3125 = vpow.pop %v3124
    %v3126 = vmul.f32 %v3120, 1.442695
    %v3127 = vpow.pop %v3126
    %v3128 = vmul.f32 %v3121, 1.442695
    %v3129 = vpow.pop %v3128
    %v3130 = vmul.f32 %v3034, %v3123
    %v3131 = vmul.f32 %v3035, %v3125
    %v3132 = vmul.f32 %v3036, %v3127
    %v3133 = vmul.f32 %v3037, %v3129
    %vm3134 = vcmp.ge.f32.partialorder %v3018, 0.0
    %vm3135 = vcmp.ge.f32.partialorder %v3019, 0.0
    %vm3136 = vcmp.ge.f32.partialorder %v3020, 0.0
    %vm3137 = vcmp.ge.f32.partialorder %v3021, 0.0
    %v3138 = vsub.f32 1.0, %v3130
    %v3139 = vsub.f32 1.0, %v3131
    %v3140 = vsub.f32 1.0, %v3132
    %v3141 = vsub.f32 1.0, %v3133
    %v3142 = vsub.f32 %v3130, 1.0
    %v3143 = vsub.f32 %v3131, 1.0
    %v3144 = vsub.f32 %v3132, 1.0
    %v3145 = vsub.f32 %v3133, 1.0
    %v3146 = vsel %vm3134, %v3138, %v3142
    %v3147 = vsel %vm3135, %v3139, %v3143
    %v3148 = vsel %vm3136, %v3140, %v3144
    %v3149 = vsel %vm3137, %v3141, %v3145
    %v3150 = vadd.f32 %v3146, 1.0
    %v3151 = vadd.f32 %v3147, 1.0
    %v3152 = vadd.f32 %v3148, 1.0
    %v3153 = vadd.f32 %v3149, 1.0
    %v3154 = vmul.f32 %v3014, %v3150
    %v3155 = vmul.f32 %v3015, %v3151
    %v3156 = vmul.f32 %v3016, %v3152
    %v3157 = vmul.f32 %v3017, %v3153
    %v3158 = vpack.c.bf16 %v3156, %v3154
    %v3159 = vpack.c.bf16 %v3157, %v3155
    %v3162 = vunpack.c.l.b16 %v3158
    %v3163 = vunpack.c.l.b16 %v3159
    %v3164 = vunpack.c.h.b16 %v3158
    %v3165 = vunpack.c.h.b16 %v3159
    %v3166 = vpack.c.b16 %v3163, %v3162
    %v3167 = vpack.c.b16 %v3165, %v3164
    %3170 = vst [vmem:[#allocation2 + $0x50] sm:$0xff] %v3166
    %3171 = vst [vmem:[#allocation2 + $0x58] sm:$0xff] %v3167
    %v3172 = vld [vmem:[#allocation2] sm:$0xff]
    %v3173 = vld [vmem:[#allocation2 + $0x8] sm:$0xff]
    %v3174 = vld [vmem:[#allocation2 + $0x10] sm:$0xff]
    %v3175 = vld [vmem:[#allocation2 + $0x18] sm:$0xff]
    %v3176 = vld [vmem:[#allocation2 + $0x20] sm:$0xff]
    %v3177 = vld [vmem:[#allocation2 + $0x28] sm:$0xff]
    %v3178 = vld [vmem:[#allocation2 + $0x30] sm:$0xff]
    %v3179 = vld [vmem:[#allocation2 + $0x38] sm:$0xff]
    %v3180 = vld [vmem:[#allocation2 + $0x40] sm:$0xff]
    %v3181 = vld [vmem:[#allocation2 + $0x48] sm:$0xff]
    %v3182 = vld [vmem:[#allocation2 + $0x50] sm:$0xff]
    %v3183 = vld [vmem:[#allocation2 + $0x58] sm:$0xff]
    %v3184 = vld [vmem:[#allocation16] sm:$0xf]
    %v3185 = vld [vmem:[#allocation16 + $0x4] sm:$0xf]
    %v3186 = vld [vmem:[#allocation16 + $0x8] sm:$0xf]
    %v3187 = vld [vmem:[#allocation16 + $0xc] sm:$0xf]
    %v3188 = vld [vmem:[#allocation16 + $0x10] sm:$0xf]
    %v3189 = vld [vmem:[#allocation16 + $0x14] sm:$0xf]
    %v3190 = vld [vmem:[#allocation16 + $0x18] sm:$0xf]
    %v3191 = vld [vmem:[#allocation16 + $0x1c] sm:$0xf]
    %v3192 = vld [vmem:[#allocation16 + $0x20] sm:$0xf]
    %v3193 = vld [vmem:[#allocation16 + $0x24] sm:$0xf]
    %v3194 = vld [vmem:[#allocation16 + $0x28] sm:$0xf]
    %v3195 = vld [vmem:[#allocation16 + $0x2c] sm:$0xf]
    %v3196 = vld [vmem:[#allocation16 + $0x30] sm:$0xf]
    %v3197 = vld [vmem:[#allocation16 + $0x34] sm:$0xf]
    %v3198 = vld [vmem:[#allocation16 + $0x38] sm:$0xf]
    %v3199 = vld [vmem:[#allocation16 + $0x3c] sm:$0xf]
    %v3200 = vld [vmem:[#allocation16 + $0x40] sm:$0xf]
    %v3201 = vld [vmem:[#allocation16 + $0x44] sm:$0xf]
    %v3202 = vld [vmem:[#allocation16 + $0x48] sm:$0xf]
    %v3203 = vld [vmem:[#allocation16 + $0x4c] sm:$0xf]
    %v3204 = vld [vmem:[#allocation16 + $0x50] sm:$0xf]
    %v3205 = vld [vmem:[#allocation16 + $0x54] sm:$0xf]
    %v3206 = vld [vmem:[#allocation16 + $0x58] sm:$0xf]
    %v3207 = vld [vmem:[#allocation16 + $0x5c] sm:$0xf]
    %v3208 = vld [vmem:[#allocation16 + $0x60] sm:$0xf]
    %v3209 = vld [vmem:[#allocation16 + $0x64] sm:$0xf]
    %v3210 = vld [vmem:[#allocation16 + $0x68] sm:$0xf]
    %v3211 = vld [vmem:[#allocation16 + $0x6c] sm:$0xf]
    %v3212 = vld [vmem:[#allocation16 + $0x70] sm:$0xf]
    %v3213 = vld [vmem:[#allocation16 + $0x74] sm:$0xf]
    %v3214 = vld [vmem:[#allocation16 + $0x78] sm:$0xf]
    %v3215 = vld [vmem:[#allocation16 + $0x7c] sm:$0xf]
    %v3216 = vld [vmem:[%s11] sm:$0x1]
    %v3218 = vlaneseq
    %v3219 = vshrl.u32 %v3218, 7
    %v3220 = vsub.s32 0, %v3219
    %v3221 = vrot.slane %v3216, %v3220
    %v3235 = vunpack.c.l.b16 %v3172
    %v3236 = vunpack.c.h.b16 %v3172
    %v3237 = vunpack.c.l.b16 %v3173
    %v3238 = vunpack.c.h.b16 %v3173
    %v3239 = vunpack.c.l.b16 %v3174
    %v3240 = vunpack.c.h.b16 %v3174
    %v3241 = vunpack.c.l.b16 %v3175
    %v3242 = vunpack.c.h.b16 %v3175
    %v3243 = vunpack.c.l.b16 %v3176
    %v3244 = vunpack.c.h.b16 %v3176
    %v3245 = vunpack.c.l.b16 %v3177
    %v3246 = vunpack.c.h.b16 %v3177
    %v3247 = vunpack.c.l.b16 %v3178
    %v3248 = vunpack.c.h.b16 %v3178
    %v3249 = vunpack.c.l.b16 %v3179
    %v3250 = vunpack.c.h.b16 %v3179
    %v3251 = vunpack.c.l.b16 %v3180
    %v3252 = vunpack.c.h.b16 %v3180
    %v3253 = vunpack.c.l.b16 %v3181
    %v3254 = vunpack.c.h.b16 %v3181
    %v3255 = vunpack.c.l.b16 %v3182
    %v3256 = vunpack.c.h.b16 %v3182
    %v3257 = vunpack.c.l.b16 %v3183
    %v3258 = vunpack.c.h.b16 %v3183
    %v3259 = vpack.c.b16 %v3237, %v3235
    %v3260 = vpack.c.b16 %v3238, %v3236
    %v3261 = vpack.c.b16 %v3241, %v3239
    %v3262 = vpack.c.b16 %v3242, %v3240
    %v3263 = vpack.c.b16 %v3245, %v3243
    %v3264 = vpack.c.b16 %v3246, %v3244
    %v3265 = vpack.c.b16 %v3249, %v3247
    %v3266 = vpack.c.b16 %v3250, %v3248
    %v3267 = vpack.c.b16 %v3253, %v3251
    %v3268 = vpack.c.b16 %v3254, %v3252
    %v3269 = vpack.c.b16 %v3257, %v3255
    %v3270 = vpack.c.b16 %v3258, %v3256
    %v3315 = vunpack.c.l.b16 %v3184
    %v3316 = vunpack.c.l.b16 %v3185
    %v3317 = vunpack.c.l.b16 %v3186
    %v3318 = vunpack.c.l.b16 %v3187
    %v3319 = vunpack.c.l.b16 %v3188
    %v3320 = vunpack.c.l.b16 %v3189
    %v3321 = vunpack.c.l.b16 %v3190
    %v3322 = vunpack.c.l.b16 %v3191
    %v3323 = vunpack.c.l.b16 %v3192
    %v3324 = vunpack.c.l.b16 %v3193
    %v3325 = vunpack.c.l.b16 %v3194
    %v3326 = vunpack.c.l.b16 %v3195
    %v3327 = vunpack.c.l.b16 %v3196
    %v3328 = vunpack.c.l.b16 %v3197
    %v3329 = vunpack.c.l.b16 %v3198
    %v3330 = vunpack.c.l.b16 %v3199
    %v3331 = vunpack.c.l.b16 %v3200
    %v3332 = vunpack.c.l.b16 %v3201
    %v3333 = vunpack.c.l.b16 %v3202
    %v3334 = vunpack.c.l.b16 %v3203
    %v3335 = vunpack.c.l.b16 %v3204
    %v3336 = vunpack.c.l.b16 %v3205
    %v3337 = vunpack.c.l.b16 %v3206
    %v3338 = vunpack.c.l.b16 %v3207
    %v3339 = vunpack.c.l.b16 %v3208
    %v3340 = vunpack.c.l.b16 %v3209
    %v3341 = vunpack.c.l.b16 %v3210
    %v3342 = vunpack.c.l.b16 %v3211
    %v3343 = vunpack.c.l.b16 %v3212
    %v3344 = vunpack.c.l.b16 %v3213
    %v3345 = vunpack.c.l.b16 %v3214
    %v3346 = vunpack.c.l.b16 %v3215
    %v3347 = vpack.c.b16 %v3316, %v3315
    %v3348 = vpack.c.b16 %v3318, %v3317
    %v3349 = vpack.c.b16 %v3320, %v3319
    %v3350 = vpack.c.b16 %v3322, %v3321
    %v3351 = vpack.c.b16 %v3324, %v3323
    %v3352 = vpack.c.b16 %v3326, %v3325
    %v3353 = vpack.c.b16 %v3328, %v3327
    %v3354 = vpack.c.b16 %v3330, %v3329
    %v3355 = vpack.c.b16 %v3332, %v3331
    %v3356 = vpack.c.b16 %v3334, %v3333
    %v3357 = vpack.c.b16 %v3336, %v3335
    %v3358 = vpack.c.b16 %v3338, %v3337
    %v3359 = vpack.c.b16 %v3340, %v3339
    %v3360 = vpack.c.b16 %v3342, %v3341
    %v3361 = vpack.c.b16 %v3344, %v3343
    %v3362 = vpack.c.b16 %v3346, %v3345
    %3379 = vmatprep.subr.bf16.mxu0 0
    %3380 = vmatpush1.bf16.msra.mxu0 %v3354
    %3381 = vmatprep.subr.bf16.mxu0 0
    %3382 = vmatpush1.bf16.msra.mxu0 %v3353
    %3383 = vmatprep.subr.bf16.mxu0 0
    %3384 = vmatpush1.bf16.msra.mxu0 %v3352
    %3385 = vmatprep.subr.bf16.mxu0 0
    %3386 = vmatpush1.bf16.msra.mxu0 %v3351
    %3387 = vmatprep.subr.bf16.mxu0 0
    %3388 = vmatpush1.bf16.msra.mxu0 %v3350
    %3389 = vmatprep.subr.bf16.mxu0 0
    %3390 = vmatpush1.bf16.msra.mxu0 %v3349
    %3391 = vmatprep.subr.bf16.mxu0 0
    %3392 = vmatpush1.bf16.msra.mxu0 %v3348
    %3393 = vmatprep.subr.bf16.mxu0 0
    %3394 = vmatpush1.bf16.msra.mxu0 %v3347
    %3395 = vmatprep.subr.bf16.mxu0 0
    %3396 = vmatpush2.bf16.msra.mxu0 %v3362
    %3397 = vmatprep.subr.bf16.mxu0 0
    %3398 = vmatpush2.bf16.msra.mxu0 %v3361
    %3399 = vmatprep.subr.bf16.mxu0 0
    %3400 = vmatpush2.bf16.msra.mxu0 %v3360
    %3401 = vmatprep.subr.bf16.mxu0 0
    %3402 = vmatpush2.bf16.msra.mxu0 %v3359
    %3403 = vmatprep.subr.bf16.mxu0 0
    %3404 = vmatpush2.bf16.msra.mxu0 %v3358
    %3405 = vmatprep.subr.bf16.mxu0 0
    %3406 = vmatpush2.bf16.msra.mxu0 %v3357
    %3407 = vmatprep.subr.bf16.mxu0 0
    %3408 = vmatpush2.bf16.msra.mxu0 %v3356
    %3409 = vmatprep.subr.bf16.mxu0 0
    %3410 = vmatpush2.bf16.msra.mxu0 %v3355
    %3411 = vmatprep.mubr.bf16.mxu0 %v3260
    %3412 = vmatmul.mubr.bf16.gmra.mxu0 %v3259
    %v3413 = vpop.f32.mrf.mxu0
    %v3414 = vadd.f32 %v3221, %v3413
    %v3415 = vpop.f32.mrf.mxu0
    %v3416 = vpop.f32.mrf.mxu0
    %v3417 = vadd.f32 %v3221, %v3416
    %v3418 = vpop.f32.mrf.mxu0
    %3419 = vmatprep.mubr.bf16.mxu0 %v3262
    %3420 = vmatmul.mubr.bf16.gmra.mxu0 %v3261
    %v3421 = vpop.f32.mrf.mxu0
    %v3422 = vadd.f32 %v3221, %v3421
    %v3423 = vpop.f32.mrf.mxu0
    %v3424 = vpop.f32.mrf.mxu0
    %v3425 = vadd.f32 %v3221, %v3424
    %v3426 = vpop.f32.mrf.mxu0
    %3427 = vmatprep.mubr.bf16.mxu0 %v3264
    %3428 = vmatmul.mubr.bf16.gmra.mxu0 %v3263
    %v3429 = vpop.f32.mrf.mxu0
    %v3430 = vadd.f32 %v3221, %v3429
    %v3431 = vpop.f32.mrf.mxu0
    %v3432 = vpop.f32.mrf.mxu0
    %v3433 = vadd.f32 %v3221, %v3432
    %v3434 = vpop.f32.mrf.mxu0
    %3435 = vmatprep.mubr.bf16.mxu0 %v3266
    %3436 = vmatmul.mubr.bf16.gmra.mxu0 %v3265
    %v3437 = vpop.f32.mrf.mxu0
    %v3438 = vadd.f32 %v3221, %v3437
    %v3439 = vpop.f32.mrf.mxu0
    %v3440 = vpop.f32.mrf.mxu0
    %v3441 = vadd.f32 %v3221, %v3440
    %v3442 = vpop.f32.mrf.mxu0
    %3443 = vmatprep.mubr.bf16.mxu0 %v3268
    %3444 = vmatmul.mubr.bf16.gmra.mxu0 %v3267
    %v3445 = vpop.f32.mrf.mxu0
    %v3446 = vadd.f32 %v3221, %v3445
    %v3447 = vpop.f32.mrf.mxu0
    %v3448 = vpop.f32.mrf.mxu0
    %v3449 = vadd.f32 %v3221, %v3448
    %v3450 = vpop.f32.mrf.mxu0
    %3451 = vmatprep.mubr.bf16.mxu0 %v3270
    %3452 = vmatmul.mubr.bf16.gmra.mxu0 %v3269
    %v3453 = vpop.f32.mrf.mxu0
    %v3454 = vadd.f32 %v3221, %v3453
    %v3455 = vpop.f32.mrf.mxu0
    %v3456 = vpop.f32.mrf.mxu0
    %v3457 = vadd.f32 %v3221, %v3456
    %v3458 = vpop.f32.mrf.mxu0
    %3459 = vdwg.mxu0
    %v3460 = vmul.f32 %v3414, 0.5
    %v3461 = vmul.f32 %v3417, 0.5
    %v3462 = vmul.f32 %v3422, 0.5
    %v3463 = vmul.f32 %v3425, 0.5
    %v3464 = vmul.f32 %v3430, 0.5
    %v3465 = vmul.f32 %v3433, 0.5
    %v3466 = vmul.f32 %v3438, 0.5
    %v3467 = vmul.f32 %v3441, 0.5
    %v3468 = vmul.f32 %v3446, 0.5
    %v3469 = vmul.f32 %v3449, 0.5
    %v3470 = vmul.f32 %v3454, 0.5
    %v3471 = vmul.f32 %v3457, 0.5
    %v3472 = vmul.f32 %v3414, 0.70710677
    %v3473 = vmul.f32 %v3417, 0.70710677
    %v3474 = vmul.f32 %v3422, 0.70710677
    %v3475 = vmul.f32 %v3425, 0.70710677
    %v3476 = vmul.f32 %v3430, 0.70710677
    %v3477 = vmul.f32 %v3433, 0.70710677
    %v3478 = vmul.f32 %v3438, 0.70710677
    %v3479 = vmul.f32 %v3441, 0.70710677
    %v3480 = vmul.f32 %v3446, 0.70710677
    %v3481 = vmul.f32 %v3449, 0.70710677
    %v3482 = vmul.f32 %v3454, 0.70710677
    %v3483 = vmul.f32 %v3457, 0.70710677
    %v3484 = vand.u32 2147483647, %v3472
    %v3485 = vand.u32 2147483647, %v3473
    %v3486 = vand.u32 2147483647, %v3474
    %v3487 = vand.u32 2147483647, %v3475
    %v3488 = vand.u32 2147483647, %v3476
    %v3489 = vand.u32 2147483647, %v3477
    %v3490 = vand.u32 2147483647, %v3478
    %v3491 = vand.u32 2147483647, %v3479
    %v3492 = vand.u32 2147483647, %v3480
    %v3493 = vand.u32 2147483647, %v3481
    %v3494 = vand.u32 2147483647, %v3482
    %v3495 = vand.u32 2147483647, %v3483
    %v3496 = vmul.f32 %v3484, 0.5
    %v3497 = vmul.f32 %v3485, 0.5
    %v3498 = vmul.f32 %v3486, 0.5
    %v3499 = vmul.f32 %v3487, 0.5
    %v3500 = vmul.f32 %v3488, 0.5
    %v3501 = vmul.f32 %v3489, 0.5
    %v3502 = vmul.f32 %v3490, 0.5
    %v3503 = vmul.f32 %v3491, 0.5
    %v3504 = vmul.f32 %v3492, 0.5
    %v3505 = vmul.f32 %v3493, 0.5
    %v3506 = vmul.f32 %v3494, 0.5
    %v3507 = vmul.f32 %v3495, 0.5
    %v3508 = vadd.f32 %v3496, 1.0
    %v3509 = vadd.f32 %v3497, 1.0
    %v3510 = vadd.f32 %v3498, 1.0
    %v3511 = vadd.f32 %v3499, 1.0
    %v3512 = vadd.f32 %v3500, 1.0
    %v3513 = vadd.f32 %v3501, 1.0
    %v3514 = vadd.f32 %v3502, 1.0
    %v3515 = vadd.f32 %v3503, 1.0
    %v3516 = vadd.f32 %v3504, 1.0
    %v3517 = vadd.f32 %v3505, 1.0
    %v3518 = vadd.f32 %v3506, 1.0
    %v3519 = vadd.f32 %v3507, 1.0
    %v3520 = vrcp.pop %v3508
    %v3521 = vrcp.pop %v3509
    %v3522 = vrcp.pop %v3510
    %v3523 = vrcp.pop %v3511
    %v3524 = vrcp.pop %v3512
    %v3525 = vrcp.pop %v3513
    %v3526 = vrcp.pop %v3514
    %v3527 = vrcp.pop %v3515
    %v3528 = vrcp.pop %v3516
    %v3529 = vrcp.pop %v3517
    %v3530 = vrcp.pop %v3518
    %v3531 = vrcp.pop %v3519
    %v3532 = vmul.f32 %v3520, 0.17087276
    %v3533 = vmul.f32 %v3521, 0.17087276
    %v3534 = vmul.f32 %v3522, 0.17087276
    %v3535 = vmul.f32 %v3523, 0.17087276
    %v3536 = vmul.f32 %v3524, 0.17087276
    %v3537 = vmul.f32 %v3525, 0.17087276
    %v3538 = vmul.f32 %v3526, 0.17087276
    %v3539 = vmul.f32 %v3527, 0.17087276
    %v3540 = vmul.f32 %v3528, 0.17087276
    %v3541 = vmul.f32 %v3529, 0.17087276
    %v3542 = vmul.f32 %v3530, 0.17087276
    %v3543 = vmul.f32 %v3531, 0.17087276
    %v3544 = vadd.f32 %v3532, -0.82215226
    %v3545 = vadd.f32 %v3533, -0.82215226
    %v3546 = vadd.f32 %v3534, -0.82215226
    %v3547 = vadd.f32 %v3535, -0.82215226
    %v3548 = vadd.f32 %v3536, -0.82215226
    %v3549 = vadd.f32 %v3537, -0.82215226
    %v3550 = vadd.f32 %v3538, -0.82215226
    %v3551 = vadd.f32 %v3539, -0.82215226
    %v3552 = vadd.f32 %v3540, -0.82215226
    %v3553 = vadd.f32 %v3541, -0.82215226
    %v3554 = vadd.f32 %v3542, -0.82215226
    %v3555 = vadd.f32 %v3543, -0.82215226
    %v3556 = vmul.f32 %v3520, %v3544
    %v3557 = vmul.f32 %v3521, %v3545
    %v3558 = vmul.f32 %v3522, %v3546
    %v3559 = vmul.f32 %v3523, %v3547
    %v3560 = vmul.f32 %v3524, %v3548
    %v3561 = vmul.f32 %v3525, %v3549
    %v3562 = vmul.f32 %v3526, %v3550
    %v3563 = vmul.f32 %v3527, %v3551
    %v3564 = vmul.f32 %v3528, %v3552
    %v3565 = vmul.f32 %v3529, %v3553
    %v3566 = vmul.f32 %v3530, %v3554
    %v3567 = vmul.f32 %v3531, %v3555
    %v3568 = vadd.f32 %v3556, 1.4885159
    %v3569 = vadd.f32 %v3557, 1.4885159
    %v3570 = vadd.f32 %v3558, 1.4885159
    %v3571 = vadd.f32 %v3559, 1.4885159
    %v3572 = vadd.f32 %v3560, 1.4885159
    %v3573 = vadd.f32 %v3561, 1.4885159
    %v3574 = vadd.f32 %v3562, 1.4885159
    %v3575 = vadd.f32 %v3563, 1.4885159
    %v3576 = vadd.f32 %v3564, 1.4885159
    %v3577 = vadd.f32 %v3565, 1.4885159
    %v3578 = vadd.f32 %v3566, 1.4885159
    %v3579 = vadd.f32 %v3567, 1.4885159
    %v3580 = vmul.f32 %v3520, %v3568
    %v3581 = vmul.f32 %v3521, %v3569
    %v3582 = vmul.f32 %v3522, %v3570
    %v3583 = vmul.f32 %v3523, %v3571
    %v3584 = vmul.f32 %v3524, %v3572
    %v3585 = vmul.f32 %v3525, %v3573
    %v3586 = vmul.f32 %v3526, %v3574
    %v3587 = vmul.f32 %v3527, %v3575
    %v3588 = vmul.f32 %v3528, %v3576
    %v3589 = vmul.f32 %v3529, %v3577
    %v3590 = vmul.f32 %v3530, %v3578
    %v3591 = vmul.f32 %v3531, %v3579
    %v3592 = vadd.f32 %v3580, -1.135204
    %v3593 = vadd.f32 %v3581, -1.135204
    %v3594 = vadd.f32 %v3582, -1.135204
    %v3595 = vadd.f32 %v3583, -1.135204
    %v3596 = vadd.f32 %v3584, -1.135204
    %v3597 = vadd.f32 %v3585, -1.135204
    %v3598 = vadd.f32 %v3586, -1.135204
    %v3599 = vadd.f32 %v3587, -1.135204
    %v3600 = vadd.f32 %v3588, -1.135204
    %v3601 = vadd.f32 %v3589, -1.135204
    %v3602 = vadd.f32 %v3590, -1.135204
    %v3603 = vadd.f32 %v3591, -1.135204
    %v3604 = vmul.f32 %v3520, %v3592
    %v3605 = vmul.f32 %v3521, %v3593
    %v3606 = vmul.f32 %v3522, %v3594
    %v3607 = vmul.f32 %v3523, %v3595
    %v3608 = vmul.f32 %v3524, %v3596
    %v3609 = vmul.f32 %v3525, %v3597
    %v3610 = vmul.f32 %v3526, %v3598
    %v3611 = vmul.f32 %v3527, %v3599
    %v3612 = vmul.f32 %v3528, %v3600
    %v3613 = vmul.f32 %v3529, %v3601
    %v3614 = vmul.f32 %v3530, %v3602
    %v3615 = vmul.f32 %v3531, %v3603
    %v3616 = vadd.f32 %v3604, 0.27886808
    %v3617 = vadd.f32 %v3605, 0.27886808
    %v3618 = vadd.f32 %v3606, 0.27886808
    %v3619 = vadd.f32 %v3607, 0.27886808
    %v3620 = vadd.f32 %v3608, 0.27886808
    %v3621 = vadd.f32 %v3609, 0.27886808
    %v3622 = vadd.f32 %v3610, 0.27886808
    %v3623 = vadd.f32 %v3611, 0.27886808
    %v3624 = vadd.f32 %v3612, 0.27886808
    %v3625 = vadd.f32 %v3613, 0.27886808
    %v3626 = vadd.f32 %v3614, 0.27886808
    %v3627 = vadd.f32 %v3615, 0.27886808
    %v3628 = vmul.f32 %v3520, %v3616
    %v3629 = vmul.f32 %v3521, %v3617
    %v3630 = vmul.f32 %v3522, %v3618
    %v3631 = vmul.f32 %v3523, %v3619
    %v3632 = vmul.f32 %v3524, %v3620
    %v3633 = vmul.f32 %v3525, %v3621
    %v3634 = vmul.f32 %v3526, %v3622
    %v3635 = vmul.f32 %v3527, %v3623
    %v3636 = vmul.f32 %v3528, %v3624
    %v3637 = vmul.f32 %v3529, %v3625
    %v3638 = vmul.f32 %v3530, %v3626
    %v3639 = vmul.f32 %v3531, %v3627
    %v3640 = vadd.f32 %v3628, -0.18628806
    %v3641 = vadd.f32 %v3629, -0.18628806
    %v3642 = vadd.f32 %v3630, -0.18628806
    %v3643 = vadd.f32 %v3631, -0.18628806
    %v3644 = vadd.f32 %v3632, -0.18628806
    %v3645 = vadd.f32 %v3633, -0.18628806
    %v3646 = vadd.f32 %v3634, -0.18628806
    %v3647 = vadd.f32 %v3635, -0.18628806
    %v3648 = vadd.f32 %v3636, -0.18628806
    %v3649 = vadd.f32 %v3637, -0.18628806
    %v3650 = vadd.f32 %v3638, -0.18628806
    %v3651 = vadd.f32 %v3639, -0.18628806
    %v3652 = vmul.f32 %v3520, %v3640
    %v3653 = vmul.f32 %v3521, %v3641
    %v3654 = vmul.f32 %v3522, %v3642
    %v3655 = vmul.f32 %v3523, %v3643
    %v3656 = vmul.f32 %v3524, %v3644
    %v3657 = vmul.f32 %v3525, %v3645
    %v3658 = vmul.f32 %v3526, %v3646
    %v3659 = vmul.f32 %v3527, %v3647
    %v3660 = vmul.f32 %v3528, %v3648
    %v3661 = vmul.f32 %v3529, %v3649
    %v3662 = vmul.f32 %v3530, %v3650
    %v3663 = vmul.f32 %v3531, %v3651
    %v3664 = vadd.f32 %v3652, 0.09678418
    %v3665 = vadd.f32 %v3653, 0.09678418
    %v3666 = vadd.f32 %v3654, 0.09678418
    %v3667 = vadd.f32 %v3655, 0.09678418
    %v3668 = vadd.f32 %v3656, 0.09678418
    %v3669 = vadd.f32 %v3657, 0.09678418
    %v3670 = vadd.f32 %v3658, 0.09678418
    %v3671 = vadd.f32 %v3659, 0.09678418
    %v3672 = vadd.f32 %v3660, 0.09678418
    %v3673 = vadd.f32 %v3661, 0.09678418
    %v3674 = vadd.f32 %v3662, 0.09678418
    %v3675 = vadd.f32 %v3663, 0.09678418
    %v3676 = vmul.f32 %v3520, %v3664
    %v3677 = vmul.f32 %v3521, %v3665
    %v3678 = vmul.f32 %v3522, %v3666
    %v3679 = vmul.f32 %v3523, %v3667
    %v3680 = vmul.f32 %v3524, %v3668
    %v3681 = vmul.f32 %v3525, %v3669
    %v3682 = vmul.f32 %v3526, %v3670
    %v3683 = vmul.f32 %v3527, %v3671
    %v3684 = vmul.f32 %v3528, %v3672
    %v3685 = vmul.f32 %v3529, %v3673
    %v3686 = vmul.f32 %v3530, %v3674
    %v3687 = vmul.f32 %v3531, %v3675
    %v3688 = vadd.f32 %v3676, 0.37409195
    %v3689 = vadd.f32 %v3677, 0.37409195
    %v3690 = vadd.f32 %v3678, 0.37409195
    %v3691 = vadd.f32 %v3679, 0.37409195
    %v3692 = vadd.f32 %v3680, 0.37409195
    %v3693 = vadd.f32 %v3681, 0.37409195
    %v3694 = vadd.f32 %v3682, 0.37409195
    %v3695 = vadd.f32 %v3683, 0.37409195
    %v3696 = vadd.f32 %v3684, 0.37409195
    %v3697 = vadd.f32 %v3685, 0.37409195
    %v3698 = vadd.f32 %v3686, 0.37409195
    %v3699 = vadd.f32 %v3687, 0.37409195
    %v3700 = vmul.f32 %v3520, %v3688
    %v3701 = vmul.f32 %v3521, %v3689
    %v3702 = vmul.f32 %v3522, %v3690
    %v3703 = vmul.f32 %v3523, %v3691
    %v3704 = vmul.f32 %v3524, %v3692
    %v3705 = vmul.f32 %v3525, %v3693
    %v3706 = vmul.f32 %v3526, %v3694
    %v3707 = vmul.f32 %v3527, %v3695
    %v3708 = vmul.f32 %v3528, %v3696
    %v3709 = vmul.f32 %v3529, %v3697
    %v3710 = vmul.f32 %v3530, %v3698
    %v3711 = vmul.f32 %v3531, %v3699
    %v3712 = vadd.f32 %v3700, 1.0000237
    %v3713 = vadd.f32 %v3701, 1.0000237
    %v3714 = vadd.f32 %v3702, 1.0000237
    %v3715 = vadd.f32 %v3703, 1.0000237
    %v3716 = vadd.f32 %v3704, 1.0000237
    %v3717 = vadd.f32 %v3705, 1.0000237
    %v3718 = vadd.f32 %v3706, 1.0000237
    %v3719 = vadd.f32 %v3707, 1.0000237
    %v3720 = vadd.f32 %v3708, 1.0000237
    %v3721 = vadd.f32 %v3709, 1.0000237
    %v3722 = vadd.f32 %v3710, 1.0000237
    %v3723 = vadd.f32 %v3711, 1.0000237
    %v3724 = vmul.f32 %v3520, %v3712
    %v3725 = vmul.f32 %v3521, %v3713
    %v3726 = vmul.f32 %v3522, %v3714
    %v3727 = vmul.f32 %v3523, %v3715
    %v3728 = vmul.f32 %v3524, %v3716
    %v3729 = vmul.f32 %v3525, %v3717
    %v3730 = vmul.f32 %v3526, %v3718
    %v3731 = vmul.f32 %v3527, %v3719
    %v3732 = vmul.f32 %v3528, %v3720
    %v3733 = vmul.f32 %v3529, %v3721
    %v3734 = vmul.f32 %v3530, %v3722
    %v3735 = vmul.f32 %v3531, %v3723
    %v3736 = vadd.f32 %v3724, -1.2655122
    %v3737 = vadd.f32 %v3725, -1.2655122
    %v3738 = vadd.f32 %v3726, -1.2655122
    %v3739 = vadd.f32 %v3727, -1.2655122
    %v3740 = vadd.f32 %v3728, -1.2655122
    %v3741 = vadd.f32 %v3729, -1.2655122
    %v3742 = vadd.f32 %v3730, -1.2655122
    %v3743 = vadd.f32 %v3731, -1.2655122
    %v3744 = vadd.f32 %v3732, -1.2655122
    %v3745 = vadd.f32 %v3733, -1.2655122
    %v3746 = vadd.f32 %v3734, -1.2655122
    %v3747 = vadd.f32 %v3735, -1.2655122
    %v3748 = vsub.f32 0.0, %v3484
    %v3749 = vsub.f32 0.0, %v3485
    %v3750 = vsub.f32 0.0, %v3486
    %v3751 = vsub.f32 0.0, %v3487
    %v3752 = vsub.f32 0.0, %v3488
    %v3753 = vsub.f32 0.0, %v3489
    %v3754 = vsub.f32 0.0, %v3490
    %v3755 = vsub.f32 0.0, %v3491
    %v3756 = vsub.f32 0.0, %v3492
    %v3757 = vsub.f32 0.0, %v3493
    %v3758 = vsub.f32 0.0, %v3494
    %v3759 = vsub.f32 0.0, %v3495
    %v3760 = vmul.f32 %v3748, %v3484
    %v3761 = vmul.f32 %v3749, %v3485
    %v3762 = vmul.f32 %v3750, %v3486
    %v3763 = vmul.f32 %v3751, %v3487
    %v3764 = vmul.f32 %v3752, %v3488
    %v3765 = vmul.f32 %v3753, %v3489
    %v3766 = vmul.f32 %v3754, %v3490
    %v3767 = vmul.f32 %v3755, %v3491
    %v3768 = vmul.f32 %v3756, %v3492
    %v3769 = vmul.f32 %v3757, %v3493
    %v3770 = vmul.f32 %v3758, %v3494
    %v3771 = vmul.f32 %v3759, %v3495
    %v3772 = vadd.f32 %v3760, %v3736
    %v3773 = vadd.f32 %v3761, %v3737
    %v3774 = vadd.f32 %v3762, %v3738
    %v3775 = vadd.f32 %v3763, %v3739
    %v3776 = vadd.f32 %v3764, %v3740
    %v3777 = vadd.f32 %v3765, %v3741
    %v3778 = vadd.f32 %v3766, %v3742
    %v3779 = vadd.f32 %v3767, %v3743
    %v3780 = vadd.f32 %v3768, %v3744
    %v3781 = vadd.f32 %v3769, %v3745
    %v3782 = vadd.f32 %v3770, %v3746
    %v3783 = vadd.f32 %v3771, %v3747
    %v3784 = vmul.f32 %v3772, 1.442695
    %v3785 = vpow.pop %v3784
    %v3786 = vmul.f32 %v3773, 1.442695
    %v3787 = vpow.pop %v3786
    %v3788 = vmul.f32 %v3774, 1.442695
    %v3789 = vpow.pop %v3788
    %v3790 = vmul.f32 %v3775, 1.442695
    %v3791 = vpow.pop %v3790
    %v3792 = vmul.f32 %v3776, 1.442695
    %v3793 = vpow.pop %v3792
    %v3794 = vmul.f32 %v3777, 1.442695
    %v3795 = vpow.pop %v3794
    %v3796 = vmul.f32 %v3778, 1.442695
    %v3797 = vpow.pop %v3796
    %v3798 = vmul.f32 %v3779, 1.442695
    %v3799 = vpow.pop %v3798
    %v3800 = vmul.f32 %v3780, 1.442695
    %v3801 = vpow.pop %v3800
    %v3802 = vmul.f32 %v3781, 1.442695
    %v3803 = vpow.pop %v3802
    %v3804 = vmul.f32 %v3782, 1.442695
    %v3805 = vpow.pop %v3804
    %v3806 = vmul.f32 %v3783, 1.442695
    %v3807 = vpow.pop %v3806
    %v3808 = vmul.f32 %v3520, %v3785
    %v3809 = vmul.f32 %v3521, %v3787
    %v3810 = vmul.f32 %v3522, %v3789
    %v3811 = vmul.f32 %v3523, %v3791
    %v3812 = vmul.f32 %v3524, %v3793
    %v3813 = vmul.f32 %v3525, %v3795
    %v3814 = vmul.f32 %v3526, %v3797
    %v3815 = vmul.f32 %v3527, %v3799
    %v3816 = vmul.f32 %v3528, %v3801
    %v3817 = vmul.f32 %v3529, %v3803
    %v3818 = vmul.f32 %v3530, %v3805
    %v3819 = vmul.f32 %v3531, %v3807
    %vm3820 = vcmp.ge.f32.partialorder %v3472, 0.0
    %vm3821 = vcmp.ge.f32.partialorder %v3473, 0.0
    %vm3822 = vcmp.ge.f32.partialorder %v3474, 0.0
    %vm3823 = vcmp.ge.f32.partialorder %v3475, 0.0
    %vm3824 = vcmp.ge.f32.partialorder %v3476, 0.0
    %vm3825 = vcmp.ge.f32.partialorder %v3477, 0.0
    %vm3826 = vcmp.ge.f32.partialorder %v3478, 0.0
    %vm3827 = vcmp.ge.f32.partialorder %v3479, 0.0
    %vm3828 = vcmp.ge.f32.partialorder %v3480, 0.0
    %vm3829 = vcmp.ge.f32.partialorder %v3481, 0.0
    %vm3830 = vcmp.ge.f32.partialorder %v3482, 0.0
    %vm3831 = vcmp.ge.f32.partialorder %v3483, 0.0
    %v3832 = vsub.f32 1.0, %v3808
    %v3833 = vsub.f32 1.0, %v3809
    %v3834 = vsub.f32 1.0, %v3810
    %v3835 = vsub.f32 1.0, %v3811
    %v3836 = vsub.f32 1.0, %v3812
    %v3837 = vsub.f32 1.0, %v3813
    %v3838 = vsub.f32 1.0, %v3814
    %v3839 = vsub.f32 1.0, %v3815
    %v3840 = vsub.f32 1.0, %v3816
    %v3841 = vsub.f32 1.0, %v3817
    %v3842 = vsub.f32 1.0, %v3818
    %v3843 = vsub.f32 1.0, %v3819
    %v3844 = vsub.f32 %v3808, 1.0
    %v3845 = vsub.f32 %v3809, 1.0
    %v3846 = vsub.f32 %v3810, 1.0
    %v3847 = vsub.f32 %v3811, 1.0
    %v3848 = vsub.f32 %v3812, 1.0
    %v3849 = vsub.f32 %v3813, 1.0
    %v3850 = vsub.f32 %v3814, 1.0
    %v3851 = vsub.f32 %v3815, 1.0
    %v3852 = vsub.f32 %v3816, 1.0
    %v3853 = vsub.f32 %v3817, 1.0
    %v3854 = vsub.f32 %v3818, 1.0
    %v3855 = vsub.f32 %v3819, 1.0
    %v3856 = vsel %vm3820, %v3832, %v3844
    %v3857 = vsel %vm3821, %v3833, %v3845
    %v3858 = vsel %vm3822, %v3834, %v3846
    %v3859 = vsel %vm3823, %v3835, %v3847
    %v3860 = vsel %vm3824, %v3836, %v3848
    %v3861 = vsel %vm3825, %v3837, %v3849
    %v3862 = vsel %vm3826, %v3838, %v3850
    %v3863 = vsel %vm3827, %v3839, %v3851
    %v3864 = vsel %vm3828, %v3840, %v3852
    %v3865 = vsel %vm3829, %v3841, %v3853
    %v3866 = vsel %vm3830, %v3842, %v3854
    %v3867 = vsel %vm3831, %v3843, %v3855
    %v3868 = vadd.f32 %v3856, 1.0
    %v3869 = vadd.f32 %v3857, 1.0
    %v3870 = vadd.f32 %v3858, 1.0
    %v3871 = vadd.f32 %v3859, 1.0
    %v3872 = vadd.f32 %v3860, 1.0
    %v3873 = vadd.f32 %v3861, 1.0
    %v3874 = vadd.f32 %v3862, 1.0
    %v3875 = vadd.f32 %v3863, 1.0
    %v3876 = vadd.f32 %v3864, 1.0
    %v3877 = vadd.f32 %v3865, 1.0
    %v3878 = vadd.f32 %v3866, 1.0
    %v3879 = vadd.f32 %v3867, 1.0
    %v3880 = vmul.f32 %v3460, %v3868
    %v3881 = vmul.f32 %v3461, %v3869
    %v3882 = vmul.f32 %v3462, %v3870
    %v3883 = vmul.f32 %v3463, %v3871
    %v3884 = vmul.f32 %v3464, %v3872
    %v3885 = vmul.f32 %v3465, %v3873
    %v3886 = vmul.f32 %v3466, %v3874
    %v3887 = vmul.f32 %v3467, %v3875
    %v3888 = vmul.f32 %v3468, %v3876
    %v3889 = vmul.f32 %v3469, %v3877
    %v3890 = vmul.f32 %v3470, %v3878
    %v3891 = vmul.f32 %v3471, %v3879
    %v3892 = vpack.c.bf16 %v3881, %v3880
    %v3893 = vpack.c.bf16 %v3883, %v3882
    %v3894 = vpack.c.bf16 %v3885, %v3884
    %v3895 = vpack.c.bf16 %v3887, %v3886
    %v3896 = vpack.c.bf16 %v3889, %v3888
    %v3897 = vpack.c.bf16 %v3891, %v3890
    %v3898 = vld [vmem:[%s12] sm:$0xf]
    %v3899 = vld [vmem:[%s12 + $0x4] sm:$0xf]
    %v3900 = vld [vmem:[%s12 + $0x8] sm:$0xf]
    %v3901 = vld [vmem:[%s12 + $0xc] sm:$0xf]
    %v3902 = vld [vmem:[%s12 + $0x10] sm:$0xf]
    %v3903 = vld [vmem:[%s12 + $0x14] sm:$0xf]
    %v3904 = vld [vmem:[%s12 + $0x18] sm:$0xf]
    %v3905 = vld [vmem:[%s12 + $0x1c] sm:$0xf]
    %v3906 = vld [vmem:[%s12 + $0x20] sm:$0xf]
    %v3907 = vld [vmem:[%s12 + $0x24] sm:$0xf]
    %v3908 = vld [vmem:[%s12 + $0x28] sm:$0xf]
    %v3909 = vld [vmem:[%s12 + $0x2c] sm:$0xf]
    %v3910 = vld [vmem:[%s12 + $0x30] sm:$0xf]
    %v3911 = vld [vmem:[%s12 + $0x34] sm:$0xf]
    %v3912 = vld [vmem:[%s12 + $0x38] sm:$0xf]
    %v3913 = vld [vmem:[%s12 + $0x3c] sm:$0xf]
    %v3914 = vld [vmem:[%s13] sm:$0x1]
    %v3916 = vlaneseq
    %v3917 = vshrl.u32 %v3916, 7
    %v3918 = vsub.s32 0, %v3917
    %v3919 = vrot.slane %v3914, %v3918
    %v3937 = vunpack.c.l.b16 %v3898
    %v3938 = vunpack.c.l.b16 %v3899
    %v3939 = vunpack.c.l.b16 %v3900
    %v3940 = vunpack.c.l.b16 %v3901
    %v3941 = vunpack.c.l.b16 %v3902
    %v3942 = vunpack.c.l.b16 %v3903
    %v3943 = vunpack.c.l.b16 %v3904
    %v3944 = vunpack.c.l.b16 %v3905
    %v3945 = vunpack.c.l.b16 %v3906
    %v3946 = vunpack.c.l.b16 %v3907
    %v3947 = vunpack.c.l.b16 %v3908
    %v3948 = vunpack.c.l.b16 %v3909
    %v3949 = vunpack.c.l.b16 %v3910
    %v3950 = vunpack.c.l.b16 %v3911
    %v3951 = vunpack.c.l.b16 %v3912
    %v3952 = vunpack.c.l.b16 %v3913
    %v3953 = vpack.c.b16 %v3938, %v3937
    %v3954 = vpack.c.b16 %v3940, %v3939
    %v3955 = vpack.c.b16 %v3942, %v3941
    %v3956 = vpack.c.b16 %v3944, %v3943
    %v3957 = vpack.c.b16 %v3946, %v3945
    %v3958 = vpack.c.b16 %v3948, %v3947
    %v3959 = vpack.c.b16 %v3950, %v3949
    %v3960 = vpack.c.b16 %v3952, %v3951
    %3969 = vmatprep.subr.bf16.mxu0 0
    %3970 = vmatpush1.bf16.msra.mxu0 %v3960
    %3971 = vmatprep.subr.bf16.mxu0 0
    %3972 = vmatpush1.bf16.msra.mxu0 %v3959
    %3973 = vmatprep.subr.bf16.mxu0 0
    %3974 = vmatpush1.bf16.msra.mxu0 %v3958
    %3975 = vmatprep.subr.bf16.mxu0 0
    %3976 = vmatpush1.bf16.msra.mxu0 %v3957
    %3977 = vmatprep.subr.bf16.mxu0 0
    %3978 = vmatpush1.bf16.msra.mxu0 %v3956
    %3979 = vmatprep.subr.bf16.mxu0 0
    %3980 = vmatpush1.bf16.msra.mxu0 %v3955
    %3981 = vmatprep.subr.bf16.mxu0 0
    %3982 = vmatpush1.bf16.msra.mxu0 %v3954
    %3983 = vmatprep.subr.bf16.mxu0 0
    %3984 = vmatpush1.bf16.msra.mxu0 %v3953
    %3985 = vmatprep.subr.bf16.mxu0 0
    %3986 = vmatpush2.bf16.msra.mxu0 0
    %3987 = vmatprep.subr.bf16.mxu0 0
    %3988 = vmatpush2.bf16.msra.mxu0 0
    %3989 = vmatprep.subr.bf16.mxu0 0
    %3990 = vmatpush2.bf16.msra.mxu0 0
    %3991 = vmatprep.subr.bf16.mxu0 0
    %3992 = vmatpush2.bf16.msra.mxu0 0
    %3993 = vmatprep.subr.bf16.mxu0 0
    %3994 = vmatpush2.bf16.msra.mxu0 0
    %3995 = vmatprep.subr.bf16.mxu0 0
    %3996 = vmatpush2.bf16.msra.mxu0 0
    %3997 = vmatprep.subr.bf16.mxu0 0
    %3998 = vmatpush2.bf16.msra.mxu0 0
    %3999 = vmatprep.subr.bf16.mxu0 0
    %4000 = vmatpush2.bf16.msra.mxu0 0
    %4001 = vmatprep.mubr.bf16.mxu0 0
    %4002 = vmatmul.mubr.bf16.gmra.mxu0 %v3892
    %v4003 = vpop.f32.mrf.mxu0
    %v4004 = vadd.f32 %v3919, %v4003
    %v4005 = vpop.f32.mrf.mxu0
    %v4006 = vpop.f32.mrf.mxu0
    %v4007 = vadd.f32 %v3919, %v4006
    %v4008 = vpop.f32.mrf.mxu0
    %4009 = vmatprep.mubr.bf16.mxu0 0
    %4010 = vmatmul.mubr.bf16.gmra.mxu0 %v3893
    %v4011 = vpop.f32.mrf.mxu0
    %v4012 = vadd.f32 %v3919, %v4011
    %v4013 = vpop.f32.mrf.mxu0
    %v4014 = vpop.f32.mrf.mxu0
    %v4015 = vadd.f32 %v3919, %v4014
    %v4016 = vpop.f32.mrf.mxu0
    %4017 = vmatprep.mubr.bf16.mxu0 0
    %4018 = vmatmul.mubr.bf16.gmra.mxu0 %v3894
    %v4019 = vpop.f32.mrf.mxu0
    %v4020 = vadd.f32 %v3919, %v4019
    %v4021 = vpop.f32.mrf.mxu0
    %v4022 = vpop.f32.mrf.mxu0
    %v4023 = vadd.f32 %v3919, %v4022
    %v4024 = vpop.f32.mrf.mxu0
    %4025 = vmatprep.mubr.bf16.mxu0 0
    %4026 = vmatmul.mubr.bf16.gmra.mxu0 %v3895
    %v4027 = vpop.f32.mrf.mxu0
    %v4028 = vadd.f32 %v3919, %v4027
    %v4029 = vpop.f32.mrf.mxu0
    %v4030 = vpop.f32.mrf.mxu0
    %v4031 = vadd.f32 %v3919, %v4030
    %v4032 = vpop.f32.mrf.mxu0
    %4033 = vmatprep.mubr.bf16.mxu0 0
    %4034 = vmatmul.mubr.bf16.gmra.mxu0 %v3896
    %v4035 = vpop.f32.mrf.mxu0
    %v4036 = vadd.f32 %v3919, %v4035
    %v4037 = vpop.f32.mrf.mxu0
    %v4038 = vpop.f32.mrf.mxu0
    %v4039 = vadd.f32 %v3919, %v4038
    %v4040 = vpop.f32.mrf.mxu0
    %4041 = vmatprep.mubr.bf16.mxu0 0
    %4042 = vmatmul.mubr.bf16.gmra.mxu0 %v3897
    %v4043 = vpop.f32.mrf.mxu0
    %v4044 = vadd.f32 %v3919, %v4043
    %v4045 = vpop.f32.mrf.mxu0
    %v4046 = vpop.f32.mrf.mxu0
    %v4047 = vadd.f32 %v3919, %v4046
    %v4048 = vpop.f32.mrf.mxu0
    %4049 = vdwg.mxu0
    %v4050 = vmul.f32 %v4004, 0.5
    %v4051 = vmul.f32 %v4007, 0.5
    %v4052 = vmul.f32 %v4012, 0.5
    %v4053 = vmul.f32 %v4015, 0.5
    %v4054 = vmul.f32 %v4020, 0.5
    %v4055 = vmul.f32 %v4023, 0.5
    %v4056 = vmul.f32 %v4028, 0.5
    %v4057 = vmul.f32 %v4031, 0.5
    %v4058 = vmul.f32 %v4036, 0.5
    %v4059 = vmul.f32 %v4039, 0.5
    %v4060 = vmul.f32 %v4044, 0.5
    %v4061 = vmul.f32 %v4047, 0.5
    %v4062 = vmul.f32 %v4004, 0.70710677
    %v4063 = vmul.f32 %v4007, 0.70710677
    %v4064 = vmul.f32 %v4012, 0.70710677
    %v4065 = vmul.f32 %v4015, 0.70710677
    %v4066 = vmul.f32 %v4020, 0.70710677
    %v4067 = vmul.f32 %v4023, 0.70710677
    %v4068 = vmul.f32 %v4028, 0.70710677
    %v4069 = vmul.f32 %v4031, 0.70710677
    %v4070 = vmul.f32 %v4036, 0.70710677
    %v4071 = vmul.f32 %v4039, 0.70710677
    %v4072 = vmul.f32 %v4044, 0.70710677
    %v4073 = vmul.f32 %v4047, 0.70710677
    %v4074 = vand.u32 2147483647, %v4062
    %v4075 = vand.u32 2147483647, %v4063
    %v4076 = vand.u32 2147483647, %v4064
    %v4077 = vand.u32 2147483647, %v4065
    %v4078 = vand.u32 2147483647, %v4066
    %v4079 = vand.u32 2147483647, %v4067
    %v4080 = vand.u32 2147483647, %v4068
    %v4081 = vand.u32 2147483647, %v4069
    %v4082 = vand.u32 2147483647, %v4070
    %v4083 = vand.u32 2147483647, %v4071
    %v4084 = vand.u32 2147483647, %v4072
    %v4085 = vand.u32 2147483647, %v4073
    %v4086 = vmul.f32 %v4074, 0.5
    %v4087 = vmul.f32 %v4075, 0.5
    %v4088 = vmul.f32 %v4076, 0.5
    %v4089 = vmul.f32 %v4077, 0.5
    %v4090 = vmul.f32 %v4078, 0.5
    %v4091 = vmul.f32 %v4079, 0.5
    %v4092 = vmul.f32 %v4080, 0.5
    %v4093 = vmul.f32 %v4081, 0.5
    %v4094 = vmul.f32 %v4082, 0.5
    %v4095 = vmul.f32 %v4083, 0.5
    %v4096 = vmul.f32 %v4084, 0.5
    %v4097 = vmul.f32 %v4085, 0.5
    %v4098 = vadd.f32 %v4086, 1.0
    %v4099 = vadd.f32 %v4087, 1.0
    %v4100 = vadd.f32 %v4088, 1.0
    %v4101 = vadd.f32 %v4089, 1.0
    %v4102 = vadd.f32 %v4090, 1.0
    %v4103 = vadd.f32 %v4091, 1.0
    %v4104 = vadd.f32 %v4092, 1.0
    %v4105 = vadd.f32 %v4093, 1.0
    %v4106 = vadd.f32 %v4094, 1.0
    %v4107 = vadd.f32 %v4095, 1.0
    %v4108 = vadd.f32 %v4096, 1.0
    %v4109 = vadd.f32 %v4097, 1.0
    %v4110 = vrcp.pop %v4098
    %v4111 = vrcp.pop %v4099
    %v4112 = vrcp.pop %v4100
    %v4113 = vrcp.pop %v4101
    %v4114 = vrcp.pop %v4102
    %v4115 = vrcp.pop %v4103
    %v4116 = vrcp.pop %v4104
    %v4117 = vrcp.pop %v4105
    %v4118 = vrcp.pop %v4106
    %v4119 = vrcp.pop %v4107
    %v4120 = vrcp.pop %v4108
    %v4121 = vrcp.pop %v4109
    %v4122 = vmul.f32 %v4110, 0.17087276
    %v4123 = vmul.f32 %v4111, 0.17087276
    %v4124 = vmul.f32 %v4112, 0.17087276
    %v4125 = vmul.f32 %v4113, 0.17087276
    %v4126 = vmul.f32 %v4114, 0.17087276
    %v4127 = vmul.f32 %v4115, 0.17087276
    %v4128 = vmul.f32 %v4116, 0.17087276
    %v4129 = vmul.f32 %v4117, 0.17087276
    %v4130 = vmul.f32 %v4118, 0.17087276
    %v4131 = vmul.f32 %v4119, 0.17087276
    %v4132 = vmul.f32 %v4120, 0.17087276
    %v4133 = vmul.f32 %v4121, 0.17087276
    %v4134 = vadd.f32 %v4122, -0.82215226
    %v4135 = vadd.f32 %v4123, -0.82215226
    %v4136 = vadd.f32 %v4124, -0.82215226
    %v4137 = vadd.f32 %v4125, -0.82215226
    %v4138 = vadd.f32 %v4126, -0.82215226
    %v4139 = vadd.f32 %v4127, -0.82215226
    %v4140 = vadd.f32 %v4128, -0.82215226
    %v4141 = vadd.f32 %v4129, -0.82215226
    %v4142 = vadd.f32 %v4130, -0.82215226
    %v4143 = vadd.f32 %v4131, -0.82215226
    %v4144 = vadd.f32 %v4132, -0.82215226
    %v4145 = vadd.f32 %v4133, -0.82215226
    %v4146 = vmul.f32 %v4110, %v4134
    %v4147 = vmul.f32 %v4111, %v4135
    %v4148 = vmul.f32 %v4112, %v4136
    %v4149 = vmul.f32 %v4113, %v4137
    %v4150 = vmul.f32 %v4114, %v4138
    %v4151 = vmul.f32 %v4115, %v4139
    %v4152 = vmul.f32 %v4116, %v4140
    %v4153 = vmul.f32 %v4117, %v4141
    %v4154 = vmul.f32 %v4118, %v4142
    %v4155 = vmul.f32 %v4119, %v4143
    %v4156 = vmul.f32 %v4120, %v4144
    %v4157 = vmul.f32 %v4121, %v4145
    %v4158 = vadd.f32 %v4146, 1.4885159
    %v4159 = vadd.f32 %v4147, 1.4885159
    %v4160 = vadd.f32 %v4148, 1.4885159
    %v4161 = vadd.f32 %v4149, 1.4885159
    %v4162 = vadd.f32 %v4150, 1.4885159
    %v4163 = vadd.f32 %v4151, 1.4885159
    %v4164 = vadd.f32 %v4152, 1.4885159
    %v4165 = vadd.f32 %v4153, 1.4885159
    %v4166 = vadd.f32 %v4154, 1.4885159
    %v4167 = vadd.f32 %v4155, 1.4885159
    %v4168 = vadd.f32 %v4156, 1.4885159
    %v4169 = vadd.f32 %v4157, 1.4885159
    %v4170 = vmul.f32 %v4110, %v4158
    %v4171 = vmul.f32 %v4111, %v4159
    %v4172 = vmul.f32 %v4112, %v4160
    %v4173 = vmul.f32 %v4113, %v4161
    %v4174 = vmul.f32 %v4114, %v4162
    %v4175 = vmul.f32 %v4115, %v4163
    %v4176 = vmul.f32 %v4116, %v4164
    %v4177 = vmul.f32 %v4117, %v4165
    %v4178 = vmul.f32 %v4118, %v4166
    %v4179 = vmul.f32 %v4119, %v4167
    %v4180 = vmul.f32 %v4120, %v4168
    %v4181 = vmul.f32 %v4121, %v4169
    %v4182 = vadd.f32 %v4170, -1.135204
    %v4183 = vadd.f32 %v4171, -1.135204
    %v4184 = vadd.f32 %v4172, -1.135204
    %v4185 = vadd.f32 %v4173, -1.135204
    %v4186 = vadd.f32 %v4174, -1.135204
    %v4187 = vadd.f32 %v4175, -1.135204
    %v4188 = vadd.f32 %v4176, -1.135204
    %v4189 = vadd.f32 %v4177, -1.135204
    %v4190 = vadd.f32 %v4178, -1.135204
    %v4191 = vadd.f32 %v4179, -1.135204
    %v4192 = vadd.f32 %v4180, -1.135204
    %v4193 = vadd.f32 %v4181, -1.135204
    %v4194 = vmul.f32 %v4110, %v4182
    %v4195 = vmul.f32 %v4111, %v4183
    %v4196 = vmul.f32 %v4112, %v4184
    %v4197 = vmul.f32 %v4113, %v4185
    %v4198 = vmul.f32 %v4114, %v4186
    %v4199 = vmul.f32 %v4115, %v4187
    %v4200 = vmul.f32 %v4116, %v4188
    %v4201 = vmul.f32 %v4117, %v4189
    %v4202 = vmul.f32 %v4118, %v4190
    %v4203 = vmul.f32 %v4119, %v4191
    %v4204 = vmul.f32 %v4120, %v4192
    %v4205 = vmul.f32 %v4121, %v4193
    %v4206 = vadd.f32 %v4194, 0.27886808
    %v4207 = vadd.f32 %v4195, 0.27886808
    %v4208 = vadd.f32 %v4196, 0.27886808
    %v4209 = vadd.f32 %v4197, 0.27886808
    %v4210 = vadd.f32 %v4198, 0.27886808
    %v4211 = vadd.f32 %v4199, 0.27886808
    %v4212 = vadd.f32 %v4200, 0.27886808
    %v4213 = vadd.f32 %v4201, 0.27886808
    %v4214 = vadd.f32 %v4202, 0.27886808
    %v4215 = vadd.f32 %v4203, 0.27886808
    %v4216 = vadd.f32 %v4204, 0.27886808
    %v4217 = vadd.f32 %v4205, 0.27886808
    %v4218 = vmul.f32 %v4110, %v4206
    %v4219 = vmul.f32 %v4111, %v4207
    %v4220 = vmul.f32 %v4112, %v4208
    %v4221 = vmul.f32 %v4113, %v4209
    %v4222 = vmul.f32 %v4114, %v4210
    %v4223 = vmul.f32 %v4115, %v4211
    %v4224 = vmul.f32 %v4116, %v4212
    %v4225 = vmul.f32 %v4117, %v4213
    %v4226 = vmul.f32 %v4118, %v4214
    %v4227 = vmul.f32 %v4119, %v4215
    %v4228 = vmul.f32 %v4120, %v4216
    %v4229 = vmul.f32 %v4121, %v4217
    %v4230 = vadd.f32 %v4218, -0.18628806
    %v4231 = vadd.f32 %v4219, -0.18628806
    %v4232 = vadd.f32 %v4220, -0.18628806
    %v4233 = vadd.f32 %v4221, -0.18628806
    %v4234 = vadd.f32 %v4222, -0.18628806
    %v4235 = vadd.f32 %v4223, -0.18628806
    %v4236 = vadd.f32 %v4224, -0.18628806
    %v4237 = vadd.f32 %v4225, -0.18628806
    %v4238 = vadd.f32 %v4226, -0.18628806
    %v4239 = vadd.f32 %v4227, -0.18628806
    %v4240 = vadd.f32 %v4228, -0.18628806
    %v4241 = vadd.f32 %v4229, -0.18628806
    %v4242 = vmul.f32 %v4110, %v4230
    %v4243 = vmul.f32 %v4111, %v4231
    %v4244 = vmul.f32 %v4112, %v4232
    %v4245 = vmul.f32 %v4113, %v4233
    %v4246 = vmul.f32 %v4114, %v4234
    %v4247 = vmul.f32 %v4115, %v4235
    %v4248 = vmul.f32 %v4116, %v4236
    %v4249 = vmul.f32 %v4117, %v4237
    %v4250 = vmul.f32 %v4118, %v4238
    %v4251 = vmul.f32 %v4119, %v4239
    %v4252 = vmul.f32 %v4120, %v4240
    %v4253 = vmul.f32 %v4121, %v4241
    %v4254 = vadd.f32 %v4242, 0.09678418
    %v4255 = vadd.f32 %v4243, 0.09678418
    %v4256 = vadd.f32 %v4244, 0.09678418
    %v4257 = vadd.f32 %v4245, 0.09678418
    %v4258 = vadd.f32 %v4246, 0.09678418
    %v4259 = vadd.f32 %v4247, 0.09678418
    %v4260 = vadd.f32 %v4248, 0.09678418
    %v4261 = vadd.f32 %v4249, 0.09678418
    %v4262 = vadd.f32 %v4250, 0.09678418
    %v4263 = vadd.f32 %v4251, 0.09678418
    %v4264 = vadd.f32 %v4252, 0.09678418
    %v4265 = vadd.f32 %v4253, 0.09678418
    %v4266 = vmul.f32 %v4110, %v4254
    %v4267 = vmul.f32 %v4111, %v4255
    %v4268 = vmul.f32 %v4112, %v4256
    %v4269 = vmul.f32 %v4113, %v4257
    %v4270 = vmul.f32 %v4114, %v4258
    %v4271 = vmul.f32 %v4115, %v4259
    %v4272 = vmul.f32 %v4116, %v4260
    %v4273 = vmul.f32 %v4117, %v4261
    %v4274 = vmul.f32 %v4118, %v4262
    %v4275 = vmul.f32 %v4119, %v4263
    %v4276 = vmul.f32 %v4120, %v4264
    %v4277 = vmul.f32 %v4121, %v4265
    %v4278 = vadd.f32 %v4266, 0.37409195
    %v4279 = vadd.f32 %v4267, 0.37409195
    %v4280 = vadd.f32 %v4268, 0.37409195
    %v4281 = vadd.f32 %v4269, 0.37409195
    %v4282 = vadd.f32 %v4270, 0.37409195
    %v4283 = vadd.f32 %v4271, 0.37409195
    %v4284 = vadd.f32 %v4272, 0.37409195
    %v4285 = vadd.f32 %v4273, 0.37409195
    %v4286 = vadd.f32 %v4274, 0.37409195
    %v4287 = vadd.f32 %v4275, 0.37409195
    %v4288 = vadd.f32 %v4276, 0.37409195
    %v4289 = vadd.f32 %v4277, 0.37409195
    %v4290 = vmul.f32 %v4110, %v4278
    %v4291 = vmul.f32 %v4111, %v4279
    %v4292 = vmul.f32 %v4112, %v4280
    %v4293 = vmul.f32 %v4113, %v4281
    %v4294 = vmul.f32 %v4114, %v4282
    %v4295 = vmul.f32 %v4115, %v4283
    %v4296 = vmul.f32 %v4116, %v4284
    %v4297 = vmul.f32 %v4117, %v4285
    %v4298 = vmul.f32 %v4118, %v4286
    %v4299 = vmul.f32 %v4119, %v4287
    %v4300 = vmul.f32 %v4120, %v4288
    %v4301 = vmul.f32 %v4121, %v4289
    %v4302 = vadd.f32 %v4290, 1.0000237
    %v4303 = vadd.f32 %v4291, 1.0000237
    %v4304 = vadd.f32 %v4292, 1.0000237
    %v4305 = vadd.f32 %v4293, 1.0000237
    %v4306 = vadd.f32 %v4294, 1.0000237
    %v4307 = vadd.f32 %v4295, 1.0000237
    %v4308 = vadd.f32 %v4296, 1.0000237
    %v4309 = vadd.f32 %v4297, 1.0000237
    %v4310 = vadd.f32 %v4298, 1.0000237
    %v4311 = vadd.f32 %v4299, 1.0000237
    %v4312 = vadd.f32 %v4300, 1.0000237
    %v4313 = vadd.f32 %v4301, 1.0000237
    %v4314 = vmul.f32 %v4110, %v4302
    %v4315 = vmul.f32 %v4111, %v4303
    %v4316 = vmul.f32 %v4112, %v4304
    %v4317 = vmul.f32 %v4113, %v4305
    %v4318 = vmul.f32 %v4114, %v4306
    %v4319 = vmul.f32 %v4115, %v4307
    %v4320 = vmul.f32 %v4116, %v4308
    %v4321 = vmul.f32 %v4117, %v4309
    %v4322 = vmul.f32 %v4118, %v4310
    %v4323 = vmul.f32 %v4119, %v4311
    %v4324 = vmul.f32 %v4120, %v4312
    %v4325 = vmul.f32 %v4121, %v4313
    %v4326 = vadd.f32 %v4314, -1.2655122
    %v4327 = vadd.f32 %v4315, -1.2655122
    %v4328 = vadd.f32 %v4316, -1.2655122
    %v4329 = vadd.f32 %v4317, -1.2655122
    %v4330 = vadd.f32 %v4318, -1.2655122
    %v4331 = vadd.f32 %v4319, -1.2655122
    %v4332 = vadd.f32 %v4320, -1.2655122
    %v4333 = vadd.f32 %v4321, -1.2655122
    %v4334 = vadd.f32 %v4322, -1.2655122
    %v4335 = vadd.f32 %v4323, -1.2655122
    %v4336 = vadd.f32 %v4324, -1.2655122
    %v4337 = vadd.f32 %v4325, -1.2655122
    %v4338 = vsub.f32 0.0, %v4074
    %v4339 = vsub.f32 0.0, %v4075
    %v4340 = vsub.f32 0.0, %v4076
    %v4341 = vsub.f32 0.0, %v4077
    %v4342 = vsub.f32 0.0, %v4078
    %v4343 = vsub.f32 0.0, %v4079
    %v4344 = vsub.f32 0.0, %v4080
    %v4345 = vsub.f32 0.0, %v4081
    %v4346 = vsub.f32 0.0, %v4082
    %v4347 = vsub.f32 0.0, %v4083
    %v4348 = vsub.f32 0.0, %v4084
    %v4349 = vsub.f32 0.0, %v4085
    %v4350 = vmul.f32 %v4338, %v4074
    %v4351 = vmul.f32 %v4339, %v4075
    %v4352 = vmul.f32 %v4340, %v4076
    %v4353 = vmul.f32 %v4341, %v4077
    %v4354 = vmul.f32 %v4342, %v4078
    %v4355 = vmul.f32 %v4343, %v4079
    %v4356 = vmul.f32 %v4344, %v4080
    %v4357 = vmul.f32 %v4345, %v4081
    %v4358 = vmul.f32 %v4346, %v4082
    %v4359 = vmul.f32 %v4347, %v4083
    %v4360 = vmul.f32 %v4348, %v4084
    %v4361 = vmul.f32 %v4349, %v4085
    %v4362 = vadd.f32 %v4350, %v4326
    %v4363 = vadd.f32 %v4351, %v4327
    %v4364 = vadd.f32 %v4352, %v4328
    %v4365 = vadd.f32 %v4353, %v4329
    %v4366 = vadd.f32 %v4354, %v4330
    %v4367 = vadd.f32 %v4355, %v4331
    %v4368 = vadd.f32 %v4356, %v4332
    %v4369 = vadd.f32 %v4357, %v4333
    %v4370 = vadd.f32 %v4358, %v4334
    %v4371 = vadd.f32 %v4359, %v4335
    %v4372 = vadd.f32 %v4360, %v4336
    %v4373 = vadd.f32 %v4361, %v4337
    %v4374 = vmul.f32 %v4362, 1.442695
    %v4375 = vpow.pop %v4374
    %v4376 = vmul.f32 %v4363, 1.442695
    %v4377 = vpow.pop %v4376
    %v4378 = vmul.f32 %v4364, 1.442695
    %v4379 = vpow.pop %v4378
    %v4380 = vmul.f32 %v4365, 1.442695
    %v4381 = vpow.pop %v4380
    %v4382 = vmul.f32 %v4366, 1.442695
    %v4383 = vpow.pop %v4382
    %v4384 = vmul.f32 %v4367, 1.442695
    %v4385 = vpow.pop %v4384
    %v4386 = vmul.f32 %v4368, 1.442695
    %v4387 = vpow.pop %v4386
    %v4388 = vmul.f32 %v4369, 1.442695
    %v4389 = vpow.pop %v4388
    %v4390 = vmul.f32 %v4370, 1.442695
    %v4391 = vpow.pop %v4390
    %v4392 = vmul.f32 %v4371, 1.442695
    %v4393 = vpow.pop %v4392
    %v4394 = vmul.f32 %v4372, 1.442695
    %v4395 = vpow.pop %v4394
    %v4396 = vmul.f32 %v4373, 1.442695
    %v4397 = vpow.pop %v4396
    %v4398 = vmul.f32 %v4110, %v4375
    %v4399 = vmul.f32 %v4111, %v4377
    %v4400 = vmul.f32 %v4112, %v4379
    %v4401 = vmul.f32 %v4113, %v4381
    %v4402 = vmul.f32 %v4114, %v4383
    %v4403 = vmul.f32 %v4115, %v4385
    %v4404 = vmul.f32 %v4116, %v4387
    %v4405 = vmul.f32 %v4117, %v4389
    %v4406 = vmul.f32 %v4118, %v4391
    %v4407 = vmul.f32 %v4119, %v4393
    %v4408 = vmul.f32 %v4120, %v4395
    %v4409 = vmul.f32 %v4121, %v4397
    %vm4410 = vcmp.ge.f32.partialorder %v4062, 0.0
    %vm4411 = vcmp.ge.f32.partialorder %v4063, 0.0
    %vm4412 = vcmp.ge.f32.partialorder %v4064, 0.0
    %vm4413 = vcmp.ge.f32.partialorder %v4065, 0.0
    %vm4414 = vcmp.ge.f32.partialorder %v4066, 0.0
    %vm4415 = vcmp.ge.f32.partialorder %v4067, 0.0
    %vm4416 = vcmp.ge.f32.partialorder %v4068, 0.0
    %vm4417 = vcmp.ge.f32.partialorder %v4069, 0.0
    %vm4418 = vcmp.ge.f32.partialorder %v4070, 0.0
    %vm4419 = vcmp.ge.f32.partialorder %v4071, 0.0
    %vm4420 = vcmp.ge.f32.partialorder %v4072, 0.0
    %vm4421 = vcmp.ge.f32.partialorder %v4073, 0.0
    %v4422 = vsub.f32 1.0, %v4398
    %v4423 = vsub.f32 1.0, %v4399
    %v4424 = vsub.f32 1.0, %v4400
    %v4425 = vsub.f32 1.0, %v4401
    %v4426 = vsub.f32 1.0, %v4402
    %v4427 = vsub.f32 1.0, %v4403
    %v4428 = vsub.f32 1.0, %v4404
    %v4429 = vsub.f32 1.0, %v4405
    %v4430 = vsub.f32 1.0, %v4406
    %v4431 = vsub.f32 1.0, %v4407
    %v4432 = vsub.f32 1.0, %v4408
    %v4433 = vsub.f32 1.0, %v4409
    %v4434 = vsub.f32 %v4398, 1.0
    %v4435 = vsub.f32 %v4399, 1.0
    %v4436 = vsub.f32 %v4400, 1.0
    %v4437 = vsub.f32 %v4401, 1.0
    %v4438 = vsub.f32 %v4402, 1.0
    %v4439 = vsub.f32 %v4403, 1.0
    %v4440 = vsub.f32 %v4404, 1.0
    %v4441 = vsub.f32 %v4405, 1.0
    %v4442 = vsub.f32 %v4406, 1.0
    %v4443 = vsub.f32 %v4407, 1.0
    %v4444 = vsub.f32 %v4408, 1.0
    %v4445 = vsub.f32 %v4409, 1.0
    %v4446 = vsel %vm4410, %v4422, %v4434
    %v4447 = vsel %vm4411, %v4423, %v4435
    %v4448 = vsel %vm4412, %v4424, %v4436
    %v4449 = vsel %vm4413, %v4425, %v4437
    %v4450 = vsel %vm4414, %v4426, %v4438
    %v4451 = vsel %vm4415, %v4427, %v4439
    %v4452 = vsel %vm4416, %v4428, %v4440
    %v4453 = vsel %vm4417, %v4429, %v4441
    %v4454 = vsel %vm4418, %v4430, %v4442
    %v4455 = vsel %vm4419, %v4431, %v4443
    %v4456 = vsel %vm4420, %v4432, %v4444
    %v4457 = vsel %vm4421, %v4433, %v4445
    %v4458 = vadd.f32 %v4446, 1.0
    %v4459 = vadd.f32 %v4447, 1.0
    %v4460 = vadd.f32 %v4448, 1.0
    %v4461 = vadd.f32 %v4449, 1.0
    %v4462 = vadd.f32 %v4450, 1.0
    %v4463 = vadd.f32 %v4451, 1.0
    %v4464 = vadd.f32 %v4452, 1.0
    %v4465 = vadd.f32 %v4453, 1.0
    %v4466 = vadd.f32 %v4454, 1.0
    %v4467 = vadd.f32 %v4455, 1.0
    %v4468 = vadd.f32 %v4456, 1.0
    %v4469 = vadd.f32 %v4457, 1.0
    %v4470 = vmul.f32 %v4050, %v4458
    %v4471 = vmul.f32 %v4051, %v4459
    %v4472 = vmul.f32 %v4052, %v4460
    %v4473 = vmul.f32 %v4053, %v4461
    %v4474 = vmul.f32 %v4054, %v4462
    %v4475 = vmul.f32 %v4055, %v4463
    %v4476 = vmul.f32 %v4056, %v4464
    %v4477 = vmul.f32 %v4057, %v4465
    %v4478 = vmul.f32 %v4058, %v4466
    %v4479 = vmul.f32 %v4059, %v4467
    %v4480 = vmul.f32 %v4060, %v4468
    %v4481 = vmul.f32 %v4061, %v4469
    %vm4482 = vcmask 523264
    %v4483 = vsel %vm4482, %v4470, -inf
    %v4484 = vrot.slane %v4483, 4
    %v4485 = vmax.f32 %v4483, %v4484
    %v4486 = vrot.slane %v4485, 2
    %v4487 = vmax.f32 %v4485, %v4486
    %v4488 = vrot.slane %v4487, 1
    %v4489 = vmax.f32 %v4487, %v4488
    %v4490 = vsel %vm4482, %v4471, -inf
    %v4491 = vrot.slane %v4490, 4
    %v4492 = vmax.f32 %v4490, %v4491
    %v4493 = vrot.slane %v4492, 2
    %v4494 = vmax.f32 %v4492, %v4493
    %v4495 = vrot.slane %v4494, 1
    %v4496 = vmax.f32 %v4494, %v4495
    %v4497 = vld [vmem:[%s14] sm:$0x1]
    %v4498 = vsel %vm4482, %v4472, -inf
    %v4499 = vrot.slane %v4498, 4
    %v4500 = vmax.f32 %v4498, %v4499
    %v4501 = vrot.slane %v4500, 2
    %v4502 = vmax.f32 %v4500, %v4501
    %v4503 = vrot.slane %v4502, 1
    %v4504 = vmax.f32 %v4502, %v4503
    %v4505 = vsel %vm4482, %v4473, -inf
    %v4506 = vrot.slane %v4505, 4
    %v4507 = vmax.f32 %v4505, %v4506
    %v4508 = vrot.slane %v4507, 2
    %v4509 = vmax.f32 %v4507, %v4508
    %v4510 = vrot.slane %v4509, 1
    %v4511 = vmax.f32 %v4509, %v4510
    %v4512 = vmax.f32 %v4489, %v4504
    %v4513 = vmax.f32 %v4496, %v4511
    %v4515 = vlaneseq
    %v4516 = vshrl.u32 %v4515, 7
    %v4517 = vsub.s32 0, %v4516
    %v4518 = vrot.slane %v4497, %v4517
    %v4520 = vmul.f32 %v4512, %v4518
    %v4521 = vmul.f32 %v4513, %v4518
    %v4524 = vrot.slane %v4521, 7
    %vm4525 = vcmask 1041409
    %v4526 = vsel %vm4525, %v4524, %v4520
    %vm4528 = vcmask 517120
    %v4529 = vsel %vm4528, %v4526, 0.0
    %4530 = vadd.xlane.f32.xlu0 %v4529
    %v4531 = vpop.xlane.xlu0 %4530
    %v4532 = vsel %vm4482, %v4474, -inf
    %v4533 = vrot.slane %v4532, 4
    %v4534 = vmax.f32 %v4532, %v4533
    %v4535 = vrot.slane %v4534, 2
    %v4536 = vmax.f32 %v4534, %v4535
    %v4537 = vrot.slane %v4536, 1
    %v4538 = vmax.f32 %v4536, %v4537
    %v4539 = vsel %vm4482, %v4475, -inf
    %v4540 = vrot.slane %v4539, 4
    %v4541 = vmax.f32 %v4539, %v4540
    %v4542 = vrot.slane %v4541, 2
    %v4543 = vmax.f32 %v4541, %v4542
    %v4544 = vrot.slane %v4543, 1
    %v4545 = vmax.f32 %v4543, %v4544
    %v4546 = vmax.f32 %v4489, %v4538
    %v4547 = vmax.f32 %v4496, %v4545
    %v4548 = vmul.f32 %v4546, %v4518
    %v4549 = vmul.f32 %v4547, %v4518
    %v4552 = vrot.slane %v4549, 7
    %v4553 = vsel %vm4525, %v4552, %v4548
    %v4555 = vsel %vm4528, %v4553, 0.0
    %4556 = vadd.xlane.f32.xlu0 %v4555
    %v4557 = vpop.xlane.xlu0 %4556
    %v4558 = vsel %vm4482, %v4476, -inf
    %v4559 = vrot.slane %v4558, 4
    %v4560 = vmax.f32 %v4558, %v4559
    %v4561 = vrot.slane %v4560, 2
    %v4562 = vmax.f32 %v4560, %v4561
    %v4563 = vrot.slane %v4562, 1
    %v4564 = vmax.f32 %v4562, %v4563
    %v4565 = vsel %vm4482, %v4477, -inf
    %v4566 = vrot.slane %v4565, 4
    %v4567 = vmax.f32 %v4565, %v4566
    %v4568 = vrot.slane %v4567, 2
    %v4569 = vmax.f32 %v4567, %v4568
    %v4570 = vrot.slane %v4569, 1
    %v4571 = vmax.f32 %v4569, %v4570
    %v4572 = vmax.f32 %v4489, %v4564
    %v4573 = vmax.f32 %v4496, %v4571
    %v4574 = vmul.f32 %v4572, %v4518
    %v4575 = vmul.f32 %v4573, %v4518
    %v4578 = vrot.slane %v4575, 7
    %v4579 = vsel %vm4525, %v4578, %v4574
    %v4581 = vsel %vm4528, %v4579, 0.0
    %4582 = vadd.xlane.f32.xlu0 %v4581
    %v4583 = vpop.xlane.xlu0 %4582
    %v4584 = vsel %vm4482, %v4478, -inf
    %v4585 = vrot.slane %v4584, 4
    %v4586 = vmax.f32 %v4584, %v4585
    %v4587 = vrot.slane %v4586, 2
    %v4588 = vmax.f32 %v4586, %v4587
    %v4589 = vrot.slane %v4588, 1
    %v4590 = vmax.f32 %v4588, %v4589
    %v4591 = vsel %vm4482, %v4479, -inf
    %v4592 = vrot.slane %v4591, 4
    %v4593 = vmax.f32 %v4591, %v4592
    %v4594 = vrot.slane %v4593, 2
    %v4595 = vmax.f32 %v4593, %v4594
    %v4596 = vrot.slane %v4595, 1
    %v4597 = vmax.f32 %v4595, %v4596
    %v4598 = vmax.f32 %v4489, %v4590
    %v4599 = vmax.f32 %v4496, %v4597
    %v4600 = vmul.f32 %v4598, %v4518
    %v4601 = vmul.f32 %v4599, %v4518
    %v4604 = vrot.slane %v4601, 7
    %v4605 = vsel %vm4525, %v4604, %v4600
    %v4607 = vsel %vm4528, %v4605, 0.0
    %4608 = vadd.xlane.f32.xlu0 %v4607
    %v4609 = vpop.xlane.xlu0 %4608
    %v4610 = vsel %vm4482, %v4480, -inf
    %v4611 = vrot.slane %v4610, 4
    %v4612 = vmax.f32 %v4610, %v4611
    %v4613 = vrot.slane %v4612, 2
    %v4614 = vmax.f32 %v4612, %v4613
    %v4615 = vrot.slane %v4614, 1
    %v4616 = vmax.f32 %v4614, %v4615
    %v4617 = vsel %vm4482, %v4481, -inf
    %v4618 = vrot.slane %v4617, 4
    %v4619 = vmax.f32 %v4617, %v4618
    %v4620 = vrot.slane %v4619, 2
    %v4621 = vmax.f32 %v4619, %v4620
    %v4622 = vrot.slane %v4621, 1
    %v4623 = vmax.f32 %v4621, %v4622
    %v4624 = vmax.f32 %v4489, %v4616
    %v4625 = vmax.f32 %v4496, %v4623
    %v4626 = vmul.f32 %v4624, %v4518
    %v4627 = vmul.f32 %v4625, %v4518
    %v4630 = vrot.slane %v4627, 7
    %v4631 = vsel %vm4525, %v4630, %v4626
    %v4633 = vsel %vm4528, %v4631, 0.0
    %4634 = vadd.xlane.f32.xlu0 %v4633
    %v4635 = vpop.xlane.xlu0 %4634
    %vm4636 = vcmask 7168
    %v4637 = vsel %vm4636, %v4531, %v4557
    %vm4638 = vcmask 15360
    %v4639 = vsel %vm4638, %v4637, %v4583
    %vm4640 = vcmask 23552
    %v4641 = vsel %vm4640, %v4639, %v4609
    %vm4642 = vcmask 31744
    %v4643 = vsel %vm4642, %v4641, %v4635
    %v4644 = vld [vmem:[#allocation3] sm:$0x1]
    %v4646 = vlaneseq
    %v4647 = vshrl.u32 %v4646, 7
    %v4648 = vsub.s32 0, %v4647
    %v4649 = vrot.slane %v4644, %v4648
    %4650 = vset.pattern.permute.xlu0 0
    %4651 = vperm.xlu0 %4650, %v4649
    %v4652 = vpop.permute.xlu0 %4651
    %v4654 = vadd.f32 %v4643, %v4652
    %vm4655 = vcmask 33792
    %4656 = vst.msk [vmem:[#allocation18] sm:$0x3] %vm4655, %v4654
    // Predicated region
    $region98: #{_tvqa_qa_only.1} parent=1 // pred_check
      _
    $region99: #{_tvqa_qa_only.1} parent=1 // pred_check_branch
      %4658 = sbr.rel (0) target = $region101
    $region100: #{_tvqa_qa_only.1} parent=1 // pred_region
      %s4660 = ssub.s32 32, 32
      %4661 = vsyncadd [#allocation6], %s4660
      %s4663 = sshll.u32 [#allocation18], 4
      %s4664 = int_to_ptr.vmem [resolvable:$true] %s4663
      %4666 = dma.vmem_to_hbm [thread:$0]  %s4664, 32, %s16, [#allocation6]
    $region101: #{_tvqa_qa_only.1} parent=1 // pred_fallthru
      _
    // Predicated region
    $region102: #{_tvqa_qa_only.1} parent=1 // pred_check
      _
    $region103: #{_tvqa_qa_only.1} parent=1 // pred_check_branch
      %4668 = sbr.rel (0) target = $region105
    $region104: #{_tvqa_qa_only.1} parent=1 // pred_region
      %4669 = dma.done [#allocation6], 32
    $region105: #{_tvqa_qa_only.1} parent=1 // pred_fallthru
      _
    %4670 = vsyncpa [#allocation5], 1
    %4671 = vsyncpa [#allocation8], 1
    %4672 = vsyncpa [#allocation11], 1
    %4673 = vsyncpa [#allocation14], 1
    %4674 = vsyncpa [#allocation17], 1
    %4675 = vsyncpa [#allocation6], 1

</llo_original>
